<compile_context>
chip_gen: v7x
topology: tpu7x:2x2x1
jax: 0.10.0
libtpu: 0.0.40
codegen_flags: <defaults>
</compile_context>

<pallas_src>
import functools
import math

import jax
import jax.numpy as jnp
from jax.experimental import pallas as pl
from jax.experimental.pallas import tpu as pltpu

_VMEM_LIMIT = 48 * 1024 * 1024


def _pick_tile(m, target):
    """Largest multiple of 8 that divides m and is <= target (None if impossible)."""
    if m % 8 != 0:
        return None
    t = min(target, m)
    t -= t % 8
    while t >= 8:
        if m % t == 0:
            return t
        t -= 8
    return None


# ---------------------------------------------------------------------------
# Kernel 1: matmul (1x1x1 conv) with
#   - optional fused BN-apply + ReLU on the A tile (for conv3 fed by bn2)
#   - bf16 MXU operands, f32 accumulation, bf16 output
#   - fused per-block BatchNorm partial statistics (sum, sum-of-squares)
# Grid is 1-D over M; the (K, N) weight stays VMEM-resident.
# ---------------------------------------------------------------------------
def _mm_stats_kernel(a_ref, w_ref, sc_ref, sh_ref, y_ref, s_ref, q_ref, *, act):
    a = a_ref[...]
    if act:
        a = jnp.maximum(a.astype(jnp.float32) * sc_ref[...] + sh_ref[...], 0.0)
    y = jnp.dot(a.astype(jnp.bfloat16), w_ref[...],
                preferred_element_type=jnp.float32)
    y_ref[...] = y.astype(y_ref.dtype)
    s_ref[0] = jnp.sum(y, axis=0, keepdims=True)
    q_ref[0] = jnp.sum(y * y, axis=0, keepdims=True)


def matmul_stats(a, w_bf16, in_scale=None, in_shift=None, tm_target=512):
    """a: (M, K) bf16, w: (K, N) bf16 -> (y (M,N) bf16, s (nb,1,N) f32, q (nb,1,N) f32)."""
    M, K = a.shape
    K2, N = w_bf16.shape
    assert K == K2
    tm = _pick_tile(M, tm_target) or M
    nb = M // tm

    act = in_scale is not None
    if not act:
        in_scale = jnp.ones((1, K), jnp.float32)
        in_shift = jnp.zeros((1, K), jnp.float32)

    kern = functools.partial(_mm_stats_kernel, act=act)
    y, s, q = pl.pallas_call(
        kern,
        out_shape=(jax.ShapeDtypeStruct((M, N), jnp.bfloat16),
                   jax.ShapeDtypeStruct((nb, 1, N), jnp.float32),
                   jax.ShapeDtypeStruct((nb, 1, N), jnp.float32)),
        grid_spec=pltpu.PrefetchScalarGridSpec(
            num_scalar_prefetch=0,
            grid=(nb,),
            in_specs=[pl.BlockSpec((tm, K), lambda i: (i, 0)),
                      pl.BlockSpec((K, N), lambda i: (0, 0)),
                      pl.BlockSpec((1, K), lambda i: (0, 0)),
                      pl.BlockSpec((1, K), lambda i: (0, 0))],
            out_specs=(pl.BlockSpec((tm, N), lambda i: (i, 0)),
                       pl.BlockSpec((1, 1, N), lambda i: (i, 0, 0)),
                       pl.BlockSpec((1, 1, N), lambda i: (i, 0, 0)))),
        compiler_params=pltpu.CompilerParams(
            dimension_semantics=("parallel",),
            vmem_limit_bytes=_VMEM_LIMIT),
    )(a, w_bf16, in_scale, in_shift)
    return y, s, q


# ---------------------------------------------------------------------------
# Kernel 2: conv2 (3x3x3, padding=1, stride=1) with
#   - fused BN1-apply + ReLU on the loaded depth plane
#   - kd accumulation axis (each step reads exactly one depth plane of y1)
#   - 9 in-plane taps via static row shifts of a VMEM-extended buffer plus
#     precomputed zero-pad masks (so spatial zero padding acts on the
#     *activated* tensor)
#   - fused BN2 partial statistics at kd == 2
# ---------------------------------------------------------------------------
def _conv2_kernel(x_ref, sc_ref, sh_ref, w_ref, mask_ref,
                  y_ref, s_ref, q_ref, aext_ref, acc_ref, *, D, H, W, P):
    do = pl.program_id(1)
    kd = pl.program_id(2)
    HW = H * W

    @pl.when(kd == 0)
    def _():
        acc_ref[...] = jnp.zeros_like(acc_ref)

    din = do + kd - 1
    valid = jnp.logical_and(din >= 0, din < D)

    @pl.when(valid)
    def _():
        x = x_ref[0].astype(jnp.float32)                        # (HW, C)
        a = jnp.maximum(x * sc_ref[...] + sh_ref[...], 0.0)     # bn1 + relu fused
        C = a.shape[-1]
        # row-extended plane: P zero rows, the activated plane, P zero rows
        aext_ref[0:P, :] = jnp.zeros((P, C), jnp.float32)
        aext_ref[P + HW:P + HW + P, :] = jnp.zeros((P, C), jnp.float32)
        aext_ref[P:P + HW, :] = a

        acc = acc_ref[...]
        for j in range(9):
            kh, kw = j // 3, j % 3
            off = (kh - 1) * W + (kw - 1)
            sl = aext_ref[P + off:P + off + HW, :] * mask_ref[j]
            acc = acc + jnp.dot(sl.astype(jnp.bfloat16), w_ref[0, j],
                                preferred_element_type=jnp.float32)
        acc_ref[...] = acc

    @pl.when(kd == 2)
    def _():
        accv = acc_ref[...]
        y_ref[0] = accv.astype(y_ref.dtype)
        s_ref[0] = jnp.sum(accv, axis=0, keepdims=True)
        q_ref[0] = jnp.sum(accv * accv, axis=0, keepdims=True)


def _tap_masks(H, W):
    ho = jnp.arange(H, dtype=jnp.int32).reshape(H, 1)
    wo = jnp.arange(W, dtype=jnp.int32).reshape(1, W)
    ms = []
    for kh in range(3):
        for kw in range(3):
            mh = jnp.logical_and(ho + kh - 1 >= 0, ho + kh - 1 < H)
            mw = jnp.logical_and(wo + kw - 1 >= 0, wo + kw - 1 < W)
            ms.append(jnp.logical_and(mh, mw).reshape(H * W, 1))
    return jnp.stack(ms, axis=0).astype(jnp.float32)            # (9, HW, 1)


def conv2_3x3_bn(y1_3d, sc1, sh1, w2r, masks, *, B, D, H, W):
    """y1_3d: (B*D, H*W, C) bf16, w2r: (3, 9, C, Cout) bf16."""
    BD, HW, C = y1_3d.shape
    Cout = w2r.shape[-1]
    P = W + 1

    kern = functools.partial(_conv2_kernel, D=D, H=H, W=W, P=P)
    y2, s2, q2 = pl.pallas_call(
        kern,
        out_shape=(jax.ShapeDtypeStruct((BD, HW, Cout), jnp.bfloat16),
                   jax.ShapeDtypeStruct((BD, 1, Cout), jnp.float32),
                   jax.ShapeDtypeStruct((BD, 1, Cout), jnp.float32)),
        grid_spec=pltpu.PrefetchScalarGridSpec(
            num_scalar_prefetch=0,
            grid=(B, D, 3),
            in_specs=[
                pl.BlockSpec(
                    (1, HW, C),
                    lambda b, do, kd: (b * D + jnp.clip(do + kd - 1, 0, D - 1), 0, 0)),
                pl.BlockSpec((1, C), lambda b, do, kd: (0, 0)),
                pl.BlockSpec((1, C), lambda b, do, kd: (0, 0)),
                pl.BlockSpec((1, 9, C, Cout), lambda b, do, kd: (kd, 0, 0, 0)),
                pl.BlockSpec((9, HW, 1), lambda b, do, kd: (0, 0, 0)),
            ],
            out_specs=(
                pl.BlockSpec((1, HW, Cout), lambda b, do, kd: (b * D + do, 0, 0)),
                pl.BlockSpec((1, 1, Cout), lambda b, do, kd: (b * D + do, 0, 0)),
                pl.BlockSpec((1, 1, Cout), lambda b, do, kd: (b * D + do, 0, 0)),
            ),
            scratch_shapes=[pltpu.VMEM((HW + 2 * P, C), jnp.float32),
                            pltpu.VMEM((HW, Cout), jnp.float32)]),
        compiler_params=pltpu.CompilerParams(
            dimension_semantics=("parallel", "parallel", "arbitrary"),
            vmem_limit_bytes=_VMEM_LIMIT),
    )(y1_3d, sc1, sh1, w2r, masks)
    return y2, s2, q2


# ---------------------------------------------------------------------------
# Kernel 3: fused BN3-apply + residual add + final ReLU (lane-dense when C<128)
# ---------------------------------------------------------------------------
def _bn_add_relu_kernel(x_ref, r_ref, sc_ref, sh_ref, o_ref):
    x = x_ref[...].astype(jnp.float32)
    r = r_ref[...].astype(jnp.float32)
    o_ref[...] = jnp.maximum(x * sc_ref[...] + sh_ref[...] + r, 0.0)


def bn_add_relu(x, res, scale, shift, tm_target=1024):
    M, C = x.shape
    g = 1
    if C < 128 and 128 % C == 0 and M % (128 // C) == 0:
        g = 128 // C                       # lane-dense regrouping: g*C == 128
    Mg, Cg = M // g, g * C
    xg = x.reshape(Mg, Cg)
    rg = res.reshape(Mg, Cg)
    scg = jnp.tile(scale, (1, g))
    shg = jnp.tile(shift, (1, g))

    tm = _pick_tile(Mg, tm_target) or Mg
    nb = Mg // tm
    row = pl.BlockSpec((tm, Cg), lambda i: (i, 0))
    par = pl.BlockSpec((1, Cg), lambda i: (0, 0))
    out = pl.pallas_call(
        _bn_add_relu_kernel,
        out_shape=jax.ShapeDtypeStruct((Mg, Cg), jnp.float32),
        grid_spec=pltpu.PrefetchScalarGridSpec(
            num_scalar_prefetch=0, grid=(nb,),
            in_specs=[row, row, par, par], out_specs=row),
        compiler_params=pltpu.CompilerParams(
            dimension_semantics=("parallel",),
            vmem_limit_bytes=_VMEM_LIMIT),
    )(xg, rg, scg, shg)
    return out.reshape(M, C)


# ---------------------------------------------------------------------------
# Glue (tiny per-channel math done in XLA)
# ---------------------------------------------------------------------------
def bn_fold(s_part, q_part, count, gamma, beta, eps=1e-5):
    """Training-mode BatchNorm: fold batch (mean, var) + (gamma, beta) into scale/shift."""
    s = jnp.sum(s_part, axis=0)            # (1, N)
    q = jnp.sum(q_part, axis=0)            # (1, N)
    mean = s / float(count)
    var = jnp.maximum(q / float(count) - mean * mean, 0.0)
    inv = jax.lax.rsqrt(var + eps)
    scale = gamma[None, :] * inv
    shift = beta[None, :] - mean * scale
    return scale, shift


# ---------------------------------------------------------------------------
# Parameters (PyTorch-like init: conv kaiming-uniform-ish, BN gamma=1 beta=0)
# ---------------------------------------------------------------------------
def init_params(key, inplanes, planes, expansion=4):
    k1, k2, k3 = jax.random.split(key, 3)

    def conv_w(k, cout, cin, ksz):
        fan_in = cin * ksz ** 3
        bound = 1.0 / math.sqrt(fan_in)
        shape = (cout, cin) if ksz == 1 else (cout, cin, ksz, ksz, ksz)
        return jax.random.uniform(k, shape, jnp.float32, -bound, bound)

    cout3 = planes * expansion
    return dict(
        w1=conv_w(k1, planes, inplanes, 1),
        g1=jnp.ones((planes,), jnp.float32), b1=jnp.zeros((planes,), jnp.float32),
        w2=conv_w(k2, planes, planes, 3),
        g2=jnp.ones((planes,), jnp.float32), b2=jnp.zeros((planes,), jnp.float32),
        w3=conv_w(k3, cout3, planes, 1),
        g3=jnp.ones((cout3,), jnp.float32), b3=jnp.zeros((cout3,), jnp.float32),
    )


# ---------------------------------------------------------------------------
# Bottleneck forward pass
# ---------------------------------------------------------------------------
def bottleneck_forward(params, x, stride=1):
    """x: (B, C_in, D, H, W) f32, NCDHW like PyTorch."""
    B, Cin, D, H, W = x.shape
    planes = params["w1"].shape[0]
    cout = params["w3"].shape[0]

    # TODO(synk): downsample module (None by default) not implemented; identity
    # residual requires stride=1 and Cin == planes*expansion.
    assert stride == 1 and Cin == cout

    M = B * D * H * W
    # one layout change at the boundary; everything else is (rows, channels) bf16
    x_cl = jnp.transpose(x, (0, 2, 3, 4, 1)).astype(jnp.bfloat16)
    x2 = x_cl.reshape(M, Cin)

    # conv1 (1x1x1) + fused bn1 batch-stats
    w1 = jnp.transpose(params["w1"]).astype(jnp.bfloat16)        # (Cin, planes)
    y1, s1, q1 = matmul_stats(x2, w1)
    sc1, sh1 = bn_fold(s1, q1, M, params["g1"], params["b1"])

    # conv2 (3x3x3, pad=1) with bn1-apply+relu fused into the load + bn2 stats
    w2r = jnp.transpose(params["w2"], (2, 3, 4, 1, 0)) \
             .reshape(3, 9, planes, planes).astype(jnp.bfloat16)  # (kd, kh*3+kw, C, Cout)
    masks = _tap_masks(H, W)
    y1_3d = y1.reshape(B * D, H * W, planes)
    y2_3d, s2, q2 = conv2_3x3_bn(y1_3d, sc1, sh1, w2r, masks, B=B, D=D, H=H, W=W)
    sc2, sh2 = bn_fold(s2, q2, M, params["g2"], params["b2"])
    y2 = y2_3d.reshape(M, planes)

    # conv3 (1x1x1) with bn2-apply+relu fused into its A-load + bn3 stats
    w3 = jnp.transpose(params["w3"]).astype(jnp.bfloat16)        # (planes, 4*planes)
    y3, s3, q3 = matmul_stats(y2, w3, in_scale=sc2, in_shift=sh2)
    sc3, sh3 = bn_fold(s3, q3, M, params["g3"], params["b3"])

    # bn3-apply + identity residual + final relu, fused (lane-dense grouping)
    out2 = bn_add_relu(y3, x2, sc3, sh3)

    out_cl = out2.reshape(B, D, H, W, cout)
    return jnp.transpose(out_cl, (0, 4, 1, 2, 3))                # back to NCDHW


if __name__ == "__main__":
    key = jax.random.PRNGKey(0)
    kp, kx = jax.random.split(key)

    planes, expansion = 8, 4
    inplanes = planes * expansion          # identity residual (downsample=None)
    B, D, H, W = 2, 8, 8, 8

    params = init_params(kp, inplanes, planes, expansion)
    x = jax.random.normal(kx, (B, inplanes, D, H, W), jnp.float32)

    out = jax.jit(bottleneck_forward)(params, x)
    out = jax.block_until_ready(out)

    assert out.shape == (B, planes * expansion, D, H, W)
    assert bool(jnp.all(jnp.isfinite(out)))
    assert bool(jnp.all(out >= 0.0))       # final ReLU
    print("KERNEL_OK")
</pallas_src>

<mosaic_0001>
module attributes {stable_mosaic.version = 11 : i64} {
  func.func @_mm_stats_kernel(%arg0: i32, %arg1: memref<512x32xbf16, #tpu.memory_space<vmem>>, %arg2: memref<32x8xbf16, #tpu.memory_space<vmem>>, %arg3: memref<1x32xf32, #tpu.memory_space<vmem>>, %arg4: memref<1x32xf32, #tpu.memory_space<vmem>>, %arg5: memref<512x8xbf16, #tpu.memory_space<vmem>>, %arg6: memref<1x1x8xf32, #tpu.memory_space<vmem>>, %arg7: memref<1x1x8xf32, #tpu.memory_space<vmem>>) attributes {dimension_semantics = [#tpu.dimension_semantics<parallel>], iteration_bounds = array<i64: 2>, scalar_prefetch = 0 : i64, scratch_operands = 0 : i64, tpu.core_type = #tpu.core_type<tc>, window_params = [{transform_indices = @transform_0, window_bounds = array<i64: 512, 32>}, {pipeline_mode = #tpu.pipeline_mode<synchronous>, transform_indices = @transform_1, window_bounds = array<i64: 32, 8>}, {pipeline_mode = #tpu.pipeline_mode<synchronous>, transform_indices = @transform_2, window_bounds = array<i64: 1, 32>}, {pipeline_mode = #tpu.pipeline_mode<synchronous>, transform_indices = @transform_3, window_bounds = array<i64: 1, 32>}, {transform_indices = @transform_4, window_bounds = array<i64: 512, 8>}, {transform_indices = @transform_5, window_bounds = array<i64: 1, 1, 8>}, {transform_indices = @transform_6, window_bounds = array<i64: 1, 1, 8>}]} {
    %c0 = arith.constant 0 : index
    %c0_0 = arith.constant 0 : index
    %0 = vector.load %arg1[%c0, %c0_0] : memref<512x32xbf16, #tpu.memory_space<vmem>>, vector<512x32xbf16>
    %c0_1 = arith.constant 0 : index
    %c0_2 = arith.constant 0 : index
    %1 = vector.load %arg2[%c0_1, %c0_2] : memref<32x8xbf16, #tpu.memory_space<vmem>>, vector<32x8xbf16>
    %cst = arith.constant dense<0.000000e+00> : vector<512x8xf32>
    %2 = tpu.matmul %0, %1, %cst {dimension_numbers = #tpu.dot_dimension_numbers<[1], [0], [0], [1], [0, 0, 1, 1], [], []>} : vector<512x32xbf16>, vector<32x8xbf16>, vector<512x8xf32> -> vector<512x8xf32>
    %3 = arith.truncf %2 : vector<512x8xf32> to vector<512x8xbf16>
    %c0_3 = arith.constant 0 : index
    %c0_4 = arith.constant 0 : index
    %4 = vector.load %arg5[%c0_3, %c0_4] : memref<512x8xbf16, #tpu.memory_space<vmem>>, vector<512x8xbf16>
    tpu.vector_store %arg5[%c0_3, %c0_4], %3 {strides = array<i32>} : memref<512x8xbf16, #tpu.memory_space<vmem>>, vector<512x8xbf16>,
    %cst_5 = arith.constant dense<0.000000e+00> : vector<8xf32>
    %5 = vector.multi_reduction <add>, %2, %cst_5 [0] : vector<512x8xf32> to vector<8xf32>
    %6 = vector.shape_cast %5 : vector<8xf32> to vector<1x8xf32>
    %c0_6 = arith.constant 0 : index
    %c0_7 = arith.constant 0 : index
    %c0_8 = arith.constant 0 : index
    %7 = vector.load %arg6[%c0_6, %c0_7, %c0_8] : memref<1x1x8xf32, #tpu.memory_space<vmem>>, vector<1x1x8xf32>
    %8 = vector.shape_cast %7 : vector<1x1x8xf32> to vector<1x8xf32>
    %9 = vector.shape_cast %6 : vector<1x8xf32> to vector<1x1x8xf32>
    tpu.vector_store %arg6[%c0_6, %c0_7, %c0_8], %9 {strides = array<i32>} : memref<1x1x8xf32, #tpu.memory_space<vmem>>, vector<1x1x8xf32>,
    %10 = arith.mulf %2, %2 : vector<512x8xf32>
    %cst_9 = arith.constant dense<0.000000e+00> : vector<8xf32>
    %11 = vector.multi_reduction <add>, %10, %cst_9 [0] : vector<512x8xf32> to vector<8xf32>
    %12 = vector.shape_cast %11 : vector<8xf32> to vector<1x8xf32>
    %c0_10 = arith.constant 0 : index
    %c0_11 = arith.constant 0 : index
    %c0_12 = arith.constant 0 : index
    %13 = vector.load %arg7[%c0_10, %c0_11, %c0_12] : memref<1x1x8xf32, #tpu.memory_space<vmem>>, vector<1x1x8xf32>
    %14 = vector.shape_cast %13 : vector<1x1x8xf32> to vector<1x8xf32>
    %15 = vector.shape_cast %12 : vector<1x8xf32> to vector<1x1x8xf32>
    tpu.vector_store %arg7[%c0_10, %c0_11, %c0_12], %15 {strides = array<i32>} : memref<1x1x8xf32, #tpu.memory_space<vmem>>, vector<1x1x8xf32>,
    return
  }
  func.func @transform_0(%arg0: i32) -> (i32, i32) {
    %c0_i32 = arith.constant 0 : i32
    %c0_i32_0 = arith.constant 0 : i32
    return %arg0, %c0_i32 : i32, i32
  }
  func.func @transform_1(%arg0: i32) -> (i32, i32) {
    %c0_i32 = arith.constant 0 : i32
    %c0_i32_0 = arith.constant 0 : i32
    %c0_i32_1 = arith.constant 0 : i32
    return %c0_i32, %c0_i32_0 : i32, i32
  }
  func.func @transform_2(%arg0: i32) -> (i32, i32) {
    %c0_i32 = arith.constant 0 : i32
    %c0_i32_0 = arith.constant 0 : i32
    %c0_i32_1 = arith.constant 0 : i32
    return %c0_i32, %c0_i32_0 : i32, i32
  }
  func.func @transform_3(%arg0: i32) -> (i32, i32) {
    %c0_i32 = arith.constant 0 : i32
    %c0_i32_0 = arith.constant 0 : i32
    %c0_i32_1 = arith.constant 0 : i32
    return %c0_i32, %c0_i32_0 : i32, i32
  }
  func.func @transform_4(%arg0: i32) -> (i32, i32) {
    %c0_i32 = arith.constant 0 : i32
    %c0_i32_0 = arith.constant 0 : i32
    return %arg0, %c0_i32 : i32, i32
  }
  func.func @transform_5(%arg0: i32) -> (i32, i32, i32) {
    %c0_i32 = arith.constant 0 : i32
    %c0_i32_0 = arith.constant 0 : i32
    %c0_i32_1 = arith.constant 0 : i32
    return %arg0, %c0_i32, %c0_i32_0 : i32, i32, i32
  }
  func.func @transform_6(%arg0: i32) -> (i32, i32, i32) {
    %c0_i32 = arith.constant 0 : i32
    %c0_i32_0 = arith.constant 0 : i32
    %c0_i32_1 = arith.constant 0 : i32
    return %arg0, %c0_i32, %c0_i32_0 : i32, i32, i32
  }
}

module attributes {stable_mosaic.version = 11 : i64} {
  func.func @_conv2_kernel(%arg0: i32, %arg1: i32, %arg2: i32, %arg3: memref<1x64x8xbf16, #tpu.memory_space<vmem>>, %arg4: memref<1x8xf32, #tpu.memory_space<vmem>>, %arg5: memref<1x8xf32, #tpu.memory_space<vmem>>, %arg6: memref<1x9x8x8xbf16, #tpu.memory_space<vmem>>, %arg7: memref<9x64x1xf32, #tpu.memory_space<vmem>>, %arg8: memref<1x64x8xbf16, #tpu.memory_space<vmem>>, %arg9: memref<1x1x8xf32, #tpu.memory_space<vmem>>, %arg10: memref<1x1x8xf32, #tpu.memory_space<vmem>>, %arg11: memref<82x8xf32, #tpu.memory_space<vmem>>, %arg12: memref<64x8xf32, #tpu.memory_space<vmem>>) attributes {dimension_semantics = [#tpu.dimension_semantics<parallel>, #tpu.dimension_semantics<parallel>, #tpu.dimension_semantics<arbitrary>], iteration_bounds = array<i64: 2, 8, 3>, scalar_prefetch = 0 : i64, scratch_operands = 2 : i64, tpu.core_type = #tpu.core_type<tc>, window_params = [{transform_indices = @transform_0, window_bounds = array<i64: 1, 64, 8>}, {pipeline_mode = #tpu.pipeline_mode<synchronous>, transform_indices = @transform_1, window_bounds = array<i64: 1, 8>}, {pipeline_mode = #tpu.pipeline_mode<synchronous>, transform_indices = @transform_2, window_bounds = array<i64: 1, 8>}, {transform_indices = @transform_3, window_bounds = array<i64: 1, 9, 8, 8>}, {pipeline_mode = #tpu.pipeline_mode<synchronous>, transform_indices = @transform_4, window_bounds = array<i64: 9, 64, 1>}, {transform_indices = @transform_5, window_bounds = array<i64: 1, 64, 8>}, {transform_indices = @transform_6, window_bounds = array<i64: 1, 1, 8>}, {transform_indices = @transform_7, window_bounds = array<i64: 1, 1, 8>}]} {
    %c0_i32 = arith.constant 0 : i32
    %0 = arith.cmpi eq, %arg2, %c0_i32 : i32
    %1 = arith.extui %0 : i1 to i32
    %c0_i32_0 = arith.constant 0 : i32
    %2 = arith.cmpi ne, %1, %c0_i32_0 : i32
    scf.if %2 {
      %cst = arith.constant 0.000000e+00 : f32
      %13 = vector.broadcast %cst : f32 to vector<64x8xf32>
      %c0 = arith.constant 0 : index
      %c0_4 = arith.constant 0 : index
      %14 = vector.load %arg12[%c0, %c0_4] : memref<64x8xf32, #tpu.memory_space<vmem>>, vector<64x8xf32>
      tpu.vector_store %arg12[%c0, %c0_4], %13 {strides = array<i32>} : memref<64x8xf32, #tpu.memory_space<vmem>>, vector<64x8xf32>,
    } else {
    }
    %3 = arith.addi %arg1, %arg2 : i32
    %c1_i32 = arith.constant 1 : i32
    %4 = arith.subi %3, %c1_i32 : i32
    %c0_i32_1 = arith.constant 0 : i32
    %5 = arith.cmpi sge, %4, %c0_i32_1 : i32
    %c8_i32 = arith.constant 8 : i32
    %6 = arith.cmpi slt, %4, %c8_i32 : i32
    %7 = arith.andi %5, %6 : i1
    %8 = arith.extui %7 : i1 to i32
    %c0_i32_2 = arith.constant 0 : i32
    %9 = arith.cmpi ne, %8, %c0_i32_2 : i32
    scf.if %9 {
      %c0 = arith.constant 0 : index
      %c0_4 = arith.constant 0 : index
      %c0_5 = arith.constant 0 : index
      %13 = vector.load %arg3[%c0, %c0_4, %c0_5] : memref<1x64x8xbf16, #tpu.memory_space<vmem>>, vector<1x64x8xbf16>
      %14 = vector.shape_cast %13 : vector<1x64x8xbf16> to vector<64x8xbf16>
      %15 = arith.extf %14 : vector<64x8xbf16> to vector<64x8xf32>
      %c0_6 = arith.constant 0 : index
      %c0_7 = arith.constant 0 : index
      %16 = vector.load %arg4[%c0_6, %c0_7] : memref<1x8xf32, #tpu.memory_space<vmem>>, vector<1x8xf32>
      %17 = vector.broadcast %16 : vector<1x8xf32> to vector<64x8xf32>
      %18 = arith.mulf %15, %17 : vector<64x8xf32>
      %c0_8 = arith.constant 0 : index
      %c0_9 = arith.constant 0 : index
      %19 = vector.load %arg5[%c0_8, %c0_9] : memref<1x8xf32, #tpu.memory_space<vmem>>, vector<1x8xf32>
      %20 = vector.broadcast %19 : vector<1x8xf32> to vector<64x8xf32>
      %21 = arith.addf %18, %20 : vector<64x8xf32>
      %cst = arith.constant 0.000000e+00 : f32
      %22 = vector.broadcast %cst : f32 to vector<64x8xf32>
      %23 = arith.maximumf %21, %22 : vector<64x8xf32>
      %cst_10 = arith.constant 0.000000e+00 : f32
      %24 = vector.broadcast %cst_10 : f32 to vector<9x8xf32>
      %c0_11 = arith.constant 0 : index
      %c0_12 = arith.constant 0 : index
      %25 = vector.load %arg11[%c0_11, %c0_12] : memref<82x8xf32, #tpu.memory_space<vmem>>, vector<9x8xf32>
      tpu.vector_store %arg11[%c0_11, %c0_12], %24 {strides = array<i32>} : memref<82x8xf32, #tpu.memory_space<vmem>>, vector<9x8xf32>,
      %cst_13 = arith.constant 0.000000e+00 : f32
      %26 = vector.broadcast %cst_13 : f32 to vector<9x8xf32>
      %c73 = arith.constant 73 : index
      %c0_14 = arith.constant 0 : index
      %27 = vector.load %arg11[%c73, %c0_14] : memref<82x8xf32, #tpu.memory_space<vmem>>, vector<9x8xf32>
      tpu.vector_store %arg11[%c73, %c0_14], %26 {strides = array<i32>} : memref<82x8xf32, #tpu.memory_space<vmem>>, vector<9x8xf32>,
      %c9 = arith.constant 9 : index
      %c0_15 = arith.constant 0 : index
      %28 = vector.load %arg11[%c9, %c0_15] : memref<82x8xf32, #tpu.memory_space<vmem>>, vector<64x8xf32>
      tpu.vector_store %arg11[%c9, %c0_15], %23 {strides = array<i32>} : memref<82x8xf32, #tpu.memory_space<vmem>>, vector<64x8xf32>,
      %c0_16 = arith.constant 0 : index
      %c0_17 = arith.constant 0 : index
      %29 = vector.load %arg12[%c0_16, %c0_17] : memref<64x8xf32, #tpu.memory_space<vmem>>, vector<64x8xf32>
      %c0_18 = arith.constant 0 : index
      %c0_19 = arith.constant 0 : index
      %30 = vector.load %arg11[%c0_18, %c0_19] : memref<82x8xf32, #tpu.memory_space<vmem>>, vector<64x8xf32>
      %c0_20 = arith.constant 0 : index
      %c0_21 = arith.constant 0 : index
      %c0_22 = arith.constant 0 : index
      %31 = vector.load %arg7[%c0_20, %c0_21, %c0_22] : memref<9x64x1xf32, #tpu.memory_space<vmem>>, vector<1x64x1xf32>
      %32 = vector.shape_cast %31 : vector<1x64x1xf32> to vector<64x1xf32>
      %33 = vector.broadcast %32 : vector<64x1xf32> to vector<64x8xf32>
      %34 = arith.mulf %30, %33 : vector<64x8xf32>
      %35 = arith.truncf %34 : vector<64x8xf32> to vector<64x8xbf16>
      %c0_23 = arith.constant 0 : index
      %c0_24 = arith.constant 0 : index
      %c0_25 = arith.constant 0 : index
      %c0_26 = arith.constant 0 : index
      %36 = vector.load %arg6[%c0_23, %c0_24, %c0_25, %c0_26] : memref<1x9x8x8xbf16, #tpu.memory_space<vmem>>, vector<1x1x8x8xbf16>
      %37 = vector.shape_cast %36 : vector<1x1x8x8xbf16> to vector<8x8xbf16>
      %cst_27 = arith.constant dense<0.000000e+00> : vector<64x8xf32>
      %38 = tpu.matmul %35, %37, %cst_27 {dimension_numbers = #tpu.dot_dimension_numbers<[1], [0], [0], [1], [0, 0, 1, 1], [], []>} : vector<64x8xbf16>, vector<8x8xbf16>, vector<64x8xf32> -> vector<64x8xf32>
      %39 = arith.addf %29, %38 : vector<64x8xf32>
      %c1 = arith.constant 1 : index
      %c0_28 = arith.constant 0 : index
      %40 = vector.load %arg11[%c1, %c0_28] : memref<82x8xf32, #tpu.memory_space<vmem>>, vector<64x8xf32>
      %c1_29 = arith.constant 1 : index
      %c0_30 = arith.constant 0 : index
      %c0_31 = arith.constant 0 : index
      %41 = vector.load %arg7[%c1_29, %c0_30, %c0_31] : memref<9x64x1xf32, #tpu.memory_space<vmem>>, vector<1x64x1xf32>
      %42 = vector.shape_cast %41 : vector<1x64x1xf32> to vector<64x1xf32>
      %43 = vector.broadcast %42 : vector<64x1xf32> to vector<64x8xf32>
      %44 = arith.mulf %40, %43 : vector<64x8xf32>
      %45 = arith.truncf %44 : vector<64x8xf32> to vector<64x8xbf16>
      %c0_32 = arith.constant 0 : index
      %c1_33 = arith.constant 1 : index
      %c0_34 = arith.constant 0 : index
      %c0_35 = arith.constant 0 : index
      %46 = vector.load %arg6[%c0_32, %c1_33, %c0_34, %c0_35] : memref<1x9x8x8xbf16, #tpu.memory_space<vmem>>, vector<1x1x8x8xbf16>
      %47 = vector.shape_cast %46 : vector<1x1x8x8xbf16> to vector<8x8xbf16>
      %cst_36 = arith.constant dense<0.000000e+00> : vector<64x8xf32>
      %48 = tpu.matmul %45, %47, %cst_36 {dimension_numbers = #tpu.dot_dimension_numbers<[1], [0], [0], [1], [0, 0, 1, 1], [], []>} : vector<64x8xbf16>, vector<8x8xbf16>, vector<64x8xf32> -> vector<64x8xf32>
      %49 = arith.addf %39, %48 : vector<64x8xf32>
      %c2 = arith.constant 2 : index
      %c0_37 = arith.constant 0 : index
      %50 = vector.load %arg11[%c2, %c0_37] : memref<82x8xf32, #tpu.memory_space<vmem>>, vector<64x8xf32>
      %c2_38 = arith.constant 2 : index
      %c0_39 = arith.constant 0 : index
      %c0_40 = arith.constant 0 : index
      %51 = vector.load %arg7[%c2_38, %c0_39, %c0_40] : memref<9x64x1xf32, #tpu.memory_space<vmem>>, vector<1x64x1xf32>
      %52 = vector.shape_cast %51 : vector<1x64x1xf32> to vector<64x1xf32>
      %53 = vector.broadcast %52 : vector<64x1xf32> to vector<64x8xf32>
      %54 = arith.mulf %50, %53 : vector<64x8xf32>
      %55 = arith.truncf %54 : vector<64x8xf32> to vector<64x8xbf16>
      %c0_41 = arith.constant 0 : index
      %c2_42 = arith.constant 2 : index
      %c0_43 = arith.constant 0 : index
      %c0_44 = arith.constant 0 : index
      %56 = vector.load %arg6[%c0_41, %c2_42, %c0_43, %c0_44] : memref<1x9x8x8xbf16, #tpu.memory_space<vmem>>, vector<1x1x8x8xbf16>
      %57 = vector.shape_cast %56 : vector<1x1x8x8xbf16> to vector<8x8xbf16>
      %cst_45 = arith.constant dense<0.000000e+00> : vector<64x8xf32>
      %58 = tpu.matmul %55, %57, %cst_45 {dimension_numbers = #tpu.dot_dimension_numbers<[1], [0], [0], [1], [0, 0, 1, 1], [], []>} : vector<64x8xbf16>, vector<8x8xbf16>, vector<64x8xf32> -> vector<64x8xf32>
      %59 = arith.addf %49, %58 : vector<64x8xf32>
      %c8 = arith.constant 8 : index
      %c0_46 = arith.constant 0 : index
      %60 = vector.load %arg11[%c8, %c0_46] : memref<82x8xf32, #tpu.memory_space<vmem>>, vector<64x8xf32>
      %c3 = arith.constant 3 : index
      %c0_47 = arith.constant 0 : index
      %c0_48 = arith.constant 0 : index
      %61 = vector.load %arg7[%c3, %c0_47, %c0_48] : memref<9x64x1xf32, #tpu.memory_space<vmem>>, vector<1x64x1xf32>
      %62 = vector.shape_cast %61 : vector<1x64x1xf32> to vector<64x1xf32>
      %63 = vector.broadcast %62 : vector<64x1xf32> to vector<64x8xf32>
      %64 = arith.mulf %60, %63 : vector<64x8xf32>
      %65 = arith.truncf %64 : vector<64x8xf32> to vector<64x8xbf16>
      %c0_49 = arith.constant 0 : index
      %c3_50 = arith.constant 3 : index
      %c0_51 = arith.constant 0 : index
      %c0_52 = arith.constant 0 : index
      %66 = vector.load %arg6[%c0_49, %c3_50, %c0_51, %c0_52] : memref<1x9x8x8xbf16, #tpu.memory_space<vmem>>, vector<1x1x8x8xbf16>
      %67 = vector.shape_cast %66 : vector<1x1x8x8xbf16> to vector<8x8xbf16>
      %cst_53 = arith.constant dense<0.000000e+00> : vector<64x8xf32>
      %68 = tpu.matmul %65, %67, %cst_53 {dimension_numbers = #tpu.dot_dimension_numbers<[1], [0], [0], [1], [0, 0, 1, 1], [], []>} : vector<64x8xbf16>, vector<8x8xbf16>, vector<64x8xf32> -> vector<64x8xf32>
      %69 = arith.addf %59, %68 : vector<64x8xf32>
      %c9_54 = arith.constant 9 : index
      %c0_55 = arith.constant 0 : index
      %70 = vector.load %arg11[%c9_54, %c0_55] : memref<82x8xf32, #tpu.memory_space<vmem>>, vector<64x8xf32>
      %c4 = arith.constant 4 : index
      %c0_56 = arith.constant 0 : index
      %c0_57 = arith.constant 0 : index
      %71 = vector.load %arg7[%c4, %c0_56, %c0_57] : memref<9x64x1xf32, #tpu.memory_space<vmem>>, vector<1x64x1xf32>
      %72 = vector.shape_cast %71 : vector<1x64x1xf32> to vector<64x1xf32>
      %73 = vector.broadcast %72 : vector<64x1xf32> to vector<64x8xf32>
      %74 = arith.mulf %70, %73 : vector<64x8xf32>
      %75 = arith.truncf %74 : vector<64x8xf32> to vector<64x8xbf16>
      %c0_58 = arith.constant 0 : index
      %c4_59 = arith.constant 4 : index
      %c0_60 = arith.constant 0 : index
      %c0_61 = arith.constant 0 : index
      %76 = vector.load %arg6[%c0_58, %c4_59, %c0_60, %c0_61] : memref<1x9x8x8xbf16, #tpu.memory_space<vmem>>, vector<1x1x8x8xbf16>
      %77 = vector.shape_cast %76 : vector<1x1x8x8xbf16> to vector<8x8xbf16>
      %cst_62 = arith.constant dense<0.000000e+00> : vector<64x8xf32>
      %78 = tpu.matmul %75, %77, %cst_62 {dimension_numbers = #tpu.dot_dimension_numbers<[1], [0], [0], [1], [0, 0, 1, 1], [], []>} : vector<64x8xbf16>, vector<8x8xbf16>, vector<64x8xf32> -> vector<64x8xf32>
      %79 = arith.addf %69, %78 : vector<64x8xf32>
      %c10 = arith.constant 10 : index
      %c0_63 = arith.constant 0 : index
      %80 = vector.load %arg11[%c10, %c0_63] : memref<82x8xf32, #tpu.memory_space<vmem>>, vector<64x8xf32>
      %c5 = arith.constant 5 : index
      %c0_64 = arith.constant 0 : index
      %c0_65 = arith.constant 0 : index
      %81 = vector.load %arg7[%c5, %c0_64, %c0_65] : memref<9x64x1xf32, #tpu.memory_space<vmem>>, vector<1x64x1xf32>
      %82 = vector.shape_cast %81 : vector<1x64x1xf32> to vector<64x1xf32>
      %83 = vector.broadcast %82 : vector<64x1xf32> to vector<64x8xf32>
      %84 = arith.mulf %80, %83 : vector<64x8xf32>
      %85 = arith.truncf %84 : vector<64x8xf32> to vector<64x8xbf16>
      %c0_66 = arith.constant 0 : index
      %c5_67 = arith.constant 5 : index
      %c0_68 = arith.constant 0 : index
      %c0_69 = arith.constant 0 : index
      %86 = vector.load %arg6[%c0_66, %c5_67, %c0_68, %c0_69] : memref<1x9x8x8xbf16, #tpu.memory_space<vmem>>, vector<1x1x8x8xbf16>
      %87 = vector.shape_cast %86 : vector<1x1x8x8xbf16> to vector<8x8xbf16>
      %cst_70 = arith.constant dense<0.000000e+00> : vector<64x8xf32>
      %88 = tpu.matmul %85, %87, %cst_70 {dimension_numbers = #tpu.dot_dimension_numbers<[1], [0], [0], [1], [0, 0, 1, 1], [], []>} : vector<64x8xbf16>, vector<8x8xbf16>, vector<64x8xf32> -> vector<64x8xf32>
      %89 = arith.addf %79, %88 : vector<64x8xf32>
      %c16 = arith.constant 16 : index
      %c0_71 = arith.constant 0 : index
      %90 = vector.load %arg11[%c16, %c0_71] : memref<82x8xf32, #tpu.memory_space<vmem>>, vector<64x8xf32>
      %c6 = arith.constant 6 : index
      %c0_72 = arith.constant 0 : index
      %c0_73 = arith.constant 0 : index
      %91 = vector.load %arg7[%c6, %c0_72, %c0_73] : memref<9x64x1xf32, #tpu.memory_space<vmem>>, vector<1x64x1xf32>
      %92 = vector.shape_cast %91 : vector<1x64x1xf32> to vector<64x1xf32>
      %93 = vector.broadcast %92 : vector<64x1xf32> to vector<64x8xf32>
      %94 = arith.mulf %90, %93 : vector<64x8xf32>
      %95 = arith.truncf %94 : vector<64x8xf32> to vector<64x8xbf16>
      %c0_74 = arith.constant 0 : index
      %c6_75 = arith.constant 6 : index
      %c0_76 = arith.constant 0 : index
      %c0_77 = arith.constant 0 : index
      %96 = vector.load %arg6[%c0_74, %c6_75, %c0_76, %c0_77] : memref<1x9x8x8xbf16, #tpu.memory_space<vmem>>, vector<1x1x8x8xbf16>
      %97 = vector.shape_cast %96 : vector<1x1x8x8xbf16> to vector<8x8xbf16>
      %cst_78 = arith.constant dense<0.000000e+00> : vector<64x8xf32>
      %98 = tpu.matmul %95, %97, %cst_78 {dimension_numbers = #tpu.dot_dimension_numbers<[1], [0], [0], [1], [0, 0, 1, 1], [], []>} : vector<64x8xbf16>, vector<8x8xbf16>, vector<64x8xf32> -> vector<64x8xf32>
      %99 = arith.addf %89, %98 : vector<64x8xf32>
      %c17 = arith.constant 17 : index
      %c0_79 = arith.constant 0 : index
      %100 = vector.load %arg11[%c17, %c0_79] : memref<82x8xf32, #tpu.memory_space<vmem>>, vector<64x8xf32>
      %c7 = arith.constant 7 : index
      %c0_80 = arith.constant 0 : index
      %c0_81 = arith.constant 0 : index
      %101 = vector.load %arg7[%c7, %c0_80, %c0_81] : memref<9x64x1xf32, #tpu.memory_space<vmem>>, vector<1x64x1xf32>
      %102 = vector.shape_cast %101 : vector<1x64x1xf32> to vector<64x1xf32>
      %103 = vector.broadcast %102 : vector<64x1xf32> to vector<64x8xf32>
      %104 = arith.mulf %100, %103 : vector<64x8xf32>
      %105 = arith.truncf %104 : vector<64x8xf32> to vector<64x8xbf16>
      %c0_82 = arith.constant 0 : index
      %c7_83 = arith.constant 7 : index
      %c0_84 = arith.constant 0 : index
      %c0_85 = arith.constant 0 : index
      %106 = vector.load %arg6[%c0_82, %c7_83, %c0_84, %c0_85] : memref<1x9x8x8xbf16, #tpu.memory_space<vmem>>, vector<1x1x8x8xbf16>
      %107 = vector.shape_cast %106 : vector<1x1x8x8xbf16> to vector<8x8xbf16>
      %cst_86 = arith.constant dense<0.000000e+00> : vector<64x8xf32>
      %108 = tpu.matmul %105, %107, %cst_86 {dimension_numbers = #tpu.dot_dimension_numbers<[1], [0], [0], [1], [0, 0, 1, 1], [], []>} : vector<64x8xbf16>, vector<8x8xbf16>, vector<64x8xf32> -> vector<64x8xf32>
      %109 = arith.addf %99, %108 : vector<64x8xf32>
      %c18 = arith.constant 18 : index
      %c0_87 = arith.constant 0 : index
      %110 = vector.load %arg11[%c18, %c0_87] : memref<82x8xf32, #tpu.memory_space<vmem>>, vector<64x8xf32>
      %c8_88 = arith.constant 8 : index
      %c0_89 = arith.constant 0 : index
      %c0_90 = arith.constant 0 : index
      %111 = vector.load %arg7[%c8_88, %c0_89, %c0_90] : memref<9x64x1xf32, #tpu.memory_space<vmem>>, vector<1x64x1xf32>
      %112 = vector.shape_cast %111 : vector<1x64x1xf32> to vector<64x1xf32>
      %113 = vector.broadcast %112 : vector<64x1xf32> to vector<64x8xf32>
      %114 = arith.mulf %110, %113 : vector<64x8xf32>
      %115 = arith.truncf %114 : vector<64x8xf32> to vector<64x8xbf16>
      %c0_91 = arith.constant 0 : index
      %c8_92 = arith.constant 8 : index
      %c0_93 = arith.constant 0 : index
      %c0_94 = arith.constant 0 : index
      %116 = vector.load %arg6[%c0_91, %c8_92, %c0_93, %c0_94] : memref<1x9x8x8xbf16, #tpu.memory_space<vmem>>, vector<1x1x8x8xbf16>
      %117 = vector.shape_cast %116 : vector<1x1x8x8xbf16> to vector<8x8xbf16>
      %cst_95 = arith.constant dense<0.000000e+00> : vector<64x8xf32>
      %118 = tpu.matmul %115, %117, %cst_95 {dimension_numbers = #tpu.dot_dimension_numbers<[1], [0], [0], [1], [0, 0, 1, 1], [], []>} : vector<64x8xbf16>, vector<8x8xbf16>, vector<64x8xf32> -> vector<64x8xf32>
      %119 = arith.addf %109, %118 : vector<64x8xf32>
      %c0_96 = arith.constant 0 : index
      %c0_97 = arith.constant 0 : index
      %120 = vector.load %arg12[%c0_96, %c0_97] : memref<64x8xf32, #tpu.memory_space<vmem>>, vector<64x8xf32>
      tpu.vector_store %arg12[%c0_96, %c0_97], %119 {strides = array<i32>} : memref<64x8xf32, #tpu.memory_space<vmem>>, vector<64x8xf32>,
    } else {
    }
    %c2_i32 = arith.constant 2 : i32
    %10 = arith.cmpi eq, %arg2, %c2_i32 : i32
    %11 = arith.extui %10 : i1 to i32
    %c0_i32_3 = arith.constant 0 : i32
    %12 = arith.cmpi ne, %11, %c0_i32_3 : i32
    scf.if %12 {
      %c0 = arith.constant 0 : index
      %c0_4 = arith.constant 0 : index
      %13 = vector.load %arg12[%c0, %c0_4] : memref<64x8xf32, #tpu.memory_space<vmem>>, vector<64x8xf32>
      %14 = arith.truncf %13 : vector<64x8xf32> to vector<64x8xbf16>
      %c0_5 = arith.constant 0 : index
      %c0_6 = arith.constant 0 : index
      %c0_7 = arith.constant 0 : index
      %15 = vector.load %arg8[%c0_5, %c0_6, %c0_7] : memref<1x64x8xbf16, #tpu.memory_space<vmem>>, vector<1x64x8xbf16>
      %16 = vector.shape_cast %15 : vector<1x64x8xbf16> to vector<64x8xbf16>
      %17 = vector.shape_cast %14 : vector<64x8xbf16> to vector<1x64x8xbf16>
      tpu.vector_store %arg8[%c0_5, %c0_6, %c0_7], %17 {strides = array<i32>} : memref<1x64x8xbf16, #tpu.memory_space<vmem>>, vector<1x64x8xbf16>,
      %cst = arith.constant dense<0.000000e+00> : vector<8xf32>
      %18 = vector.multi_reduction <add>, %13, %cst [0] : vector<64x8xf32> to vector<8xf32>
      %19 = vector.shape_cast %18 : vector<8xf32> to vector<1x8xf32>
      %c0_8 = arith.constant 0 : index
      %c0_9 = arith.constant 0 : index
      %c0_10 = arith.constant 0 : index
      %20 = vector.load %arg9[%c0_8, %c0_9, %c0_10] : memref<1x1x8xf32, #tpu.memory_space<vmem>>, vector<1x1x8xf32>
      %21 = vector.shape_cast %20 : vector<1x1x8xf32> to vector<1x8xf32>
      %22 = vector.shape_cast %19 : vector<1x8xf32> to vector<1x1x8xf32>
      tpu.vector_store %arg9[%c0_8, %c0_9, %c0_10], %22 {strides = array<i32>} : memref<1x1x8xf32, #tpu.memory_space<vmem>>, vector<1x1x8xf32>,
      %23 = arith.mulf %13, %13 : vector<64x8xf32>
      %cst_11 = arith.constant dense<0.000000e+00> : vector<8xf32>
      %24 = vector.multi_reduction <add>, %23, %cst_11 [0] : vector<64x8xf32> to vector<8xf32>
      %25 = vector.shape_cast %24 : vector<8xf32> to vector<1x8xf32>
      %c0_12 = arith.constant 0 : index
      %c0_13 = arith.constant 0 : index
      %c0_14 = arith.constant 0 : index
      %26 = vector.load %arg10[%c0_12, %c0_13, %c0_14] : memref<1x1x8xf32, #tpu.memory_space<vmem>>, vector<1x1x8xf32>
      %27 = vector.shape_cast %26 : vector<1x1x8xf32> to vector<1x8xf32>
      %28 = vector.shape_cast %25 : vector<1x8xf32> to vector<1x1x8xf32>
      tpu.vector_store %arg10[%c0_12, %c0_13, %c0_14], %28 {strides = array<i32>} : memref<1x1x8xf32, #tpu.memory_space<vmem>>, vector<1x1x8xf32>,
    } else {
    }
    return
  }
  func.func @transform_0(%arg0: i32, %arg1: i32, %arg2: i32) -> (i32, i32, i32) {
    %c8_i32 = arith.constant 8 : i32
    %0 = arith.muli %arg0, %c8_i32 : i32
    %1 = arith.addi %arg1, %arg2 : i32
    %c1_i32 = arith.constant 1 : i32
    %2 = arith.subi %1, %c1_i32 : i32
    %c0_i32 = arith.constant 0 : i32
    %c7_i32 = arith.constant 7 : i32
    %3 = arith.maxsi %c0_i32, %2 : i32
    %4 = arith.minsi %c7_i32, %3 : i32
    %5 = arith.addi %0, %4 : i32
    %c0_i32_0 = arith.constant 0 : i32
    %c0_i32_1 = arith.constant 0 : i32
    %c0_i32_2 = arith.constant 0 : i32
    return %5, %c0_i32_0, %c0_i32_1 : i32, i32, i32
  }
  func.func @transform_1(%arg0: i32, %arg1: i32, %arg2: i32) -> (i32, i32) {
    %c0_i32 = arith.constant 0 : i32
    %c0_i32_0 = arith.constant 0 : i32
    %c0_i32_1 = arith.constant 0 : i32
    return %c0_i32, %c0_i32_0 : i32, i32
  }
  func.func @transform_2(%arg0: i32, %arg1: i32, %arg2: i32) -> (i32, i32) {
    %c0_i32 = arith.constant 0 : i32
    %c0_i32_0 = arith.constant 0 : i32
    %c0_i32_1 = arith.constant 0 : i32
    return %c0_i32, %c0_i32_0 : i32, i32
  }
  func.func @transform_3(%arg0: i32, %arg1: i32, %arg2: i32) -> (i32, i32, i32, i32) {
    %c0_i32 = arith.constant 0 : i32
    %c0_i32_0 = arith.constant 0 : i32
    %c0_i32_1 = arith.constant 0 : i32
    %c0_i32_2 = arith.constant 0 : i32
    return %arg2, %c0_i32, %c0_i32_0, %c0_i32_1 : i32, i32, i32, i32
  }
  func.func @transform_4(%arg0: i32, %arg1: i32, %arg2: i32) -> (i32, i32, i32) {
    %c0_i32 = arith.constant 0 : i32
    %c0_i32_0 = arith.constant 0 : i32
    %c0_i32_1 = arith.constant 0 : i32
    %c0_i32_2 = arith.constant 0 : i32
    return %c0_i32, %c0_i32_0, %c0_i32_1 : i32, i32, i32
  }
  func.func @transform_5(%arg0: i32, %arg1: i32, %arg2: i32) -> (i32, i32, i32) {
    %c8_i32 = arith.constant 8 : i32
    %0 = arith.muli %arg0, %c8_i32 : i32
    %1 = arith.addi %0, %arg1 : i32
    %c0_i32 = arith.constant 0 : i32
    %c0_i32_0 = arith.constant 0 : i32
    %c0_i32_1 = arith.constant 0 : i32
    return %1, %c0_i32, %c0_i32_0 : i32, i32, i32
  }
  func.func @transform_6(%arg0: i32, %arg1: i32, %arg2: i32) -> (i32, i32, i32) {
    %c8_i32 = arith.constant 8 : i32
    %0 = arith.muli %arg0, %c8_i32 : i32
    %1 = arith.addi %0, %arg1 : i32
    %c0_i32 = arith.constant 0 : i32
    %c0_i32_0 = arith.constant 0 : i32
    %c0_i32_1 = arith.constant 0 : i32
    return %1, %c0_i32, %c0_i32_0 : i32, i32, i32
  }
  func.func @transform_7(%arg0: i32, %arg1: i32, %arg2: i32) -> (i32, i32, i32) {
    %c8_i32 = arith.constant 8 : i32
    %0 = arith.muli %arg0, %c8_i32 : i32
    %1 = arith.addi %0, %arg1 : i32
    %c0_i32 = arith.constant 0 : i32
    %c0_i32_0 = arith.constant 0 : i32
    %c0_i32_1 = arith.constant 0 : i32
    return %1, %c0_i32, %c0_i32_0 : i32, i32, i32
  }
}

module attributes {stable_mosaic.version = 11 : i64} {
  func.func @_mm_stats_kernel(%arg0: i32, %arg1: memref<512x8xbf16, #tpu.memory_space<vmem>>, %arg2: memref<8x32xbf16, #tpu.memory_space<vmem>>, %arg3: memref<1x8xf32, #tpu.memory_space<vmem>>, %arg4: memref<1x8xf32, #tpu.memory_space<vmem>>, %arg5: memref<512x32xbf16, #tpu.memory_space<vmem>>, %arg6: memref<1x1x32xf32, #tpu.memory_space<vmem>>, %arg7: memref<1x1x32xf32, #tpu.memory_space<vmem>>) attributes {dimension_semantics = [#tpu.dimension_semantics<parallel>], iteration_bounds = array<i64: 2>, scalar_prefetch = 0 : i64, scratch_operands = 0 : i64, tpu.core_type = #tpu.core_type<tc>, window_params = [{transform_indices = @transform_0, window_bounds = array<i64: 512, 8>}, {pipeline_mode = #tpu.pipeline_mode<synchronous>, transform_indices = @transform_1, window_bounds = array<i64: 8, 32>}, {pipeline_mode = #tpu.pipeline_mode<synchronous>, transform_indices = @transform_2, window_bounds = array<i64: 1, 8>}, {pipeline_mode = #tpu.pipeline_mode<synchronous>, transform_indices = @transform_3, window_bounds = array<i64: 1, 8>}, {transform_indices = @transform_4, window_bounds = array<i64: 512, 32>}, {transform_indices = @transform_5, window_bounds = array<i64: 1, 1, 32>}, {transform_indices = @transform_6, window_bounds = array<i64: 1, 1, 32>}]} {
    %c0 = arith.constant 0 : index
    %c0_0 = arith.constant 0 : index
    %0 = vector.load %arg1[%c0, %c0_0] : memref<512x8xbf16, #tpu.memory_space<vmem>>, vector<512x8xbf16>
    %1 = arith.extf %0 : vector<512x8xbf16> to vector<512x8xf32>
    %c0_1 = arith.constant 0 : index
    %c0_2 = arith.constant 0 : index
    %2 = vector.load %arg3[%c0_1, %c0_2] : memref<1x8xf32, #tpu.memory_space<vmem>>, vector<1x8xf32>
    %3 = vector.broadcast %2 : vector<1x8xf32> to vector<512x8xf32>
    %4 = arith.mulf %1, %3 : vector<512x8xf32>
    %c0_3 = arith.constant 0 : index
    %c0_4 = arith.constant 0 : index
    %5 = vector.load %arg4[%c0_3, %c0_4] : memref<1x8xf32, #tpu.memory_space<vmem>>, vector<1x8xf32>
    %6 = vector.broadcast %5 : vector<1x8xf32> to vector<512x8xf32>
    %7 = arith.addf %4, %6 : vector<512x8xf32>
    %cst = arith.constant 0.000000e+00 : f32
    %8 = vector.broadcast %cst : f32 to vector<512x8xf32>
    %9 = arith.maximumf %7, %8 : vector<512x8xf32>
    %10 = arith.truncf %9 : vector<512x8xf32> to vector<512x8xbf16>
    %c0_5 = arith.constant 0 : index
    %c0_6 = arith.constant 0 : index
    %11 = vector.load %arg2[%c0_5, %c0_6] : memref<8x32xbf16, #tpu.memory_space<vmem>>, vector<8x32xbf16>
    %cst_7 = arith.constant dense<0.000000e+00> : vector<512x32xf32>
    %12 = tpu.matmul %10, %11, %cst_7 {dimension_numbers = #tpu.dot_dimension_numbers<[1], [0], [0], [1], [0, 0, 1, 1], [], []>} : vector<512x8xbf16>, vector<8x32xbf16>, vector<512x32xf32> -> vector<512x32xf32>
    %13 = arith.truncf %12 : vector<512x32xf32> to vector<512x32xbf16>
    %c0_8 = arith.constant 0 : index
    %c0_9 = arith.constant 0 : index
    %14 = vector.load %arg5[%c0_8, %c0_9] : memref<512x32xbf16, #tpu.memory_space<vmem>>, vector<512x32xbf16>
    tpu.vector_store %arg5[%c0_8, %c0_9], %13 {strides = array<i32>} : memref<512x32xbf16, #tpu.memory_space<vmem>>, vector<512x32xbf16>,
    %cst_10 = arith.constant dense<0.000000e+00> : vector<32xf32>
    %15 = vector.multi_reduction <add>, %12, %cst_10 [0] : vector<512x32xf32> to vector<32xf32>
    %16 = vector.shape_cast %15 : vector<32xf32> to vector<1x32xf32>
    %c0_11 = arith.constant 0 : index
    %c0_12 = arith.constant 0 : index
    %c0_13 = arith.constant 0 : index
    %17 = vector.load %arg6[%c0_11, %c0_12, %c0_13] : memref<1x1x32xf32, #tpu.memory_space<vmem>>, vector<1x1x32xf32>
    %18 = vector.shape_cast %17 : vector<1x1x32xf32> to vector<1x32xf32>
    %19 = vector.shape_cast %16 : vector<1x32xf32> to vector<1x1x32xf32>
    tpu.vector_store %arg6[%c0_11, %c0_12, %c0_13], %19 {strides = array<i32>} : memref<1x1x32xf32, #tpu.memory_space<vmem>>, vector<1x1x32xf32>,
    %20 = arith.mulf %12, %12 : vector<512x32xf32>
    %cst_14 = arith.constant dense<0.000000e+00> : vector<32xf32>
    %21 = vector.multi_reduction <add>, %20, %cst_14 [0] : vector<512x32xf32> to vector<32xf32>
    %22 = vector.shape_cast %21 : vector<32xf32> to vector<1x32xf32>
    %c0_15 = arith.constant 0 : index
    %c0_16 = arith.constant 0 : index
    %c0_17 = arith.constant 0 : index
    %23 = vector.load %arg7[%c0_15, %c0_16, %c0_17] : memref<1x1x32xf32, #tpu.memory_space<vmem>>, vector<1x1x32xf32>
    %24 = vector.shape_cast %23 : vector<1x1x32xf32> to vector<1x32xf32>
    %25 = vector.shape_cast %22 : vector<1x32xf32> to vector<1x1x32xf32>
    tpu.vector_store %arg7[%c0_15, %c0_16, %c0_17], %25 {strides = array<i32>} : memref<1x1x32xf32, #tpu.memory_space<vmem>>, vector<1x1x32xf32>,
    return
  }
  func.func @transform_0(%arg0: i32) -> (i32, i32) {
    %c0_i32 = arith.constant 0 : i32
    %c0_i32_0 = arith.constant 0 : i32
    return %arg0, %c0_i32 : i32, i32
  }
  func.func @transform_1(%arg0: i32) -> (i32, i32) {
    %c0_i32 = arith.constant 0 : i32
    %c0_i32_0 = arith.constant 0 : i32
    %c0_i32_1 = arith.constant 0 : i32
    return %c0_i32, %c0_i32_0 : i32, i32
  }
  func.func @transform_2(%arg0: i32) -> (i32, i32) {
    %c0_i32 = arith.constant 0 : i32
    %c0_i32_0 = arith.constant 0 : i32
    %c0_i32_1 = arith.constant 0 : i32
    return %c0_i32, %c0_i32_0 : i32, i32
  }
  func.func @transform_3(%arg0: i32) -> (i32, i32) {
    %c0_i32 = arith.constant 0 : i32
    %c0_i32_0 = arith.constant 0 : i32
    %c0_i32_1 = arith.constant 0 : i32
    return %c0_i32, %c0_i32_0 : i32, i32
  }
  func.func @transform_4(%arg0: i32) -> (i32, i32) {
    %c0_i32 = arith.constant 0 : i32
    %c0_i32_0 = arith.constant 0 : i32
    return %arg0, %c0_i32 : i32, i32
  }
  func.func @transform_5(%arg0: i32) -> (i32, i32, i32) {
    %c0_i32 = arith.constant 0 : i32
    %c0_i32_0 = arith.constant 0 : i32
    %c0_i32_1 = arith.constant 0 : i32
    return %arg0, %c0_i32, %c0_i32_0 : i32, i32, i32
  }
  func.func @transform_6(%arg0: i32) -> (i32, i32, i32) {
    %c0_i32 = arith.constant 0 : i32
    %c0_i32_0 = arith.constant 0 : i32
    %c0_i32_1 = arith.constant 0 : i32
    return %arg0, %c0_i32, %c0_i32_0 : i32, i32, i32
  }
}

module attributes {stable_mosaic.version = 11 : i64} {
  func.func @_bn_add_relu_kernel(%arg0: i32, %arg1: memref<256x128xbf16, #tpu.memory_space<vmem>>, %arg2: memref<256x128xbf16, #tpu.memory_space<vmem>>, %arg3: memref<1x128xf32, #tpu.memory_space<vmem>>, %arg4: memref<1x128xf32, #tpu.memory_space<vmem>>, %arg5: memref<256x128xf32, #tpu.memory_space<vmem>>) attributes {dimension_semantics = [#tpu.dimension_semantics<parallel>], iteration_bounds = array<i64: 1>, scalar_prefetch = 0 : i64, scratch_operands = 0 : i64, tpu.core_type = #tpu.core_type<tc>, window_params = [{transform_indices = @transform_0, window_bounds = array<i64: 256, 128>}, {transform_indices = @transform_1, window_bounds = array<i64: 256, 128>}, {pipeline_mode = #tpu.pipeline_mode<synchronous>, transform_indices = @transform_2, window_bounds = array<i64: 1, 128>}, {pipeline_mode = #tpu.pipeline_mode<synchronous>, transform_indices = @transform_3, window_bounds = array<i64: 1, 128>}, {transform_indices = @transform_4, window_bounds = array<i64: 256, 128>}]} {
    %c0 = arith.constant 0 : index
    %c0_0 = arith.constant 0 : index
    %0 = vector.load %arg1[%c0, %c0_0] : memref<256x128xbf16, #tpu.memory_space<vmem>>, vector<256x128xbf16>
    %1 = arith.extf %0 : vector<256x128xbf16> to vector<256x128xf32>
    %c0_1 = arith.constant 0 : index
    %c0_2 = arith.constant 0 : index
    %2 = vector.load %arg2[%c0_1, %c0_2] : memref<256x128xbf16, #tpu.memory_space<vmem>>, vector<256x128xbf16>
    %3 = arith.extf %2 : vector<256x128xbf16> to vector<256x128xf32>
    %c0_3 = arith.constant 0 : index
    %c0_4 = arith.constant 0 : index
    %4 = vector.load %arg3[%c0_3, %c0_4] : memref<1x128xf32, #tpu.memory_space<vmem>>, vector<1x128xf32>
    %5 = vector.broadcast %4 : vector<1x128xf32> to vector<256x128xf32>
    %6 = arith.mulf %1, %5 : vector<256x128xf32>
    %c0_5 = arith.constant 0 : index
    %c0_6 = arith.constant 0 : index
    %7 = vector.load %arg4[%c0_5, %c0_6] : memref<1x128xf32, #tpu.memory_space<vmem>>, vector<1x128xf32>
    %8 = vector.broadcast %7 : vector<1x128xf32> to vector<256x128xf32>
    %9 = arith.addf %6, %8 : vector<256x128xf32>
    %10 = arith.addf %9, %3 : vector<256x128xf32>
    %cst = arith.constant 0.000000e+00 : f32
    %11 = vector.broadcast %cst : f32 to vector<256x128xf32>
    %12 = arith.maximumf %10, %11 : vector<256x128xf32>
    %c0_7 = arith.constant 0 : index
    %c0_8 = arith.constant 0 : index
    %13 = vector.load %arg5[%c0_7, %c0_8] : memref<256x128xf32, #tpu.memory_space<vmem>>, vector<256x128xf32>
    tpu.vector_store %arg5[%c0_7, %c0_8], %12 {strides = array<i32>} : memref<256x128xf32, #tpu.memory_space<vmem>>, vector<256x128xf32>,
    return
  }
  func.func @transform_0(%arg0: i32) -> (i32, i32) {
    %c0_i32 = arith.constant 0 : i32
    %c0_i32_0 = arith.constant 0 : i32
    return %arg0, %c0_i32 : i32, i32
  }
  func.func @transform_1(%arg0: i32) -> (i32, i32) {
    %c0_i32 = arith.constant 0 : i32
    %c0_i32_0 = arith.constant 0 : i32
    return %arg0, %c0_i32 : i32, i32
  }
  func.func @transform_2(%arg0: i32) -> (i32, i32) {
    %c0_i32 = arith.constant 0 : i32
    %c0_i32_0 = arith.constant 0 : i32
    %c0_i32_1 = arith.constant 0 : i32
    return %c0_i32, %c0_i32_0 : i32, i32
  }
  func.func @transform_3(%arg0: i32) -> (i32, i32) {
    %c0_i32 = arith.constant 0 : i32
    %c0_i32_0 = arith.constant 0 : i32
    %c0_i32_1 = arith.constant 0 : i32
    return %c0_i32, %c0_i32_0 : i32, i32
  }
  func.func @transform_4(%arg0: i32) -> (i32, i32) {
    %c0_i32 = arith.constant 0 : i32
    %c0_i32_0 = arith.constant 0 : i32
    return %arg0, %c0_i32 : i32, i32
  }
}

</mosaic_0001>

<llo_original>
// kernel: bottleneck_forward.6
$region0: #{bottleneck_forward.6}
  #allocation0 [shape = 'u32[]', space=smem, size = 0x4, offset = 0x4, fixed_abs, tag = 'smem constant byte address 0x4 - core index']
  #allocation1 [shape = 'u32[144,128]{1,0:T(1,128)}', space=vmem, size = 0x12000, scoped, tag = 'internal scratch']
  %s0 = inlined_call_operand.vmem [shape: bf16[1024,8], index: 0, kind: input, shape index: {}]
  %s1 = inlined_call_operand.vmem [shape: bf16[8,32], index: 1, kind: input, shape index: {}]
  %s2 = inlined_call_operand.vmem [shape: f32[1,8], index: 2, kind: input, shape index: {}]
  %s3 = inlined_call_operand.vmem [shape: f32[1,8], index: 3, kind: input, shape index: {}]
  %s4 = inlined_call_operand.vmem [shape: bf16[1024,32], index: 4, kind: output, shape index: {0}]
  %s5 = inlined_call_operand.vmem [shape: f32[2,1,32], index: 5, kind: output, shape index: {1}]
  %s6 = inlined_call_operand.vmem [shape: f32[2,1,32], index: 6, kind: output, shape index: {2}]
  %7 = xla_tuple %s4, %s5, %s6
  %s8 = sld [smem:[#allocation0]]
  $region65: #{bottleneck_forward.6} parent=0
    _
  %s10 = ssub.s32 1, %s8
  %s11 = scalar_select 0, %s10, %s8
  loop: start=0, step=1, limit=4
  $region2: #{bottleneck_forward.6} parent=0 // loop_pre_header
    _
  $region3: #{bottleneck_forward.6} parent=0 // loop_header
    %s13 = sphi 0, %s17
    %p14 = scmp.ge.s32.totalorder %s13, 4
    %s23 = sphi 0, %s25
    %s26 = sphi 0, %s23
    %s27 = sphi 0, %s26
    %s43 = sphi 0, %s27
    %s47 = sphi 0, %s47
    %s49 = sphi 0, %s47
    %s50 = sphi 0, %s49
    %s64 = sphi 0, %s50
    %s68 = sphi 0, %s68
    %s70 = sphi 0, %s68
    %s71 = sphi 0, %s70
    %s85 = sphi 0, %s71
    %s89 = sphi 0, %s89
    %s91 = sphi 0, %s89
    %s92 = sphi 0, %s91
    %s106 = sphi 0, %s92
    %s112 = sphi 0, %s114
    %s115 = sphi 0, %s112
    %s116 = sphi 0, %s115
    %s132 = sphi 0, %s116
    %s138 = sphi 0, %s140
    %s141 = sphi 0, %s138
    %s142 = sphi 0, %s141
    %s158 = sphi 0, %s142
    %s164 = sphi 0, %s166
    %s167 = sphi 0, %s164
    %s168 = sphi 0, %s167
    %s184 = sphi 0, %s168
  $region4: #{bottleneck_forward.6} parent=0 // loop_header_branch
    %16 = sbr.rel (%p14) target = $region8
  $region5: #{bottleneck_forward.6} parent=0 // loop_body
    %s18 = ssub.s32 %s13, 1
    %s19 = ssub.s32 %s13, 2
    %s20 = sadd.s32 %s13, 1
    %s21 = ssub.s32 %s13, %s20
    %p22 = scmp.eq.s32.totalorder %s21, 0
    %s24 = sadd.s32 %s23, 1
    %s25 = scalar_select %p22, %s23, %s24
    %p28 = pneg %p22
    %p29 = scmp.eq.s32.totalorder %s13, 1
    %p30 = por %p28, %p29
    %p31 = scmp.ne.s32.totalorder %s23, %s26
    %p32 = scmp.eq.s32.totalorder %s13, 0
    %p33 = por %p31, %p32
    %p34 = scmp.ne.s32.totalorder %s23, %s26
    %p35 = scmp.eq.s32.totalorder %s18, 1
    %p36 = por %p34, %p35
    %p37 = scmp.ne.s32.totalorder %s26, %s27
    %p38 = scmp.eq.s32.totalorder %s18, 0
    %p39 = por %p37, %p38
    %p40 = scmp.ne.s32.totalorder %s26, %s27
    %p41 = scmp.eq.s32.totalorder %s19, 1
    %p42 = por %p40, %p41
    %p44 = scmp.ne.s32.totalorder %s27, %s43
    %p45 = scmp.eq.s32.totalorder %s19, 0
    %p46 = por %p44, %p45
    %s48 = sadd.s32 %s47, 1
    %p51 = scmp.eq.s32.totalorder %s13, 1
    %p52 = scmp.ne.s32.totalorder %s47, %s49
    %p53 = scmp.eq.s32.totalorder %s13, 0
    %p54 = por %p52, %p53
    %p55 = scmp.ne.s32.totalorder %s47, %s49
    %p56 = scmp.eq.s32.totalorder %s18, 1
    %p57 = por %p55, %p56
    %p58 = scmp.ne.s32.totalorder %s49, %s50
    %p59 = scmp.eq.s32.totalorder %s18, 0
    %p60 = por %p58, %p59
    %p61 = scmp.ne.s32.totalorder %s49, %s50
    %p62 = scmp.eq.s32.totalorder %s19, 1
    %p63 = por %p61, %p62
    %p65 = scmp.ne.s32.totalorder %s50, %s64
    %p66 = scmp.eq.s32.totalorder %s19, 0
    %p67 = por %p65, %p66
    %s69 = sadd.s32 %s68, 1
    %p72 = scmp.eq.s32.totalorder %s13, 1
    %p73 = scmp.ne.s32.totalorder %s68, %s70
    %p74 = scmp.eq.s32.totalorder %s13, 0
    %p75 = por %p73, %p74
    %p76 = scmp.ne.s32.totalorder %s68, %s70
    %p77 = scmp.eq.s32.totalorder %s18, 1
    %p78 = por %p76, %p77
    %p79 = scmp.ne.s32.totalorder %s70, %s71
    %p80 = scmp.eq.s32.totalorder %s18, 0
    %p81 = por %p79, %p80
    %p82 = scmp.ne.s32.totalorder %s70, %s71
    %p83 = scmp.eq.s32.totalorder %s19, 1
    %p84 = por %p82, %p83
    %p86 = scmp.ne.s32.totalorder %s71, %s85
    %p87 = scmp.eq.s32.totalorder %s19, 0
    %p88 = por %p86, %p87
    %s90 = sadd.s32 %s89, 1
    %p93 = scmp.eq.s32.totalorder %s13, 1
    %p94 = scmp.ne.s32.totalorder %s89, %s91
    %p95 = scmp.eq.s32.totalorder %s13, 0
    %p96 = por %p94, %p95
    %p97 = scmp.ne.s32.totalorder %s89, %s91
    %p98 = scmp.eq.s32.totalorder %s18, 1
    %p99 = por %p97, %p98
    %p100 = scmp.ne.s32.totalorder %s91, %s92
    %p101 = scmp.eq.s32.totalorder %s18, 0
    %p102 = por %p100, %p101
    %p103 = scmp.ne.s32.totalorder %s91, %s92
    %p104 = scmp.eq.s32.totalorder %s19, 1
    %p105 = por %p103, %p104
    %p107 = scmp.ne.s32.totalorder %s92, %s106
    %p108 = scmp.eq.s32.totalorder %s19, 0
    %p109 = por %p107, %p108
    %s110 = ssub.s32 %s13, %s20
    %p111 = scmp.eq.s32.totalorder %s110, 0
    %s113 = sadd.s32 %s112, 1
    %s114 = scalar_select %p111, %s112, %s113
    %p117 = pneg %p111
    %p118 = scmp.eq.s32.totalorder %s13, 1
    %p119 = por %p117, %p118
    %p120 = scmp.ne.s32.totalorder %s112, %s115
    %p121 = scmp.eq.s32.totalorder %s13, 0
    %p122 = por %p120, %p121
    %p123 = scmp.ne.s32.totalorder %s112, %s115
    %p124 = scmp.eq.s32.totalorder %s18, 1
    %p125 = por %p123, %p124
    %p126 = scmp.ne.s32.totalorder %s115, %s116
    %p127 = scmp.eq.s32.totalorder %s18, 0
    %p128 = por %p126, %p127
    %p129 = scmp.ne.s32.totalorder %s115, %s116
    %p130 = scmp.eq.s32.totalorder %s19, 1
    %p131 = por %p129, %p130
    %p133 = scmp.ne.s32.totalorder %s116, %s132
    %p134 = scmp.eq.s32.totalorder %s19, 0
    %p135 = por %p133, %p134
    %s136 = ssub.s32 %s13, %s20
    %p137 = scmp.eq.s32.totalorder %s136, 0
    %s139 = sadd.s32 %s138, 1
    %s140 = scalar_select %p137, %s138, %s139
    %p143 = pneg %p137
    %p144 = scmp.eq.s32.totalorder %s13, 1
    %p145 = por %p143, %p144
    %p146 = scmp.ne.s32.totalorder %s138, %s141
    %p147 = scmp.eq.s32.totalorder %s13, 0
    %p148 = por %p146, %p147
    %p149 = scmp.ne.s32.totalorder %s138, %s141
    %p150 = scmp.eq.s32.totalorder %s18, 1
    %p151 = por %p149, %p150
    %p152 = scmp.ne.s32.totalorder %s141, %s142
    %p153 = scmp.eq.s32.totalorder %s18, 0
    %p154 = por %p152, %p153
    %p155 = scmp.ne.s32.totalorder %s141, %s142
    %p156 = scmp.eq.s32.totalorder %s19, 1
    %p157 = por %p155, %p156
    %p159 = scmp.ne.s32.totalorder %s142, %s158
    %p160 = scmp.eq.s32.totalorder %s19, 0
    %p161 = por %p159, %p160
    %s162 = ssub.s32 %s13, %s20
    %p163 = scmp.eq.s32.totalorder %s162, 0
    %s165 = sadd.s32 %s164, 1
    %s166 = scalar_select %p163, %s164, %s165
    %p169 = pneg %p163
    %p170 = scmp.eq.s32.totalorder %s13, 1
    %p171 = por %p169, %p170
    %p172 = scmp.ne.s32.totalorder %s164, %s167
    %p173 = scmp.eq.s32.totalorder %s13, 0
    %p174 = por %p172, %p173
    %p175 = scmp.ne.s32.totalorder %s164, %s167
    %p176 = scmp.eq.s32.totalorder %s18, 1
    %p177 = por %p175, %p176
    %p178 = scmp.ne.s32.totalorder %s167, %s168
    %p179 = scmp.eq.s32.totalorder %s18, 0
    %p180 = por %p178, %p179
    %p181 = scmp.ne.s32.totalorder %s167, %s168
    %p182 = scmp.eq.s32.totalorder %s19, 1
    %p183 = por %p181, %p182
    %p185 = scmp.ne.s32.totalorder %s168, %s184
    %p186 = scmp.eq.s32.totalorder %s19, 0
    %p187 = por %p185, %p186
    %p188 = scmp.le.s32.totalorder 1, %s13
    %p189 = scmp.lt.s32.totalorder %s13, 3
    %p190 = pnand %p188, %p189
    %p191 = pneg %p190
    // Predicated region
    $region9: #{bottleneck_forward.6} parent=5 // pred_check
      _
    $region10: #{bottleneck_forward.6} parent=5 // pred_check_branch
      %193 = sbr.rel (%p190) target = $region12
    $region11: #{bottleneck_forward.6} parent=5 // pred_region
      %s194 = ssub.s32 %s13, 1
      // Predicated region
      $region13: #{bottleneck_forward.6} parent=11 // pred_check
        %p195 = pneg %p60
      $region14: #{bottleneck_forward.6} parent=11 // pred_check_branch
        %197 = sbr.rel (%p195) target = $region16
      $region15: #{bottleneck_forward.6} parent=11 // pred_region
        _
      $region16: #{bottleneck_forward.6} parent=11 // pred_fallthru
        _
      // Predicated region
      $region17: #{bottleneck_forward.6} parent=11 // pred_check
        %p198 = pneg %p81
      $region18: #{bottleneck_forward.6} parent=11 // pred_check_branch
        %200 = sbr.rel (%p198) target = $region20
      $region19: #{bottleneck_forward.6} parent=11 // pred_region
        _
      $region20: #{bottleneck_forward.6} parent=11 // pred_fallthru
        _
      // Predicated region
      $region21: #{bottleneck_forward.6} parent=11 // pred_check
        %p201 = pneg %p102
      $region22: #{bottleneck_forward.6} parent=11 // pred_check_branch
        %203 = sbr.rel (%p201) target = $region24
      $region23: #{bottleneck_forward.6} parent=11 // pred_region
        _
      $region24: #{bottleneck_forward.6} parent=11 // pred_fallthru
        _
    $region12: #{bottleneck_forward.6} parent=5 // pred_fallthru
      _
    %p204 = scmp.lt.s32.totalorder %s13, 2
    // Predicated region
    $region25: #{bottleneck_forward.6} parent=5 // pred_check
      %p205 = pneg %p204
    $region26: #{bottleneck_forward.6} parent=5 // pred_check_branch
      %207 = sbr.rel (%p205) target = $region28
    $region27: #{bottleneck_forward.6} parent=5 // pred_region
      // Predicated region
      $region29: #{bottleneck_forward.6} parent=27 // pred_check
        %p208 = pneg %p33
      $region30: #{bottleneck_forward.6} parent=27 // pred_check_branch
        %210 = sbr.rel (%p208) target = $region32
      $region31: #{bottleneck_forward.6} parent=27 // pred_region
        %s211 = smul.u32 64, %s13
        %p212 = scmp.lt.s32.totalorder %s211, 127
        %s213 = scalar_select %p212, %s211, 127
        %s214 = smul.addr %s213, 4
        %s215 = scalar_lea.vmem %s0, %s214
        %s216 = smul.u32 64, %s13
      $region32: #{bottleneck_forward.6} parent=27 // pred_fallthru
        _
    $region28: #{bottleneck_forward.6} parent=5 // pred_fallthru
      _
    %p217 = scmp.le.s32.totalorder 1, %s13
    %p218 = scmp.lt.s32.totalorder %s13, 3
    %p219 = pnand %p217, %p218
    %p220 = pneg %p219
    // Predicated region
    $region33: #{bottleneck_forward.6} parent=5 // pred_check
      _
    $region34: #{bottleneck_forward.6} parent=5 // pred_check_branch
      %222 = sbr.rel (%p219) target = $region36
    $region35: #{bottleneck_forward.6} parent=5 // pred_region
      %s223 = ssub.s32 %s13, 1
      %s224 = smul.u32 64, %s18
      %p225 = scmp.lt.s32.totalorder %s224, 127
      %s226 = scalar_select %p225, %s224, 127
      %s227 = smul.addr %s226, 4
      %s228 = scalar_lea.vmem %s0, %s227
      %p229 = pneg %p39
      %p230 = pneg %p36
      %p231 = pneg %p60
      %p232 = pneg %p57
      %p233 = pneg %p81
      %p234 = pneg %p78
      %p235 = pneg %p102
      %p236 = pneg %p99
      %p237 = pneg %p128
      %p238 = pneg %p125
      %s239 = smul.u32 64, %s18
      %p240 = scmp.lt.s32.totalorder %s239, 127
      %s241 = scalar_select %p240, %s239, 127
      %s242 = smul.addr %s241, 4
      %s243 = scalar_lea.vmem %s4, %s242
      %p244 = pneg %p154
      %p245 = pneg %p151
      %p246 = scmp.lt.s32.totalorder %s18, 1
      %s247 = scalar_select %p246, %s18, 1
      %s248 = scalar_lea.vmem %s5, %s247
      %p249 = pneg %p180
      %p250 = pneg %p177
      %p251 = scmp.lt.s32.totalorder %s18, 1
      %s252 = scalar_select %p251, %s18, 1
      %s253 = scalar_lea.vmem %s6, %s252
      %s254 = smul.u32 64, %s18
      %p255 = scmp.lt.s32.totalorder %s254, 127
      %s256 = scalar_select %p255, %s254, 127
      %s257 = smul.addr %s256, 4
      %s258 = scalar_lea.vmem %s0, %s257
      %s259 = smul.u32 64, %s18
      %s260 = smul.u32 64, %s18
      %p261 = scmp.lt.s32.totalorder %s260, 127
      %s262 = scalar_select %p261, %s260, 127
      %s263 = smul.addr %s262, 4
      %s264 = scalar_lea.vmem %s4, %s263
      %s265 = smul.u32 64, %s18
      %p266 = scmp.lt.s32.totalorder %s18, 1
      %s267 = scalar_select %p266, %s18, 1
      %s268 = scalar_lea.vmem %s5, %s267
      %p269 = scmp.lt.s32.totalorder %s18, 1
      %s270 = scalar_select %p269, %s18, 1
      %s271 = scalar_lea.vmem %s6, %s270
      %v273 = vld [vmem:[%s258] sm:$0xf]
      %v274 = vld [vmem:[%s258 + $0x4] sm:$0xf]
      %v275 = vld [vmem:[%s258 + $0x8] sm:$0xf]
      %v276 = vld [vmem:[%s258 + $0xc] sm:$0xf]
      %v277 = vld [vmem:[%s258 + $0x10] sm:$0xf]
      %v278 = vld [vmem:[%s258 + $0x14] sm:$0xf]
      %v279 = vld [vmem:[%s258 + $0x18] sm:$0xf]
      %v280 = vld [vmem:[%s258 + $0x1c] sm:$0xf]
      %v281 = vld [vmem:[%s258 + $0x20] sm:$0xf]
      %v282 = vld [vmem:[%s258 + $0x24] sm:$0xf]
      %v283 = vld [vmem:[%s258 + $0x28] sm:$0xf]
      %v284 = vld [vmem:[%s258 + $0x2c] sm:$0xf]
      %v285 = vld [vmem:[%s258 + $0x30] sm:$0xf]
      %v286 = vld [vmem:[%s258 + $0x34] sm:$0xf]
      %v287 = vld [vmem:[%s258 + $0x38] sm:$0xf]
      %v288 = vld [vmem:[%s258 + $0x3c] sm:$0xf]
      %v289 = vld [vmem:[%s258 + $0x40] sm:$0xf]
      %v290 = vld [vmem:[%s258 + $0x44] sm:$0xf]
      %v291 = vld [vmem:[%s258 + $0x48] sm:$0xf]
      %v292 = vld [vmem:[%s258 + $0x4c] sm:$0xf]
      %v293 = vld [vmem:[%s258 + $0x50] sm:$0xf]
      %v294 = vld [vmem:[%s258 + $0x54] sm:$0xf]
      %v295 = vld [vmem:[%s258 + $0x58] sm:$0xf]
      %v296 = vld [vmem:[%s258 + $0x5c] sm:$0xf]
      %v297 = vld [vmem:[%s258 + $0x60] sm:$0xf]
      %v298 = vld [vmem:[%s258 + $0x64] sm:$0xf]
      %v299 = vld [vmem:[%s258 + $0x68] sm:$0xf]
      %v300 = vld [vmem:[%s258 + $0x6c] sm:$0xf]
      %v301 = vld [vmem:[%s258 + $0x70] sm:$0xf]
      %v302 = vld [vmem:[%s258 + $0x74] sm:$0xf]
      %v303 = vld [vmem:[%s258 + $0x78] sm:$0xf]
      %v304 = vld [vmem:[%s258 + $0x7c] sm:$0xf]
      %v305 = vld [vmem:[%s258 + $0x80] sm:$0xf]
      %v306 = vld [vmem:[%s258 + $0x84] sm:$0xf]
      %v307 = vld [vmem:[%s258 + $0x88] sm:$0xf]
      %v308 = vld [vmem:[%s258 + $0x8c] sm:$0xf]
      %v309 = vld [vmem:[%s258 + $0x90] sm:$0xf]
      %v310 = vld [vmem:[%s258 + $0x94] sm:$0xf]
      %v311 = vld [vmem:[%s258 + $0x98] sm:$0xf]
      %v312 = vld [vmem:[%s258 + $0x9c] sm:$0xf]
      %v313 = vld [vmem:[%s258 + $0xa0] sm:$0xf]
      %v314 = vld [vmem:[%s258 + $0xa4] sm:$0xf]
      %v315 = vld [vmem:[%s258 + $0xa8] sm:$0xf]
      %v316 = vld [vmem:[%s258 + $0xac] sm:$0xf]
      %v317 = vld [vmem:[%s258 + $0xb0] sm:$0xf]
      %v318 = vld [vmem:[%s258 + $0xb4] sm:$0xf]
      %v319 = vld [vmem:[%s258 + $0xb8] sm:$0xf]
      %v320 = vld [vmem:[%s258 + $0xbc] sm:$0xf]
      %v321 = vld [vmem:[%s258 + $0xc0] sm:$0xf]
      %v322 = vld [vmem:[%s258 + $0xc4] sm:$0xf]
      %v323 = vld [vmem:[%s258 + $0xc8] sm:$0xf]
      %v324 = vld [vmem:[%s258 + $0xcc] sm:$0xf]
      %v325 = vld [vmem:[%s258 + $0xd0] sm:$0xf]
      %v326 = vld [vmem:[%s258 + $0xd4] sm:$0xf]
      %v327 = vld [vmem:[%s258 + $0xd8] sm:$0xf]
      %v328 = vld [vmem:[%s258 + $0xdc] sm:$0xf]
      %v329 = vld [vmem:[%s258 + $0xe0] sm:$0xf]
      %v330 = vld [vmem:[%s258 + $0xe4] sm:$0xf]
      %v331 = vld [vmem:[%s258 + $0xe8] sm:$0xf]
      %v332 = vld [vmem:[%s258 + $0xec] sm:$0xf]
      %v333 = vld [vmem:[%s258 + $0xf0] sm:$0xf]
      %v334 = vld [vmem:[%s258 + $0xf4] sm:$0xf]
      %v335 = vld [vmem:[%s258 + $0xf8] sm:$0xf]
      %v336 = vld [vmem:[%s258 + $0xfc] sm:$0xf]
      %v337 = vunpack.c.l.bf16 %v273
      %v338 = vunpack.c.l.bf16 %v274
      %v339 = vunpack.c.l.bf16 %v275
      %v340 = vunpack.c.l.bf16 %v276
      %v341 = vunpack.c.l.bf16 %v277
      %v342 = vunpack.c.l.bf16 %v278
      %v343 = vunpack.c.l.bf16 %v279
      %v344 = vunpack.c.l.bf16 %v280
      %v345 = vunpack.c.l.bf16 %v281
      %v346 = vunpack.c.l.bf16 %v282
      %v347 = vunpack.c.l.bf16 %v283
      %v348 = vunpack.c.l.bf16 %v284
      %v349 = vunpack.c.l.bf16 %v285
      %v350 = vunpack.c.l.bf16 %v286
      %v351 = vunpack.c.l.bf16 %v287
      %v352 = vunpack.c.l.bf16 %v288
      %v353 = vunpack.c.l.bf16 %v289
      %v354 = vunpack.c.l.bf16 %v290
      %v355 = vunpack.c.l.bf16 %v291
      %v356 = vunpack.c.l.bf16 %v292
      %v357 = vunpack.c.l.bf16 %v293
      %v358 = vunpack.c.l.bf16 %v294
      %v359 = vunpack.c.l.bf16 %v295
      %v360 = vunpack.c.l.bf16 %v296
      %v361 = vunpack.c.l.bf16 %v297
      %v362 = vunpack.c.l.bf16 %v298
      %v363 = vunpack.c.l.bf16 %v299
      %v364 = vunpack.c.l.bf16 %v300
      %v365 = vunpack.c.l.bf16 %v301
      %v366 = vunpack.c.l.bf16 %v302
      %v367 = vunpack.c.l.bf16 %v303
      %v368 = vunpack.c.l.bf16 %v304
      %v369 = vunpack.c.l.bf16 %v305
      %v370 = vunpack.c.l.bf16 %v306
      %v371 = vunpack.c.l.bf16 %v307
      %v372 = vunpack.c.l.bf16 %v308
      %v373 = vunpack.c.l.bf16 %v309
      %v374 = vunpack.c.l.bf16 %v310
      %v375 = vunpack.c.l.bf16 %v311
      %v376 = vunpack.c.l.bf16 %v312
      %v377 = vunpack.c.l.bf16 %v313
      %v378 = vunpack.c.l.bf16 %v314
      %v379 = vunpack.c.l.bf16 %v315
      %v380 = vunpack.c.l.bf16 %v316
      %v381 = vunpack.c.l.bf16 %v317
      %v382 = vunpack.c.l.bf16 %v318
      %v383 = vunpack.c.l.bf16 %v319
      %v384 = vunpack.c.l.bf16 %v320
      %v385 = vunpack.c.l.bf16 %v321
      %v386 = vunpack.c.l.bf16 %v322
      %v387 = vunpack.c.l.bf16 %v323
      %v388 = vunpack.c.l.bf16 %v324
      %v389 = vunpack.c.l.bf16 %v325
      %v390 = vunpack.c.l.bf16 %v326
      %v391 = vunpack.c.l.bf16 %v327
      %v392 = vunpack.c.l.bf16 %v328
      %v393 = vunpack.c.l.bf16 %v329
      %v394 = vunpack.c.l.bf16 %v330
      %v395 = vunpack.c.l.bf16 %v331
      %v396 = vunpack.c.l.bf16 %v332
      %v397 = vunpack.c.l.bf16 %v333
      %v398 = vunpack.c.l.bf16 %v334
      %v399 = vunpack.c.l.bf16 %v335
      %v400 = vunpack.c.l.bf16 %v336
      %v401 = vld [vmem:[%s2] sm:$0x1]
      %v403 = vlaneseq
      %v404 = vshrl.u32 %v403, 7
      %v405 = vsub.s32 0, %v404
      %v406 = vrot.slane %v401, %v405
      %v408 = vmul.f32 %v337, %v406
      %v409 = vmul.f32 %v338, %v406
      %v410 = vmul.f32 %v339, %v406
      %v411 = vmul.f32 %v340, %v406
      %v412 = vmul.f32 %v341, %v406
      %v413 = vmul.f32 %v342, %v406
      %v414 = vmul.f32 %v343, %v406
      %v415 = vmul.f32 %v344, %v406
      %v416 = vmul.f32 %v345, %v406
      %v417 = vmul.f32 %v346, %v406
      %v418 = vmul.f32 %v347, %v406
      %v419 = vmul.f32 %v348, %v406
      %v420 = vmul.f32 %v349, %v406
      %v421 = vmul.f32 %v350, %v406
      %v422 = vmul.f32 %v351, %v406
      %v423 = vmul.f32 %v352, %v406
      %v424 = vmul.f32 %v353, %v406
      %v425 = vmul.f32 %v354, %v406
      %v426 = vmul.f32 %v355, %v406
      %v427 = vmul.f32 %v356, %v406
      %v428 = vmul.f32 %v357, %v406
      %v429 = vmul.f32 %v358, %v406
      %v430 = vmul.f32 %v359, %v406
      %v431 = vmul.f32 %v360, %v406
      %v432 = vmul.f32 %v361, %v406
      %v433 = vmul.f32 %v362, %v406
      %v434 = vmul.f32 %v363, %v406
      %v435 = vmul.f32 %v364, %v406
      %v436 = vmul.f32 %v365, %v406
      %v437 = vmul.f32 %v366, %v406
      %v438 = vmul.f32 %v367, %v406
      %v439 = vmul.f32 %v368, %v406
      %v440 = vmul.f32 %v369, %v406
      %v441 = vmul.f32 %v370, %v406
      %v442 = vmul.f32 %v371, %v406
      %v443 = vmul.f32 %v372, %v406
      %v444 = vmul.f32 %v373, %v406
      %v445 = vmul.f32 %v374, %v406
      %v446 = vmul.f32 %v375, %v406
      %v447 = vmul.f32 %v376, %v406
      %v448 = vmul.f32 %v377, %v406
      %v449 = vmul.f32 %v378, %v406
      %v450 = vmul.f32 %v379, %v406
      %v451 = vmul.f32 %v380, %v406
      %v452 = vmul.f32 %v381, %v406
      %v453 = vmul.f32 %v382, %v406
      %v454 = vmul.f32 %v383, %v406
      %v455 = vmul.f32 %v384, %v406
      %v456 = vmul.f32 %v385, %v406
      %v457 = vmul.f32 %v386, %v406
      %v458 = vmul.f32 %v387, %v406
      %v459 = vmul.f32 %v388, %v406
      %v460 = vmul.f32 %v389, %v406
      %v461 = vmul.f32 %v390, %v406
      %v462 = vmul.f32 %v391, %v406
      %v463 = vmul.f32 %v392, %v406
      %v464 = vmul.f32 %v393, %v406
      %v465 = vmul.f32 %v394, %v406
      %v466 = vmul.f32 %v395, %v406
      %v467 = vmul.f32 %v396, %v406
      %v468 = vmul.f32 %v397, %v406
      %v469 = vmul.f32 %v398, %v406
      %v470 = vmul.f32 %v399, %v406
      %v471 = vmul.f32 %v400, %v406
      %v472 = vld [vmem:[%s3] sm:$0x1]
      %v474 = vlaneseq
      %v475 = vshrl.u32 %v474, 7
      %v476 = vsub.s32 0, %v475
      %v477 = vrot.slane %v472, %v476
      %v479 = vadd.f32 %v408, %v477
      %v480 = vadd.f32 %v409, %v477
      %v481 = vadd.f32 %v410, %v477
      %v482 = vadd.f32 %v411, %v477
      %v483 = vadd.f32 %v412, %v477
      %v484 = vadd.f32 %v413, %v477
      %v485 = vadd.f32 %v414, %v477
      %v486 = vadd.f32 %v415, %v477
      %v487 = vadd.f32 %v416, %v477
      %v488 = vadd.f32 %v417, %v477
      %v489 = vadd.f32 %v418, %v477
      %v490 = vadd.f32 %v419, %v477
      %v491 = vadd.f32 %v420, %v477
      %v492 = vadd.f32 %v421, %v477
      %v493 = vadd.f32 %v422, %v477
      %v494 = vadd.f32 %v423, %v477
      %v495 = vadd.f32 %v424, %v477
      %v496 = vadd.f32 %v425, %v477
      %v497 = vadd.f32 %v426, %v477
      %v498 = vadd.f32 %v427, %v477
      %v499 = vadd.f32 %v428, %v477
      %v500 = vadd.f32 %v429, %v477
      %v501 = vadd.f32 %v430, %v477
      %v502 = vadd.f32 %v431, %v477
      %v503 = vadd.f32 %v432, %v477
      %v504 = vadd.f32 %v433, %v477
      %v505 = vadd.f32 %v434, %v477
      %v506 = vadd.f32 %v435, %v477
      %v507 = vadd.f32 %v436, %v477
      %v508 = vadd.f32 %v437, %v477
      %v509 = vadd.f32 %v438, %v477
      %v510 = vadd.f32 %v439, %v477
      %v511 = vadd.f32 %v440, %v477
      %v512 = vadd.f32 %v441, %v477
      %v513 = vadd.f32 %v442, %v477
      %v514 = vadd.f32 %v443, %v477
      %v515 = vadd.f32 %v444, %v477
      %v516 = vadd.f32 %v445, %v477
      %v517 = vadd.f32 %v446, %v477
      %v518 = vadd.f32 %v447, %v477
      %v519 = vadd.f32 %v448, %v477
      %v520 = vadd.f32 %v449, %v477
      %v521 = vadd.f32 %v450, %v477
      %v522 = vadd.f32 %v451, %v477
      %v523 = vadd.f32 %v452, %v477
      %v524 = vadd.f32 %v453, %v477
      %v525 = vadd.f32 %v454, %v477
      %v526 = vadd.f32 %v455, %v477
      %v527 = vadd.f32 %v456, %v477
      %v528 = vadd.f32 %v457, %v477
      %v529 = vadd.f32 %v458, %v477
      %v530 = vadd.f32 %v459, %v477
      %v531 = vadd.f32 %v460, %v477
      %v532 = vadd.f32 %v461, %v477
      %v533 = vadd.f32 %v462, %v477
      %v534 = vadd.f32 %v463, %v477
      %v535 = vadd.f32 %v464, %v477
      %v536 = vadd.f32 %v465, %v477
      %v537 = vadd.f32 %v466, %v477
      %v538 = vadd.f32 %v467, %v477
      %v539 = vadd.f32 %v468, %v477
      %v540 = vadd.f32 %v469, %v477
      %v541 = vadd.f32 %v470, %v477
      %v542 = vadd.f32 %v471, %v477
      %v543 = vmax.f32 %v479, 0.0
      %v544 = vmax.f32 %v480, 0.0
      %v545 = vmax.f32 %v481, 0.0
      %v546 = vmax.f32 %v482, 0.0
      %v547 = vmax.f32 %v483, 0.0
      %v548 = vmax.f32 %v484, 0.0
      %v549 = vmax.f32 %v485, 0.0
      %v550 = vmax.f32 %v486, 0.0
      %v551 = vmax.f32 %v487, 0.0
      %v552 = vmax.f32 %v488, 0.0
      %v553 = vmax.f32 %v489, 0.0
      %v554 = vmax.f32 %v490, 0.0
      %v555 = vmax.f32 %v491, 0.0
      %v556 = vmax.f32 %v492, 0.0
      %v557 = vmax.f32 %v493, 0.0
      %v558 = vmax.f32 %v494, 0.0
      %v559 = vmax.f32 %v495, 0.0
      %v560 = vmax.f32 %v496, 0.0
      %v561 = vmax.f32 %v497, 0.0
      %v562 = vmax.f32 %v498, 0.0
      %v563 = vmax.f32 %v499, 0.0
      %v564 = vmax.f32 %v500, 0.0
      %v565 = vmax.f32 %v501, 0.0
      %v566 = vmax.f32 %v502, 0.0
      %v567 = vmax.f32 %v503, 0.0
      %v568 = vmax.f32 %v504, 0.0
      %v569 = vmax.f32 %v505, 0.0
      %v570 = vmax.f32 %v506, 0.0
      %v571 = vmax.f32 %v507, 0.0
      %v572 = vmax.f32 %v508, 0.0
      %v573 = vmax.f32 %v509, 0.0
      %v574 = vmax.f32 %v510, 0.0
      %v575 = vmax.f32 %v511, 0.0
      %v576 = vmax.f32 %v512, 0.0
      %v577 = vmax.f32 %v513, 0.0
      %v578 = vmax.f32 %v514, 0.0
      %v579 = vmax.f32 %v515, 0.0
      %v580 = vmax.f32 %v516, 0.0
      %v581 = vmax.f32 %v517, 0.0
      %v582 = vmax.f32 %v518, 0.0
      %v583 = vmax.f32 %v519, 0.0
      %v584 = vmax.f32 %v520, 0.0
      %v585 = vmax.f32 %v521, 0.0
      %v586 = vmax.f32 %v522, 0.0
      %v587 = vmax.f32 %v523, 0.0
      %v588 = vmax.f32 %v524, 0.0
      %v589 = vmax.f32 %v525, 0.0
      %v590 = vmax.f32 %v526, 0.0
      %v591 = vmax.f32 %v527, 0.0
      %v592 = vmax.f32 %v528, 0.0
      %v593 = vmax.f32 %v529, 0.0
      %v594 = vmax.f32 %v530, 0.0
      %v595 = vmax.f32 %v531, 0.0
      %v596 = vmax.f32 %v532, 0.0
      %v597 = vmax.f32 %v533, 0.0
      %v598 = vmax.f32 %v534, 0.0
      %v599 = vmax.f32 %v535, 0.0
      %v600 = vmax.f32 %v536, 0.0
      %v601 = vmax.f32 %v537, 0.0
      %v602 = vmax.f32 %v538, 0.0
      %v603 = vmax.f32 %v539, 0.0
      %v604 = vmax.f32 %v540, 0.0
      %v605 = vmax.f32 %v541, 0.0
      %v606 = vmax.f32 %v542, 0.0
      %v607 = vpack.c.bf16 %v544, %v543
      %v608 = vpack.c.bf16 %v546, %v545
      %v609 = vpack.c.bf16 %v548, %v547
      %v610 = vpack.c.bf16 %v550, %v549
      %v611 = vpack.c.bf16 %v552, %v551
      %v612 = vpack.c.bf16 %v554, %v553
      %v613 = vpack.c.bf16 %v556, %v555
      %v614 = vpack.c.bf16 %v558, %v557
      %v615 = vpack.c.bf16 %v560, %v559
      %v616 = vpack.c.bf16 %v562, %v561
      %v617 = vpack.c.bf16 %v564, %v563
      %v618 = vpack.c.bf16 %v566, %v565
      %v619 = vpack.c.bf16 %v568, %v567
      %v620 = vpack.c.bf16 %v570, %v569
      %v621 = vpack.c.bf16 %v572, %v571
      %v622 = vpack.c.bf16 %v574, %v573
      %v623 = vpack.c.bf16 %v576, %v575
      %v624 = vpack.c.bf16 %v578, %v577
      %v625 = vpack.c.bf16 %v580, %v579
      %v626 = vpack.c.bf16 %v582, %v581
      %v627 = vpack.c.bf16 %v584, %v583
      %v628 = vpack.c.bf16 %v586, %v585
      %v629 = vpack.c.bf16 %v588, %v587
      %v630 = vpack.c.bf16 %v590, %v589
      %v631 = vpack.c.bf16 %v592, %v591
      %v632 = vpack.c.bf16 %v594, %v593
      %v633 = vpack.c.bf16 %v596, %v595
      %v634 = vpack.c.bf16 %v598, %v597
      %v635 = vpack.c.bf16 %v600, %v599
      %v636 = vpack.c.bf16 %v602, %v601
      %v637 = vpack.c.bf16 %v604, %v603
      %v638 = vpack.c.bf16 %v606, %v605
      %v639 = vld [vmem:[%s1] sm:$0xf]
      %vm640 = vcmask 64512
      %v642 = vsel %vm640, %v607, 0
      %v645 = vsel %vm640, %v608, 0
      %v648 = vsel %vm640, %v609, 0
      %v651 = vsel %vm640, %v610, 0
      %v654 = vsel %vm640, %v611, 0
      %v657 = vsel %vm640, %v612, 0
      %v660 = vsel %vm640, %v613, 0
      %v663 = vsel %vm640, %v614, 0
      %v666 = vsel %vm640, %v615, 0
      %v669 = vsel %vm640, %v616, 0
      %v672 = vsel %vm640, %v617, 0
      %v675 = vsel %vm640, %v618, 0
      %v678 = vsel %vm640, %v619, 0
      %v681 = vsel %vm640, %v620, 0
      %v684 = vsel %vm640, %v621, 0
      %v687 = vsel %vm640, %v622, 0
      %v690 = vsel %vm640, %v623, 0
      %v693 = vsel %vm640, %v624, 0
      %v696 = vsel %vm640, %v625, 0
      %v699 = vsel %vm640, %v626, 0
      %v702 = vsel %vm640, %v627, 0
      %v705 = vsel %vm640, %v628, 0
      %v708 = vsel %vm640, %v629, 0
      %v711 = vsel %vm640, %v630, 0
      %v714 = vsel %vm640, %v631, 0
      %v717 = vsel %vm640, %v632, 0
      %v720 = vsel %vm640, %v633, 0
      %v723 = vsel %vm640, %v634, 0
      %v726 = vsel %vm640, %v635, 0
      %v729 = vsel %vm640, %v636, 0
      %v732 = vsel %vm640, %v637, 0
      %v735 = vsel %vm640, %v638, 0
      %vm737 = vcmask 1043456
      %v739 = vsel %vm737, %v639, 0
      %741 = vmatprep.subr.bf16.mxu0 0
      %742 = vmatpush1.bf16.msra.mxu0 %v739
      %743 = vmatprep.subr.bf16.mxu0 0
      %744 = vmatpush1.bf16.msra.mxu0 0
      %745 = vmatprep.subr.bf16.mxu0 0
      %746 = vmatpush1.bf16.msra.mxu0 0
      %747 = vmatprep.subr.bf16.mxu0 0
      %748 = vmatpush1.bf16.msra.mxu0 0
      %749 = vmatprep.subr.bf16.mxu0 0
      %750 = vmatpush1.bf16.msra.mxu0 0
      %751 = vmatprep.subr.bf16.mxu0 0
      %752 = vmatpush1.bf16.msra.mxu0 0
      %753 = vmatprep.subr.bf16.mxu0 0
      %754 = vmatpush1.bf16.msra.mxu0 0
      %755 = vmatprep.subr.bf16.mxu0 0
      %756 = vmatpush1.bf16.msra.mxu0 0
      %757 = vmatprep.subr.bf16.mxu0 0
      %758 = vmatpush1.bf16.msra.mxu0 0
      %759 = vmatprep.subr.bf16.mxu0 0
      %760 = vmatpush1.bf16.msra.mxu0 0
      %761 = vmatprep.subr.bf16.mxu0 0
      %762 = vmatpush1.bf16.msra.mxu0 0
      %763 = vmatprep.subr.bf16.mxu0 0
      %764 = vmatpush1.bf16.msra.mxu0 0
      %765 = vmatprep.subr.bf16.mxu0 0
      %766 = vmatpush1.bf16.msra.mxu0 0
      %767 = vmatprep.subr.bf16.mxu0 0
      %768 = vmatpush1.bf16.msra.mxu0 0
      %769 = vmatprep.subr.bf16.mxu0 0
      %770 = vmatpush1.bf16.msra.mxu0 0
      %771 = vmatprep.subr.bf16.mxu0 0
      %772 = vmatpush1.bf16.msra.mxu0 0
      %773 = vmatprep.mubr.bf16.mxu0 0
      %774 = vmatmul.mubr.bf16.gmra.mrb[0].mxu0 %v642
      %v775 = vpop.f32.mrb[0].mxu0
      %v776 = vadd.f32 0.0, %v775
      %v777 = vpop.f32.mrb[0].mxu0
      %v778 = vpop.f32.mrb[0].mxu0
      %v779 = vadd.f32 0.0, %v778
      %v780 = vpop.f32.mrb[0].mxu0
      %781 = vmatprep.mubr.bf16.mxu0 0
      %782 = vmatmul.mubr.bf16.gmra.mrb[0].mxu0 %v645
      %v783 = vpop.f32.mrb[0].mxu0
      %v784 = vadd.f32 0.0, %v783
      %v785 = vpop.f32.mrb[0].mxu0
      %v786 = vpop.f32.mrb[0].mxu0
      %v787 = vadd.f32 0.0, %v786
      %v788 = vpop.f32.mrb[0].mxu0
      %789 = vmatprep.mubr.bf16.mxu0 0
      %790 = vmatmul.mubr.bf16.gmra.mrb[0].mxu0 %v648
      %v791 = vpop.f32.mrb[0].mxu0
      %v792 = vadd.f32 0.0, %v791
      %v793 = vpop.f32.mrb[0].mxu0
      %v794 = vpop.f32.mrb[0].mxu0
      %v795 = vadd.f32 0.0, %v794
      %v796 = vpop.f32.mrb[0].mxu0
      %797 = vmatprep.mubr.bf16.mxu0 0
      %798 = vmatmul.mubr.bf16.gmra.mrb[0].mxu0 %v651
      %v799 = vpop.f32.mrb[0].mxu0
      %v800 = vadd.f32 0.0, %v799
      %v801 = vpop.f32.mrb[0].mxu0
      %v802 = vpop.f32.mrb[0].mxu0
      %v803 = vadd.f32 0.0, %v802
      %v804 = vpop.f32.mrb[0].mxu0
      %805 = vmatprep.mubr.bf16.mxu0 0
      %806 = vmatmul.mubr.bf16.gmra.mrb[0].mxu0 %v654
      %v807 = vpop.f32.mrb[0].mxu0
      %v808 = vadd.f32 0.0, %v807
      %v809 = vpop.f32.mrb[0].mxu0
      %v810 = vpop.f32.mrb[0].mxu0
      %v811 = vadd.f32 0.0, %v810
      %v812 = vpop.f32.mrb[0].mxu0
      %813 = vmatprep.mubr.bf16.mxu0 0
      %814 = vmatmul.mubr.bf16.gmra.mrb[0].mxu0 %v657
      %v815 = vpop.f32.mrb[0].mxu0
      %v816 = vadd.f32 0.0, %v815
      %v817 = vpop.f32.mrb[0].mxu0
      %v818 = vpop.f32.mrb[0].mxu0
      %v819 = vadd.f32 0.0, %v818
      %v820 = vpop.f32.mrb[0].mxu0
      %821 = vmatprep.mubr.bf16.mxu0 0
      %822 = vmatmul.mubr.bf16.gmra.mrb[0].mxu0 %v660
      %v823 = vpop.f32.mrb[0].mxu0
      %v824 = vadd.f32 0.0, %v823
      %v825 = vpop.f32.mrb[0].mxu0
      %v826 = vpop.f32.mrb[0].mxu0
      %v827 = vadd.f32 0.0, %v826
      %v828 = vpop.f32.mrb[0].mxu0
      %829 = vmatprep.mubr.bf16.mxu0 0
      %830 = vmatmul.mubr.bf16.gmra.mrb[0].mxu0 %v663
      %v831 = vpop.f32.mrb[0].mxu0
      %v832 = vadd.f32 0.0, %v831
      %v833 = vpop.f32.mrb[0].mxu0
      %v834 = vpop.f32.mrb[0].mxu0
      %v835 = vadd.f32 0.0, %v834
      %v836 = vpop.f32.mrb[0].mxu0
      %837 = vmatprep.mubr.bf16.mxu0 0
      %838 = vmatmul.mubr.bf16.gmra.mrb[0].mxu0 %v666
      %v839 = vpop.f32.mrb[0].mxu0
      %v840 = vadd.f32 0.0, %v839
      %v841 = vpop.f32.mrb[0].mxu0
      %v842 = vpop.f32.mrb[0].mxu0
      %v843 = vadd.f32 0.0, %v842
      %v844 = vpop.f32.mrb[0].mxu0
      %845 = vmatprep.mubr.bf16.mxu0 0
      %846 = vmatmul.mubr.bf16.gmra.mrb[0].mxu0 %v669
      %v847 = vpop.f32.mrb[0].mxu0
      %v848 = vadd.f32 0.0, %v847
      %v849 = vpop.f32.mrb[0].mxu0
      %v850 = vpop.f32.mrb[0].mxu0
      %v851 = vadd.f32 0.0, %v850
      %v852 = vpop.f32.mrb[0].mxu0
      %853 = vmatprep.mubr.bf16.mxu0 0
      %854 = vmatmul.mubr.bf16.gmra.mrb[0].mxu0 %v672
      %v855 = vpop.f32.mrb[0].mxu0
      %v856 = vadd.f32 0.0, %v855
      %v857 = vpop.f32.mrb[0].mxu0
      %v858 = vpop.f32.mrb[0].mxu0
      %v859 = vadd.f32 0.0, %v858
      %v860 = vpop.f32.mrb[0].mxu0
      %861 = vmatprep.mubr.bf16.mxu0 0
      %862 = vmatmul.mubr.bf16.gmra.mrb[0].mxu0 %v675
      %v863 = vpop.f32.mrb[0].mxu0
      %v864 = vadd.f32 0.0, %v863
      %v865 = vpop.f32.mrb[0].mxu0
      %v866 = vpop.f32.mrb[0].mxu0
      %v867 = vadd.f32 0.0, %v866
      %v868 = vpop.f32.mrb[0].mxu0
      %869 = vmatprep.mubr.bf16.mxu0 0
      %870 = vmatmul.mubr.bf16.gmra.mrb[0].mxu0 %v678
      %v871 = vpop.f32.mrb[0].mxu0
      %v872 = vadd.f32 0.0, %v871
      %v873 = vpop.f32.mrb[0].mxu0
      %v874 = vpop.f32.mrb[0].mxu0
      %v875 = vadd.f32 0.0, %v874
      %v876 = vpop.f32.mrb[0].mxu0
      %877 = vmatprep.mubr.bf16.mxu0 0
      %878 = vmatmul.mubr.bf16.gmra.mrb[0].mxu0 %v681
      %v879 = vpop.f32.mrb[0].mxu0
      %v880 = vadd.f32 0.0, %v879
      %v881 = vpop.f32.mrb[0].mxu0
      %v882 = vpop.f32.mrb[0].mxu0
      %v883 = vadd.f32 0.0, %v882
      %v884 = vpop.f32.mrb[0].mxu0
      %885 = vmatprep.mubr.bf16.mxu0 0
      %886 = vmatmul.mubr.bf16.gmra.mrb[0].mxu0 %v684
      %v887 = vpop.f32.mrb[0].mxu0
      %v888 = vadd.f32 0.0, %v887
      %v889 = vpop.f32.mrb[0].mxu0
      %v890 = vpop.f32.mrb[0].mxu0
      %v891 = vadd.f32 0.0, %v890
      %v892 = vpop.f32.mrb[0].mxu0
      %893 = vmatprep.mubr.bf16.mxu0 0
      %894 = vmatmul.mubr.bf16.gmra.mrb[0].mxu0 %v687
      %v895 = vpop.f32.mrb[0].mxu0
      %v896 = vadd.f32 0.0, %v895
      %v897 = vpop.f32.mrb[0].mxu0
      %v898 = vpop.f32.mrb[0].mxu0
      %v899 = vadd.f32 0.0, %v898
      %v900 = vpop.f32.mrb[0].mxu0
      %901 = vmatprep.mubr.bf16.mxu0 0
      %902 = vmatmul.mubr.bf16.gmra.mrb[0].mxu0 %v690
      %v903 = vpop.f32.mrb[0].mxu0
      %v904 = vadd.f32 0.0, %v903
      %v905 = vpop.f32.mrb[0].mxu0
      %v906 = vpop.f32.mrb[0].mxu0
      %v907 = vadd.f32 0.0, %v906
      %v908 = vpop.f32.mrb[0].mxu0
      %909 = vmatprep.mubr.bf16.mxu0 0
      %910 = vmatmul.mubr.bf16.gmra.mrb[0].mxu0 %v693
      %v911 = vpop.f32.mrb[0].mxu0
      %v912 = vadd.f32 0.0, %v911
      %v913 = vpop.f32.mrb[0].mxu0
      %v914 = vpop.f32.mrb[0].mxu0
      %v915 = vadd.f32 0.0, %v914
      %v916 = vpop.f32.mrb[0].mxu0
      %917 = vmatprep.mubr.bf16.mxu0 0
      %918 = vmatmul.mubr.bf16.gmra.mrb[0].mxu0 %v696
      %v919 = vpop.f32.mrb[0].mxu0
      %v920 = vadd.f32 0.0, %v919
      %v921 = vpop.f32.mrb[0].mxu0
      %v922 = vpop.f32.mrb[0].mxu0
      %v923 = vadd.f32 0.0, %v922
      %v924 = vpop.f32.mrb[0].mxu0
      %925 = vmatprep.mubr.bf16.mxu0 0
      %926 = vmatmul.mubr.bf16.gmra.mrb[0].mxu0 %v699
      %v927 = vpop.f32.mrb[0].mxu0
      %v928 = vadd.f32 0.0, %v927
      %v929 = vpop.f32.mrb[0].mxu0
      %v930 = vpop.f32.mrb[0].mxu0
      %v931 = vadd.f32 0.0, %v930
      %v932 = vpop.f32.mrb[0].mxu0
      %933 = vmatprep.mubr.bf16.mxu0 0
      %934 = vmatmul.mubr.bf16.gmra.mrb[0].mxu0 %v702
      %v935 = vpop.f32.mrb[0].mxu0
      %v936 = vadd.f32 0.0, %v935
      %v937 = vpop.f32.mrb[0].mxu0
      %v938 = vpop.f32.mrb[0].mxu0
      %v939 = vadd.f32 0.0, %v938
      %v940 = vpop.f32.mrb[0].mxu0
      %941 = vmatprep.mubr.bf16.mxu0 0
      %942 = vmatmul.mubr.bf16.gmra.mrb[0].mxu0 %v705
      %v943 = vpop.f32.mrb[0].mxu0
      %v944 = vadd.f32 0.0, %v943
      %v945 = vpop.f32.mrb[0].mxu0
      %v946 = vpop.f32.mrb[0].mxu0
      %v947 = vadd.f32 0.0, %v946
      %v948 = vpop.f32.mrb[0].mxu0
      %949 = vmatprep.mubr.bf16.mxu0 0
      %950 = vmatmul.mubr.bf16.gmra.mrb[0].mxu0 %v708
      %v951 = vpop.f32.mrb[0].mxu0
      %v952 = vadd.f32 0.0, %v951
      %v953 = vpop.f32.mrb[0].mxu0
      %v954 = vpop.f32.mrb[0].mxu0
      %v955 = vadd.f32 0.0, %v954
      %v956 = vpop.f32.mrb[0].mxu0
      %957 = vmatprep.mubr.bf16.mxu0 0
      %958 = vmatmul.mubr.bf16.gmra.mrb[0].mxu0 %v711
      %v959 = vpop.f32.mrb[0].mxu0
      %v960 = vadd.f32 0.0, %v959
      %v961 = vpop.f32.mrb[0].mxu0
      %v962 = vpop.f32.mrb[0].mxu0
      %v963 = vadd.f32 0.0, %v962
      %v964 = vpop.f32.mrb[0].mxu0
      %965 = vmatprep.mubr.bf16.mxu0 0
      %966 = vmatmul.mubr.bf16.gmra.mrb[0].mxu0 %v714
      %v967 = vpop.f32.mrb[0].mxu0
      %v968 = vadd.f32 0.0, %v967
      %v969 = vpop.f32.mrb[0].mxu0
      %v970 = vpop.f32.mrb[0].mxu0
      %v971 = vadd.f32 0.0, %v970
      %v972 = vpop.f32.mrb[0].mxu0
      %973 = vmatprep.mubr.bf16.mxu0 0
      %974 = vmatmul.mubr.bf16.gmra.mrb[0].mxu0 %v717
      %v975 = vpop.f32.mrb[0].mxu0
      %v976 = vadd.f32 0.0, %v975
      %v977 = vpop.f32.mrb[0].mxu0
      %v978 = vpop.f32.mrb[0].mxu0
      %v979 = vadd.f32 0.0, %v978
      %v980 = vpop.f32.mrb[0].mxu0
      %981 = vmatprep.mubr.bf16.mxu0 0
      %982 = vmatmul.mubr.bf16.gmra.mrb[0].mxu0 %v720
      %v983 = vpop.f32.mrb[0].mxu0
      %v984 = vadd.f32 0.0, %v983
      %v985 = vpop.f32.mrb[0].mxu0
      %v986 = vpop.f32.mrb[0].mxu0
      %v987 = vadd.f32 0.0, %v986
      %v988 = vpop.f32.mrb[0].mxu0
      %989 = vmatprep.mubr.bf16.mxu0 0
      %990 = vmatmul.mubr.bf16.gmra.mrb[0].mxu0 %v723
      %v991 = vpop.f32.mrb[0].mxu0
      %v992 = vadd.f32 0.0, %v991
      %v993 = vpop.f32.mrb[0].mxu0
      %v994 = vpop.f32.mrb[0].mxu0
      %v995 = vadd.f32 0.0, %v994
      %v996 = vpop.f32.mrb[0].mxu0
      %997 = vmatprep.mubr.bf16.mxu0 0
      %998 = vmatmul.mubr.bf16.gmra.mrb[0].mxu0 %v726
      %v999 = vpop.f32.mrb[0].mxu0
      %v1000 = vadd.f32 0.0, %v999
      %v1001 = vpop.f32.mrb[0].mxu0
      %v1002 = vpop.f32.mrb[0].mxu0
      %v1003 = vadd.f32 0.0, %v1002
      %v1004 = vpop.f32.mrb[0].mxu0
      %1005 = vmatprep.mubr.bf16.mxu0 0
      %1006 = vmatmul.mubr.bf16.gmra.mrb[0].mxu0 %v729
      %v1007 = vpop.f32.mrb[0].mxu0
      %v1008 = vadd.f32 0.0, %v1007
      %v1009 = vpop.f32.mrb[0].mxu0
      %v1010 = vpop.f32.mrb[0].mxu0
      %v1011 = vadd.f32 0.0, %v1010
      %v1012 = vpop.f32.mrb[0].mxu0
      %1013 = vmatprep.mubr.bf16.mxu0 0
      %1014 = vmatmul.mubr.bf16.gmra.mrb[0].mxu0 %v732
      %v1015 = vpop.f32.mrb[0].mxu0
      %v1016 = vadd.f32 0.0, %v1015
      %v1017 = vpop.f32.mrb[0].mxu0
      %v1018 = vpop.f32.mrb[0].mxu0
      %v1019 = vadd.f32 0.0, %v1018
      %v1020 = vpop.f32.mrb[0].mxu0
      %1021 = vmatprep.mubr.bf16.mxu0 0
      %1022 = vmatmul.mubr.bf16.gmra.mrb[0].mxu0 %v735
      %v1023 = vpop.f32.mrb[0].mxu0
      %v1024 = vadd.f32 0.0, %v1023
      %v1025 = vpop.f32.mrb[0].mxu0
      %v1026 = vpop.f32.mrb[0].mxu0
      %v1027 = vadd.f32 0.0, %v1026
      %v1028 = vpop.f32.mrb[0].mxu0
      %1029 = vdwg.mxu0
      %v1030 = vpack.c.bf16 %v779, %v776
      %v1031 = vpack.c.bf16 %v787, %v784
      %v1032 = vpack.c.bf16 %v795, %v792
      %v1033 = vpack.c.bf16 %v803, %v800
      %v1034 = vpack.c.bf16 %v811, %v808
      %v1035 = vpack.c.bf16 %v819, %v816
      %v1036 = vpack.c.bf16 %v827, %v824
      %v1037 = vpack.c.bf16 %v835, %v832
      %v1038 = vpack.c.bf16 %v843, %v840
      %v1039 = vpack.c.bf16 %v851, %v848
      %v1040 = vpack.c.bf16 %v859, %v856
      %v1041 = vpack.c.bf16 %v867, %v864
      %v1042 = vpack.c.bf16 %v875, %v872
      %v1043 = vpack.c.bf16 %v883, %v880
      %v1044 = vpack.c.bf16 %v891, %v888
      %v1045 = vpack.c.bf16 %v899, %v896
      %v1046 = vpack.c.bf16 %v907, %v904
      %v1047 = vpack.c.bf16 %v915, %v912
      %v1048 = vpack.c.bf16 %v923, %v920
      %v1049 = vpack.c.bf16 %v931, %v928
      %v1050 = vpack.c.bf16 %v939, %v936
      %v1051 = vpack.c.bf16 %v947, %v944
      %v1052 = vpack.c.bf16 %v955, %v952
      %v1053 = vpack.c.bf16 %v963, %v960
      %v1054 = vpack.c.bf16 %v971, %v968
      %v1055 = vpack.c.bf16 %v979, %v976
      %v1056 = vpack.c.bf16 %v987, %v984
      %v1057 = vpack.c.bf16 %v995, %v992
      %v1058 = vpack.c.bf16 %v1003, %v1000
      %v1059 = vpack.c.bf16 %v1011, %v1008
      %v1060 = vpack.c.bf16 %v1019, %v1016
      %v1061 = vpack.c.bf16 %v1027, %v1024
      %v1094 = vunpack.c.l.b16 %v1030
      %v1095 = vunpack.c.h.b16 %v1030
      %v1096 = vunpack.c.l.b16 %v1031
      %v1097 = vunpack.c.h.b16 %v1031
      %v1098 = vunpack.c.l.b16 %v1032
      %v1099 = vunpack.c.h.b16 %v1032
      %v1100 = vunpack.c.l.b16 %v1033
      %v1101 = vunpack.c.h.b16 %v1033
      %v1102 = vunpack.c.l.b16 %v1034
      %v1103 = vunpack.c.h.b16 %v1034
      %v1104 = vunpack.c.l.b16 %v1035
      %v1105 = vunpack.c.h.b16 %v1035
      %v1106 = vunpack.c.l.b16 %v1036
      %v1107 = vunpack.c.h.b16 %v1036
      %v1108 = vunpack.c.l.b16 %v1037
      %v1109 = vunpack.c.h.b16 %v1037
      %v1110 = vunpack.c.l.b16 %v1038
      %v1111 = vunpack.c.h.b16 %v1038
      %v1112 = vunpack.c.l.b16 %v1039
      %v1113 = vunpack.c.h.b16 %v1039
      %v1114 = vunpack.c.l.b16 %v1040
      %v1115 = vunpack.c.h.b16 %v1040
      %v1116 = vunpack.c.l.b16 %v1041
      %v1117 = vunpack.c.h.b16 %v1041
      %v1118 = vunpack.c.l.b16 %v1042
      %v1119 = vunpack.c.h.b16 %v1042
      %v1120 = vunpack.c.l.b16 %v1043
      %v1121 = vunpack.c.h.b16 %v1043
      %v1122 = vunpack.c.l.b16 %v1044
      %v1123 = vunpack.c.h.b16 %v1044
      %v1124 = vunpack.c.l.b16 %v1045
      %v1125 = vunpack.c.h.b16 %v1045
      %v1126 = vunpack.c.l.b16 %v1046
      %v1127 = vunpack.c.h.b16 %v1046
      %v1128 = vunpack.c.l.b16 %v1047
      %v1129 = vunpack.c.h.b16 %v1047
      %v1130 = vunpack.c.l.b16 %v1048
      %v1131 = vunpack.c.h.b16 %v1048
      %v1132 = vunpack.c.l.b16 %v1049
      %v1133 = vunpack.c.h.b16 %v1049
      %v1134 = vunpack.c.l.b16 %v1050
      %v1135 = vunpack.c.h.b16 %v1050
      %v1136 = vunpack.c.l.b16 %v1051
      %v1137 = vunpack.c.h.b16 %v1051
      %v1138 = vunpack.c.l.b16 %v1052
      %v1139 = vunpack.c.h.b16 %v1052
      %v1140 = vunpack.c.l.b16 %v1053
      %v1141 = vunpack.c.h.b16 %v1053
      %v1142 = vunpack.c.l.b16 %v1054
      %v1143 = vunpack.c.h.b16 %v1054
      %v1144 = vunpack.c.l.b16 %v1055
      %v1145 = vunpack.c.h.b16 %v1055
      %v1146 = vunpack.c.l.b16 %v1056
      %v1147 = vunpack.c.h.b16 %v1056
      %v1148 = vunpack.c.l.b16 %v1057
      %v1149 = vunpack.c.h.b16 %v1057
      %v1150 = vunpack.c.l.b16 %v1058
      %v1151 = vunpack.c.h.b16 %v1058
      %v1152 = vunpack.c.l.b16 %v1059
      %v1153 = vunpack.c.h.b16 %v1059
      %v1154 = vunpack.c.l.b16 %v1060
      %v1155 = vunpack.c.h.b16 %v1060
      %v1156 = vunpack.c.l.b16 %v1061
      %v1157 = vunpack.c.h.b16 %v1061
      %v1158 = vpack.c.b16 %v1094, %v1094
      %v1159 = vpack.c.b16 %v1095, %v1095
      %v1160 = vpack.c.b16 %v1096, %v1096
      %v1161 = vpack.c.b16 %v1097, %v1097
      %v1162 = vpack.c.b16 %v1098, %v1098
      %v1163 = vpack.c.b16 %v1099, %v1099
      %v1164 = vpack.c.b16 %v1100, %v1100
      %v1165 = vpack.c.b16 %v1101, %v1101
      %v1166 = vpack.c.b16 %v1102, %v1102
      %v1167 = vpack.c.b16 %v1103, %v1103
      %v1168 = vpack.c.b16 %v1104, %v1104
      %v1169 = vpack.c.b16 %v1105, %v1105
      %v1170 = vpack.c.b16 %v1106, %v1106
      %v1171 = vpack.c.b16 %v1107, %v1107
      %v1172 = vpack.c.b16 %v1108, %v1108
      %v1173 = vpack.c.b16 %v1109, %v1109
      %v1174 = vpack.c.b16 %v1110, %v1110
      %v1175 = vpack.c.b16 %v1111, %v1111
      %v1176 = vpack.c.b16 %v1112, %v1112
      %v1177 = vpack.c.b16 %v1113, %v1113
      %v1178 = vpack.c.b16 %v1114, %v1114
      %v1179 = vpack.c.b16 %v1115, %v1115
      %v1180 = vpack.c.b16 %v1116, %v1116
      %v1181 = vpack.c.b16 %v1117, %v1117
      %v1182 = vpack.c.b16 %v1118, %v1118
      %v1183 = vpack.c.b16 %v1119, %v1119
      %v1184 = vpack.c.b16 %v1120, %v1120
      %v1185 = vpack.c.b16 %v1121, %v1121
      %v1186 = vpack.c.b16 %v1122, %v1122
      %v1187 = vpack.c.b16 %v1123, %v1123
      %v1188 = vpack.c.b16 %v1124, %v1124
      %v1189 = vpack.c.b16 %v1125, %v1125
      %v1190 = vpack.c.b16 %v1126, %v1126
      %v1191 = vpack.c.b16 %v1127, %v1127
      %v1192 = vpack.c.b16 %v1128, %v1128
      %v1193 = vpack.c.b16 %v1129, %v1129
      %v1194 = vpack.c.b16 %v1130, %v1130
      %v1195 = vpack.c.b16 %v1131, %v1131
      %v1196 = vpack.c.b16 %v1132, %v1132
      %v1197 = vpack.c.b16 %v1133, %v1133
      %v1198 = vpack.c.b16 %v1134, %v1134
      %v1199 = vpack.c.b16 %v1135, %v1135
      %v1200 = vpack.c.b16 %v1136, %v1136
      %v1201 = vpack.c.b16 %v1137, %v1137
      %v1202 = vpack.c.b16 %v1138, %v1138
      %v1203 = vpack.c.b16 %v1139, %v1139
      %v1204 = vpack.c.b16 %v1140, %v1140
      %v1205 = vpack.c.b16 %v1141, %v1141
      %v1206 = vpack.c.b16 %v1142, %v1142
      %v1207 = vpack.c.b16 %v1143, %v1143
      %v1208 = vpack.c.b16 %v1144, %v1144
      %v1209 = vpack.c.b16 %v1145, %v1145
      %v1210 = vpack.c.b16 %v1146, %v1146
      %v1211 = vpack.c.b16 %v1147, %v1147
      %v1212 = vpack.c.b16 %v1148, %v1148
      %v1213 = vpack.c.b16 %v1149, %v1149
      %v1214 = vpack.c.b16 %v1150, %v1150
      %v1215 = vpack.c.b16 %v1151, %v1151
      %v1216 = vpack.c.b16 %v1152, %v1152
      %v1217 = vpack.c.b16 %v1153, %v1153
      %v1218 = vpack.c.b16 %v1154, %v1154
      %v1219 = vpack.c.b16 %v1155, %v1155
      %v1220 = vpack.c.b16 %v1156, %v1156
      %v1221 = vpack.c.b16 %v1157, %v1157
      %vm1286 = vcmask 257024
      %1287 = vst.msk [vmem:[%s264] sm:$0xf] %vm1286, %v1158
      %1288 = vst.msk [vmem:[%s264 + $0x4] sm:$0xf] %vm1286, %v1159
      %1289 = vst.msk [vmem:[%s264 + $0x8] sm:$0xf] %vm1286, %v1160
      %1290 = vst.msk [vmem:[%s264 + $0xc] sm:$0xf] %vm1286, %v1161
      %1291 = vst.msk [vmem:[%s264 + $0x10] sm:$0xf] %vm1286, %v1162
      %1292 = vst.msk [vmem:[%s264 + $0x14] sm:$0xf] %vm1286, %v1163
      %1293 = vst.msk [vmem:[%s264 + $0x18] sm:$0xf] %vm1286, %v1164
      %1294 = vst.msk [vmem:[%s264 + $0x1c] sm:$0xf] %vm1286, %v1165
      %1295 = vst.msk [vmem:[%s264 + $0x20] sm:$0xf] %vm1286, %v1166
      %1296 = vst.msk [vmem:[%s264 + $0x24] sm:$0xf] %vm1286, %v1167
      %1297 = vst.msk [vmem:[%s264 + $0x28] sm:$0xf] %vm1286, %v1168
      %1298 = vst.msk [vmem:[%s264 + $0x2c] sm:$0xf] %vm1286, %v1169
      %1299 = vst.msk [vmem:[%s264 + $0x30] sm:$0xf] %vm1286, %v1170
      %1300 = vst.msk [vmem:[%s264 + $0x34] sm:$0xf] %vm1286, %v1171
      %1301 = vst.msk [vmem:[%s264 + $0x38] sm:$0xf] %vm1286, %v1172
      %1302 = vst.msk [vmem:[%s264 + $0x3c] sm:$0xf] %vm1286, %v1173
      %1303 = vst.msk [vmem:[%s264 + $0x40] sm:$0xf] %vm1286, %v1174
      %1304 = vst.msk [vmem:[%s264 + $0x44] sm:$0xf] %vm1286, %v1175
      %1305 = vst.msk [vmem:[%s264 + $0x48] sm:$0xf] %vm1286, %v1176
      %1306 = vst.msk [vmem:[%s264 + $0x4c] sm:$0xf] %vm1286, %v1177
      %1307 = vst.msk [vmem:[%s264 + $0x50] sm:$0xf] %vm1286, %v1178
      %1308 = vst.msk [vmem:[%s264 + $0x54] sm:$0xf] %vm1286, %v1179
      %1309 = vst.msk [vmem:[%s264 + $0x58] sm:$0xf] %vm1286, %v1180
      %1310 = vst.msk [vmem:[%s264 + $0x5c] sm:$0xf] %vm1286, %v1181
      %1311 = vst.msk [vmem:[%s264 + $0x60] sm:$0xf] %vm1286, %v1182
      %1312 = vst.msk [vmem:[%s264 + $0x64] sm:$0xf] %vm1286, %v1183
      %1313 = vst.msk [vmem:[%s264 + $0x68] sm:$0xf] %vm1286, %v1184
      %1314 = vst.msk [vmem:[%s264 + $0x6c] sm:$0xf] %vm1286, %v1185
      %1315 = vst.msk [vmem:[%s264 + $0x70] sm:$0xf] %vm1286, %v1186
      %1316 = vst.msk [vmem:[%s264 + $0x74] sm:$0xf] %vm1286, %v1187
      %1317 = vst.msk [vmem:[%s264 + $0x78] sm:$0xf] %vm1286, %v1188
      %1318 = vst.msk [vmem:[%s264 + $0x7c] sm:$0xf] %vm1286, %v1189
      %1319 = vst.msk [vmem:[%s264 + $0x80] sm:$0xf] %vm1286, %v1190
      %1320 = vst.msk [vmem:[%s264 + $0x84] sm:$0xf] %vm1286, %v1191
      %1321 = vst.msk [vmem:[%s264 + $0x88] sm:$0xf] %vm1286, %v1192
      %1322 = vst.msk [vmem:[%s264 + $0x8c] sm:$0xf] %vm1286, %v1193
      %1323 = vst.msk [vmem:[%s264 + $0x90] sm:$0xf] %vm1286, %v1194
      %1324 = vst.msk [vmem:[%s264 + $0x94] sm:$0xf] %vm1286, %v1195
      %1325 = vst.msk [vmem:[%s264 + $0x98] sm:$0xf] %vm1286, %v1196
      %1326 = vst.msk [vmem:[%s264 + $0x9c] sm:$0xf] %vm1286, %v1197
      %1327 = vst.msk [vmem:[%s264 + $0xa0] sm:$0xf] %vm1286, %v1198
      %1328 = vst.msk [vmem:[%s264 + $0xa4] sm:$0xf] %vm1286, %v1199
      %1329 = vst.msk [vmem:[%s264 + $0xa8] sm:$0xf] %vm1286, %v1200
      %1330 = vst.msk [vmem:[%s264 + $0xac] sm:$0xf] %vm1286, %v1201
      %1331 = vst.msk [vmem:[%s264 + $0xb0] sm:$0xf] %vm1286, %v1202
      %1332 = vst.msk [vmem:[%s264 + $0xb4] sm:$0xf] %vm1286, %v1203
      %1333 = vst.msk [vmem:[%s264 + $0xb8] sm:$0xf] %vm1286, %v1204
      %1334 = vst.msk [vmem:[%s264 + $0xbc] sm:$0xf] %vm1286, %v1205
      %1335 = vst.msk [vmem:[%s264 + $0xc0] sm:$0xf] %vm1286, %v1206
      %1336 = vst.msk [vmem:[%s264 + $0xc4] sm:$0xf] %vm1286, %v1207
      %1337 = vst.msk [vmem:[%s264 + $0xc8] sm:$0xf] %vm1286, %v1208
      %1338 = vst.msk [vmem:[%s264 + $0xcc] sm:$0xf] %vm1286, %v1209
      %1339 = vst.msk [vmem:[%s264 + $0xd0] sm:$0xf] %vm1286, %v1210
      %1340 = vst.msk [vmem:[%s264 + $0xd4] sm:$0xf] %vm1286, %v1211
      %1341 = vst.msk [vmem:[%s264 + $0xd8] sm:$0xf] %vm1286, %v1212
      %1342 = vst.msk [vmem:[%s264 + $0xdc] sm:$0xf] %vm1286, %v1213
      %1343 = vst.msk [vmem:[%s264 + $0xe0] sm:$0xf] %vm1286, %v1214
      %1344 = vst.msk [vmem:[%s264 + $0xe4] sm:$0xf] %vm1286, %v1215
      %1345 = vst.msk [vmem:[%s264 + $0xe8] sm:$0xf] %vm1286, %v1216
      %1346 = vst.msk [vmem:[%s264 + $0xec] sm:$0xf] %vm1286, %v1217
      %1347 = vst.msk [vmem:[%s264 + $0xf0] sm:$0xf] %vm1286, %v1218
      %1348 = vst.msk [vmem:[%s264 + $0xf4] sm:$0xf] %vm1286, %v1219
      %1349 = vst.msk [vmem:[%s264 + $0xf8] sm:$0xf] %vm1286, %v1220
      %1350 = vst.msk [vmem:[%s264 + $0xfc] sm:$0xf] %vm1286, %v1221
      %vm1351 = vcmask 261120
      %v1352 = vsel %vm1351, %v776, 0.0
      %v1353 = vsel %vm1351, %v779, 0.0
      %v1354 = vadd.f32 %v1352, %v1353
      %v1355 = vsel %vm1351, %v784, 0.0
      %v1356 = vadd.f32 %v1354, %v1355
      %v1357 = vsel %vm1351, %v787, 0.0
      %v1358 = vadd.f32 %v1356, %v1357
      %v1359 = vsel %vm1351, %v792, 0.0
      %v1360 = vadd.f32 %v1358, %v1359
      %v1361 = vsel %vm1351, %v795, 0.0
      %v1362 = vadd.f32 %v1360, %v1361
      %v1363 = vsel %vm1351, %v800, 0.0
      %v1364 = vadd.f32 %v1362, %v1363
      %v1365 = vsel %vm1351, %v803, 0.0
      %v1366 = vadd.f32 %v1364, %v1365
      %v1367 = vsel %vm1351, %v808, 0.0
      %v1368 = vadd.f32 %v1366, %v1367
      %v1369 = vsel %vm1351, %v811, 0.0
      %v1370 = vadd.f32 %v1368, %v1369
      %v1371 = vsel %vm1351, %v816, 0.0
      %v1372 = vadd.f32 %v1370, %v1371
      %v1373 = vsel %vm1351, %v819, 0.0
      %v1374 = vadd.f32 %v1372, %v1373
      %v1375 = vsel %vm1351, %v824, 0.0
      %v1376 = vadd.f32 %v1374, %v1375
      %v1377 = vsel %vm1351, %v827, 0.0
      %v1378 = vadd.f32 %v1376, %v1377
      %v1379 = vsel %vm1351, %v832, 0.0
      %v1380 = vadd.f32 %v1378, %v1379
      %v1381 = vsel %vm1351, %v835, 0.0
      %v1382 = vadd.f32 %v1380, %v1381
      %v1383 = vsel %vm1351, %v840, 0.0
      %v1384 = vadd.f32 %v1382, %v1383
      %v1385 = vsel %vm1351, %v843, 0.0
      %v1386 = vadd.f32 %v1384, %v1385
      %v1387 = vsel %vm1351, %v848, 0.0
      %v1388 = vadd.f32 %v1386, %v1387
      %v1389 = vsel %vm1351, %v851, 0.0
      %v1390 = vadd.f32 %v1388, %v1389
      %v1391 = vsel %vm1351, %v856, 0.0
      %v1392 = vadd.f32 %v1390, %v1391
      %v1393 = vsel %vm1351, %v859, 0.0
      %v1394 = vadd.f32 %v1392, %v1393
      %v1395 = vsel %vm1351, %v864, 0.0
      %v1396 = vadd.f32 %v1394, %v1395
      %v1397 = vsel %vm1351, %v867, 0.0
      %v1398 = vadd.f32 %v1396, %v1397
      %v1399 = vsel %vm1351, %v872, 0.0
      %v1400 = vadd.f32 %v1398, %v1399
      %v1401 = vsel %vm1351, %v875, 0.0
      %v1402 = vadd.f32 %v1400, %v1401
      %v1403 = vsel %vm1351, %v880, 0.0
      %v1404 = vadd.f32 %v1402, %v1403
      %v1405 = vsel %vm1351, %v883, 0.0
      %v1406 = vadd.f32 %v1404, %v1405
      %v1407 = vsel %vm1351, %v888, 0.0
      %v1408 = vadd.f32 %v1406, %v1407
      %v1409 = vsel %vm1351, %v891, 0.0
      %v1410 = vadd.f32 %v1408, %v1409
      %v1411 = vsel %vm1351, %v896, 0.0
      %v1412 = vadd.f32 %v1410, %v1411
      %v1413 = vsel %vm1351, %v899, 0.0
      %v1414 = vadd.f32 %v1412, %v1413
      %v1415 = vsel %vm1351, %v904, 0.0
      %v1416 = vadd.f32 %v1414, %v1415
      %v1417 = vsel %vm1351, %v907, 0.0
      %v1418 = vadd.f32 %v1416, %v1417
      %v1419 = vsel %vm1351, %v912, 0.0
      %v1420 = vadd.f32 %v1418, %v1419
      %v1421 = vsel %vm1351, %v915, 0.0
      %v1422 = vadd.f32 %v1420, %v1421
      %v1423 = vsel %vm1351, %v920, 0.0
      %v1424 = vadd.f32 %v1422, %v1423
      %v1425 = vsel %vm1351, %v923, 0.0
      %v1426 = vadd.f32 %v1424, %v1425
      %v1427 = vsel %vm1351, %v928, 0.0
      %v1428 = vadd.f32 %v1426, %v1427
      %v1429 = vsel %vm1351, %v931, 0.0
      %v1430 = vadd.f32 %v1428, %v1429
      %v1431 = vsel %vm1351, %v936, 0.0
      %v1432 = vadd.f32 %v1430, %v1431
      %v1433 = vsel %vm1351, %v939, 0.0
      %v1434 = vadd.f32 %v1432, %v1433
      %v1435 = vsel %vm1351, %v944, 0.0
      %v1436 = vadd.f32 %v1434, %v1435
      %v1437 = vsel %vm1351, %v947, 0.0
      %v1438 = vadd.f32 %v1436, %v1437
      %v1439 = vsel %vm1351, %v952, 0.0
      %v1440 = vadd.f32 %v1438, %v1439
      %v1441 = vsel %vm1351, %v955, 0.0
      %v1442 = vadd.f32 %v1440, %v1441
      %v1443 = vsel %vm1351, %v960, 0.0
      %v1444 = vadd.f32 %v1442, %v1443
      %v1445 = vsel %vm1351, %v963, 0.0
      %v1446 = vadd.f32 %v1444, %v1445
      %v1447 = vsel %vm1351, %v968, 0.0
      %v1448 = vadd.f32 %v1446, %v1447
      %v1449 = vsel %vm1351, %v971, 0.0
      %v1450 = vadd.f32 %v1448, %v1449
      %v1451 = vsel %vm1351, %v976, 0.0
      %v1452 = vadd.f32 %v1450, %v1451
      %v1453 = vsel %vm1351, %v979, 0.0
      %v1454 = vadd.f32 %v1452, %v1453
      %v1455 = vsel %vm1351, %v984, 0.0
      %v1456 = vadd.f32 %v1454, %v1455
      %v1457 = vsel %vm1351, %v987, 0.0
      %v1458 = vadd.f32 %v1456, %v1457
      %v1459 = vsel %vm1351, %v992, 0.0
      %v1460 = vadd.f32 %v1458, %v1459
      %v1461 = vsel %vm1351, %v995, 0.0
      %v1462 = vadd.f32 %v1460, %v1461
      %v1463 = vsel %vm1351, %v1000, 0.0
      %v1464 = vadd.f32 %v1462, %v1463
      %v1465 = vsel %vm1351, %v1003, 0.0
      %v1466 = vadd.f32 %v1464, %v1465
      %v1467 = vsel %vm1351, %v1008, 0.0
      %v1468 = vadd.f32 %v1466, %v1467
      %v1469 = vsel %vm1351, %v1011, 0.0
      %v1470 = vadd.f32 %v1468, %v1469
      %v1471 = vsel %vm1351, %v1016, 0.0
      %v1472 = vadd.f32 %v1470, %v1471
      %v1473 = vsel %vm1351, %v1019, 0.0
      %v1474 = vadd.f32 %v1472, %v1473
      %v1475 = vsel %vm1351, %v1024, 0.0
      %v1476 = vadd.f32 %v1474, %v1475
      %v1477 = vsel %vm1351, %v1027, 0.0
      %v1478 = vadd.f32 %v1476, %v1477
      %v1479 = vrot.slane %v1478, 4
      %v1480 = vadd.f32 %v1478, %v1479
      %v1481 = vrot.slane %v1480, 2
      %v1482 = vadd.f32 %v1480, %v1481
      %v1483 = vrot.slane %v1482, 1
      %v1484 = vadd.f32 %v1482, %v1483
      %vm1485 = vcmask 253952
      %1486 = vst.msk [vmem:[%s268] sm:$0x1] %vm1485, %v1484
      %v1487 = vmul.f32 %v776, %v776
      %v1488 = vmul.f32 %v779, %v779
      %v1489 = vmul.f32 %v784, %v784
      %v1490 = vmul.f32 %v787, %v787
      %v1491 = vmul.f32 %v792, %v792
      %v1492 = vmul.f32 %v795, %v795
      %v1493 = vmul.f32 %v800, %v800
      %v1494 = vmul.f32 %v803, %v803
      %v1495 = vmul.f32 %v808, %v808
      %v1496 = vmul.f32 %v811, %v811
      %v1497 = vmul.f32 %v816, %v816
      %v1498 = vmul.f32 %v819, %v819
      %v1499 = vmul.f32 %v824, %v824
      %v1500 = vmul.f32 %v827, %v827
      %v1501 = vmul.f32 %v832, %v832
      %v1502 = vmul.f32 %v835, %v835
      %v1503 = vmul.f32 %v840, %v840
      %v1504 = vmul.f32 %v843, %v843
      %v1505 = vmul.f32 %v848, %v848
      %v1506 = vmul.f32 %v851, %v851
      %v1507 = vmul.f32 %v856, %v856
      %v1508 = vmul.f32 %v859, %v859
      %v1509 = vmul.f32 %v864, %v864
      %v1510 = vmul.f32 %v867, %v867
      %v1511 = vmul.f32 %v872, %v872
      %v1512 = vmul.f32 %v875, %v875
      %v1513 = vmul.f32 %v880, %v880
      %v1514 = vmul.f32 %v883, %v883
      %v1515 = vmul.f32 %v888, %v888
      %v1516 = vmul.f32 %v891, %v891
      %v1517 = vmul.f32 %v896, %v896
      %v1518 = vmul.f32 %v899, %v899
      %v1519 = vmul.f32 %v904, %v904
      %v1520 = vmul.f32 %v907, %v907
      %v1521 = vmul.f32 %v912, %v912
      %v1522 = vmul.f32 %v915, %v915
      %v1523 = vmul.f32 %v920, %v920
      %v1524 = vmul.f32 %v923, %v923
      %v1525 = vmul.f32 %v928, %v928
      %v1526 = vmul.f32 %v931, %v931
      %v1527 = vmul.f32 %v936, %v936
      %v1528 = vmul.f32 %v939, %v939
      %v1529 = vmul.f32 %v944, %v944
      %v1530 = vmul.f32 %v947, %v947
      %v1531 = vmul.f32 %v952, %v952
      %v1532 = vmul.f32 %v955, %v955
      %v1533 = vmul.f32 %v960, %v960
      %v1534 = vmul.f32 %v963, %v963
      %v1535 = vmul.f32 %v968, %v968
      %v1536 = vmul.f32 %v971, %v971
      %v1537 = vmul.f32 %v976, %v976
      %v1538 = vmul.f32 %v979, %v979
      %v1539 = vmul.f32 %v984, %v984
      %v1540 = vmul.f32 %v987, %v987
      %v1541 = vmul.f32 %v992, %v992
      %v1542 = vmul.f32 %v995, %v995
      %v1543 = vmul.f32 %v1000, %v1000
      %v1544 = vmul.f32 %v1003, %v1003
      %v1545 = vmul.f32 %v1008, %v1008
      %v1546 = vmul.f32 %v1011, %v1011
      %v1547 = vmul.f32 %v1016, %v1016
      %v1548 = vmul.f32 %v1019, %v1019
      %v1549 = vmul.f32 %v1024, %v1024
      %v1550 = vmul.f32 %v1027, %v1027
      %v1551 = vsel %vm1351, %v1487, 0.0
      %v1552 = vsel %vm1351, %v1488, 0.0
      %v1553 = vadd.f32 %v1551, %v1552
      %v1554 = vsel %vm1351, %v1489, 0.0
      %v1555 = vadd.f32 %v1553, %v1554
      %v1556 = vsel %vm1351, %v1490, 0.0
      %v1557 = vadd.f32 %v1555, %v1556
      %v1558 = vsel %vm1351, %v1491, 0.0
      %v1559 = vadd.f32 %v1557, %v1558
      %v1560 = vsel %vm1351, %v1492, 0.0
      %v1561 = vadd.f32 %v1559, %v1560
      %v1562 = vsel %vm1351, %v1493, 0.0
      %v1563 = vadd.f32 %v1561, %v1562
      %v1564 = vsel %vm1351, %v1494, 0.0
      %v1565 = vadd.f32 %v1563, %v1564
      %v1566 = vsel %vm1351, %v1495, 0.0
      %v1567 = vadd.f32 %v1565, %v1566
      %v1568 = vsel %vm1351, %v1496, 0.0
      %v1569 = vadd.f32 %v1567, %v1568
      %v1570 = vsel %vm1351, %v1497, 0.0
      %v1571 = vadd.f32 %v1569, %v1570
      %v1572 = vsel %vm1351, %v1498, 0.0
      %v1573 = vadd.f32 %v1571, %v1572
      %v1574 = vsel %vm1351, %v1499, 0.0
      %v1575 = vadd.f32 %v1573, %v1574
      %v1576 = vsel %vm1351, %v1500, 0.0
      %v1577 = vadd.f32 %v1575, %v1576
      %v1578 = vsel %vm1351, %v1501, 0.0
      %v1579 = vadd.f32 %v1577, %v1578
      %v1580 = vsel %vm1351, %v1502, 0.0
      %v1581 = vadd.f32 %v1579, %v1580
      %v1582 = vsel %vm1351, %v1503, 0.0
      %v1583 = vadd.f32 %v1581, %v1582
      %v1584 = vsel %vm1351, %v1504, 0.0
      %v1585 = vadd.f32 %v1583, %v1584
      %v1586 = vsel %vm1351, %v1505, 0.0
      %v1587 = vadd.f32 %v1585, %v1586
      %v1588 = vsel %vm1351, %v1506, 0.0
      %v1589 = vadd.f32 %v1587, %v1588
      %v1590 = vsel %vm1351, %v1507, 0.0
      %v1591 = vadd.f32 %v1589, %v1590
      %v1592 = vsel %vm1351, %v1508, 0.0
      %v1593 = vadd.f32 %v1591, %v1592
      %v1594 = vsel %vm1351, %v1509, 0.0
      %v1595 = vadd.f32 %v1593, %v1594
      %v1596 = vsel %vm1351, %v1510, 0.0
      %v1597 = vadd.f32 %v1595, %v1596
      %v1598 = vsel %vm1351, %v1511, 0.0
      %v1599 = vadd.f32 %v1597, %v1598
      %v1600 = vsel %vm1351, %v1512, 0.0
      %v1601 = vadd.f32 %v1599, %v1600
      %v1602 = vsel %vm1351, %v1513, 0.0
      %v1603 = vadd.f32 %v1601, %v1602
      %v1604 = vsel %vm1351, %v1514, 0.0
      %v1605 = vadd.f32 %v1603, %v1604
      %v1606 = vsel %vm1351, %v1515, 0.0
      %v1607 = vadd.f32 %v1605, %v1606
      %v1608 = vsel %vm1351, %v1516, 0.0
      %v1609 = vadd.f32 %v1607, %v1608
      %v1610 = vsel %vm1351, %v1517, 0.0
      %v1611 = vadd.f32 %v1609, %v1610
      %v1612 = vsel %vm1351, %v1518, 0.0
      %v1613 = vadd.f32 %v1611, %v1612
      %v1614 = vsel %vm1351, %v1519, 0.0
      %v1615 = vadd.f32 %v1613, %v1614
      %v1616 = vsel %vm1351, %v1520, 0.0
      %v1617 = vadd.f32 %v1615, %v1616
      %v1618 = vsel %vm1351, %v1521, 0.0
      %v1619 = vadd.f32 %v1617, %v1618
      %v1620 = vsel %vm1351, %v1522, 0.0
      %v1621 = vadd.f32 %v1619, %v1620
      %v1622 = vsel %vm1351, %v1523, 0.0
      %v1623 = vadd.f32 %v1621, %v1622
      %v1624 = vsel %vm1351, %v1524, 0.0
      %v1625 = vadd.f32 %v1623, %v1624
      %v1626 = vsel %vm1351, %v1525, 0.0
      %v1627 = vadd.f32 %v1625, %v1626
      %v1628 = vsel %vm1351, %v1526, 0.0
      %v1629 = vadd.f32 %v1627, %v1628
      %v1630 = vsel %vm1351, %v1527, 0.0
      %v1631 = vadd.f32 %v1629, %v1630
      %v1632 = vsel %vm1351, %v1528, 0.0
      %v1633 = vadd.f32 %v1631, %v1632
      %v1634 = vsel %vm1351, %v1529, 0.0
      %v1635 = vadd.f32 %v1633, %v1634
      %v1636 = vsel %vm1351, %v1530, 0.0
      %v1637 = vadd.f32 %v1635, %v1636
      %v1638 = vsel %vm1351, %v1531, 0.0
      %v1639 = vadd.f32 %v1637, %v1638
      %v1640 = vsel %vm1351, %v1532, 0.0
      %v1641 = vadd.f32 %v1639, %v1640
      %v1642 = vsel %vm1351, %v1533, 0.0
      %v1643 = vadd.f32 %v1641, %v1642
      %v1644 = vsel %vm1351, %v1534, 0.0
      %v1645 = vadd.f32 %v1643, %v1644
      %v1646 = vsel %vm1351, %v1535, 0.0
      %v1647 = vadd.f32 %v1645, %v1646
      %v1648 = vsel %vm1351, %v1536, 0.0
      %v1649 = vadd.f32 %v1647, %v1648
      %v1650 = vsel %vm1351, %v1537, 0.0
      %v1651 = vadd.f32 %v1649, %v1650
      %v1652 = vsel %vm1351, %v1538, 0.0
      %v1653 = vadd.f32 %v1651, %v1652
      %v1654 = vsel %vm1351, %v1539, 0.0
      %v1655 = vadd.f32 %v1653, %v1654
      %v1656 = vsel %vm1351, %v1540, 0.0
      %v1657 = vadd.f32 %v1655, %v1656
      %v1658 = vsel %vm1351, %v1541, 0.0
      %v1659 = vadd.f32 %v1657, %v1658
      %v1660 = vsel %vm1351, %v1542, 0.0
      %v1661 = vadd.f32 %v1659, %v1660
      %v1662 = vsel %vm1351, %v1543, 0.0
      %v1663 = vadd.f32 %v1661, %v1662
      %v1664 = vsel %vm1351, %v1544, 0.0
      %v1665 = vadd.f32 %v1663, %v1664
      %v1666 = vsel %vm1351, %v1545, 0.0
      %v1667 = vadd.f32 %v1665, %v1666
      %v1668 = vsel %vm1351, %v1546, 0.0
      %v1669 = vadd.f32 %v1667, %v1668
      %v1670 = vsel %vm1351, %v1547, 0.0
      %v1671 = vadd.f32 %v1669, %v1670
      %v1672 = vsel %vm1351, %v1548, 0.0
      %v1673 = vadd.f32 %v1671, %v1672
      %v1674 = vsel %vm1351, %v1549, 0.0
      %v1675 = vadd.f32 %v1673, %v1674
      %v1676 = vsel %vm1351, %v1550, 0.0
      %v1677 = vadd.f32 %v1675, %v1676
      %v1678 = vrot.slane %v1677, 4
      %v1679 = vadd.f32 %v1677, %v1678
      %v1680 = vrot.slane %v1679, 2
      %v1681 = vadd.f32 %v1679, %v1680
      %v1682 = vrot.slane %v1681, 1
      %v1683 = vadd.f32 %v1681, %v1682
      %1684 = vst.msk [vmem:[%s271] sm:$0x1] %vm1485, %v1683
      %s1685 = smul.u32 64, %s18
      %p1686 = scmp.lt.s32.totalorder %s1685, 127
      %s1687 = scalar_select %p1686, %s1685, 127
      %s1688 = smul.addr %s1687, 4
      %s1689 = scalar_lea.vmem %s4, %s1688
      %p1690 = scmp.lt.s32.totalorder %s18, 1
      %s1691 = scalar_select %p1690, %s18, 1
      %s1692 = scalar_lea.vmem %s5, %s1691
      %p1693 = scmp.lt.s32.totalorder %s18, 1
      %s1694 = scalar_select %p1693, %s18, 1
      %s1695 = scalar_lea.vmem %s6, %s1694
      // Predicated region
      $region37: #{bottleneck_forward.6} parent=35 // pred_check
        %p1696 = pneg %p125
      $region38: #{bottleneck_forward.6} parent=35 // pred_check_branch
        %1698 = sbr.rel (%p1696) target = $region40
      $region39: #{bottleneck_forward.6} parent=35 // pred_region
        %s1699 = smul.u32 64, %s18
      $region40: #{bottleneck_forward.6} parent=35 // pred_fallthru
        _
      // Predicated region
      $region41: #{bottleneck_forward.6} parent=35 // pred_check
        %p1700 = pneg %p151
      $region42: #{bottleneck_forward.6} parent=35 // pred_check_branch
        %1702 = sbr.rel (%p1700) target = $region44
      $region43: #{bottleneck_forward.6} parent=35 // pred_region
        _
      $region44: #{bottleneck_forward.6} parent=35 // pred_fallthru
        _
      // Predicated region
      $region45: #{bottleneck_forward.6} parent=35 // pred_check
        %p1703 = pneg %p177
      $region46: #{bottleneck_forward.6} parent=35 // pred_check_branch
        %1705 = sbr.rel (%p1703) target = $region48
      $region47: #{bottleneck_forward.6} parent=35 // pred_region
        _
      $region48: #{bottleneck_forward.6} parent=35 // pred_fallthru
        _
    $region36: #{bottleneck_forward.6} parent=5 // pred_fallthru
      _
    %p1706 = scmp.le.s32.totalorder 2, %s13
    // Predicated region
    $region49: #{bottleneck_forward.6} parent=5 // pred_check
      %p1707 = pneg %p1706
    $region50: #{bottleneck_forward.6} parent=5 // pred_check_branch
      %1709 = sbr.rel (%p1707) target = $region52
    $region51: #{bottleneck_forward.6} parent=5 // pred_region
      %s1710 = ssub.s32 %s13, 2
      // Predicated region
      $region53: #{bottleneck_forward.6} parent=51 // pred_check
        %p1711 = pneg %p131
      $region54: #{bottleneck_forward.6} parent=51 // pred_check_branch
        %1713 = sbr.rel (%p1711) target = $region56
      $region55: #{bottleneck_forward.6} parent=51 // pred_region
        %s1714 = smul.u32 64, %s19
        %p1715 = scmp.lt.s32.totalorder %s1714, 127
        %s1716 = scalar_select %p1715, %s1714, 127
        %s1717 = smul.addr %s1716, 4
        %s1718 = scalar_lea.vmem %s4, %s1717
      $region56: #{bottleneck_forward.6} parent=51 // pred_fallthru
        _
      // Predicated region
      $region57: #{bottleneck_forward.6} parent=51 // pred_check
        %p1719 = pneg %p157
      $region58: #{bottleneck_forward.6} parent=51 // pred_check_branch
        %1721 = sbr.rel (%p1719) target = $region60
      $region59: #{bottleneck_forward.6} parent=51 // pred_region
        %p1722 = scmp.lt.s32.totalorder %s19, 1
        %s1723 = scalar_select %p1722, %s19, 1
        %s1724 = scalar_lea.vmem %s5, %s1723
      $region60: #{bottleneck_forward.6} parent=51 // pred_fallthru
        _
      // Predicated region
      $region61: #{bottleneck_forward.6} parent=51 // pred_check
        %p1725 = pneg %p183
      $region62: #{bottleneck_forward.6} parent=51 // pred_check_branch
        %1727 = sbr.rel (%p1725) target = $region64
      $region63: #{bottleneck_forward.6} parent=51 // pred_region
        %p1728 = scmp.lt.s32.totalorder %s19, 1
        %s1729 = scalar_select %p1728, %s19, 1
        %s1730 = scalar_lea.vmem %s6, %s1729
      $region64: #{bottleneck_forward.6} parent=51 // pred_fallthru
        _
    $region52: #{bottleneck_forward.6} parent=5 // pred_fallthru
      _
  $region6: #{bottleneck_forward.6} parent=0 // loop_footer
    %s17 = sadd.s32 1, %s13
  $region7: #{bottleneck_forward.6} parent=0 // loop_footer_branch
    %12 = sbr.rel target = $region3
  $region8: #{bottleneck_forward.6} parent=0 // loop_exit
    _

// kernel: bottleneck_forward.4
$region0: #{bottleneck_forward.4}
  #allocation0 [shape = 'u32[]', space=smem, size = 0x4, offset = 0x4, fixed_abs, tag = 'smem constant byte address 0x4 - core index']
  #allocation1 [shape = 'u32[144,128]{1,0:T(1,128)}', space=vmem, size = 0x12000, scoped, tag = 'internal scratch']
  %s0 = inlined_call_operand.vmem [shape: bf16[1024,32], index: 0, kind: input, shape index: {}]
  %s1 = inlined_call_operand.vmem [shape: bf16[32,8], index: 1, kind: input, shape index: {}]
  %s2 = inlined_call_operand.vmem [shape: f32[1,32], index: 2, kind: input, shape index: {}]
  %s3 = inlined_call_operand.vmem [shape: f32[1,32], index: 3, kind: input, shape index: {}]
  %s4 = inlined_call_operand.vmem [shape: bf16[1024,8], index: 4, kind: output, shape index: {0}]
  %s5 = inlined_call_operand.vmem [shape: f32[2,1,8], index: 5, kind: output, shape index: {1}]
  %s6 = inlined_call_operand.vmem [shape: f32[2,1,8], index: 6, kind: output, shape index: {2}]
  %7 = xla_tuple %s4, %s5, %s6
  %s8 = sld [smem:[#allocation0]]
  $region65: #{bottleneck_forward.4} parent=0
    _
  %s10 = ssub.s32 1, %s8
  %s11 = scalar_select 0, %s10, %s8
  loop: start=0, step=1, limit=4
  $region2: #{bottleneck_forward.4} parent=0 // loop_pre_header
    _
  $region3: #{bottleneck_forward.4} parent=0 // loop_header
    %s13 = sphi 0, %s17
    %p14 = scmp.ge.s32.totalorder %s13, 4
    %s23 = sphi 0, %s25
    %s26 = sphi 0, %s23
    %s27 = sphi 0, %s26
    %s43 = sphi 0, %s27
    %s47 = sphi 0, %s47
    %s49 = sphi 0, %s47
    %s50 = sphi 0, %s49
    %s64 = sphi 0, %s50
    %s68 = sphi 0, %s68
    %s70 = sphi 0, %s68
    %s71 = sphi 0, %s70
    %s85 = sphi 0, %s71
    %s89 = sphi 0, %s89
    %s91 = sphi 0, %s89
    %s92 = sphi 0, %s91
    %s106 = sphi 0, %s92
    %s112 = sphi 0, %s114
    %s115 = sphi 0, %s112
    %s116 = sphi 0, %s115
    %s132 = sphi 0, %s116
    %s138 = sphi 0, %s140
    %s141 = sphi 0, %s138
    %s142 = sphi 0, %s141
    %s158 = sphi 0, %s142
    %s164 = sphi 0, %s166
    %s167 = sphi 0, %s164
    %s168 = sphi 0, %s167
    %s184 = sphi 0, %s168
  $region4: #{bottleneck_forward.4} parent=0 // loop_header_branch
    %16 = sbr.rel (%p14) target = $region8
  $region5: #{bottleneck_forward.4} parent=0 // loop_body
    %s18 = ssub.s32 %s13, 1
    %s19 = ssub.s32 %s13, 2
    %s20 = sadd.s32 %s13, 1
    %s21 = ssub.s32 %s13, %s20
    %p22 = scmp.eq.s32.totalorder %s21, 0
    %s24 = sadd.s32 %s23, 1
    %s25 = scalar_select %p22, %s23, %s24
    %p28 = pneg %p22
    %p29 = scmp.eq.s32.totalorder %s13, 1
    %p30 = por %p28, %p29
    %p31 = scmp.ne.s32.totalorder %s23, %s26
    %p32 = scmp.eq.s32.totalorder %s13, 0
    %p33 = por %p31, %p32
    %p34 = scmp.ne.s32.totalorder %s23, %s26
    %p35 = scmp.eq.s32.totalorder %s18, 1
    %p36 = por %p34, %p35
    %p37 = scmp.ne.s32.totalorder %s26, %s27
    %p38 = scmp.eq.s32.totalorder %s18, 0
    %p39 = por %p37, %p38
    %p40 = scmp.ne.s32.totalorder %s26, %s27
    %p41 = scmp.eq.s32.totalorder %s19, 1
    %p42 = por %p40, %p41
    %p44 = scmp.ne.s32.totalorder %s27, %s43
    %p45 = scmp.eq.s32.totalorder %s19, 0
    %p46 = por %p44, %p45
    %s48 = sadd.s32 %s47, 1
    %p51 = scmp.eq.s32.totalorder %s13, 1
    %p52 = scmp.ne.s32.totalorder %s47, %s49
    %p53 = scmp.eq.s32.totalorder %s13, 0
    %p54 = por %p52, %p53
    %p55 = scmp.ne.s32.totalorder %s47, %s49
    %p56 = scmp.eq.s32.totalorder %s18, 1
    %p57 = por %p55, %p56
    %p58 = scmp.ne.s32.totalorder %s49, %s50
    %p59 = scmp.eq.s32.totalorder %s18, 0
    %p60 = por %p58, %p59
    %p61 = scmp.ne.s32.totalorder %s49, %s50
    %p62 = scmp.eq.s32.totalorder %s19, 1
    %p63 = por %p61, %p62
    %p65 = scmp.ne.s32.totalorder %s50, %s64
    %p66 = scmp.eq.s32.totalorder %s19, 0
    %p67 = por %p65, %p66
    %s69 = sadd.s32 %s68, 1
    %p72 = scmp.eq.s32.totalorder %s13, 1
    %p73 = scmp.ne.s32.totalorder %s68, %s70
    %p74 = scmp.eq.s32.totalorder %s13, 0
    %p75 = por %p73, %p74
    %p76 = scmp.ne.s32.totalorder %s68, %s70
    %p77 = scmp.eq.s32.totalorder %s18, 1
    %p78 = por %p76, %p77
    %p79 = scmp.ne.s32.totalorder %s70, %s71
    %p80 = scmp.eq.s32.totalorder %s18, 0
    %p81 = por %p79, %p80
    %p82 = scmp.ne.s32.totalorder %s70, %s71
    %p83 = scmp.eq.s32.totalorder %s19, 1
    %p84 = por %p82, %p83
    %p86 = scmp.ne.s32.totalorder %s71, %s85
    %p87 = scmp.eq.s32.totalorder %s19, 0
    %p88 = por %p86, %p87
    %s90 = sadd.s32 %s89, 1
    %p93 = scmp.eq.s32.totalorder %s13, 1
    %p94 = scmp.ne.s32.totalorder %s89, %s91
    %p95 = scmp.eq.s32.totalorder %s13, 0
    %p96 = por %p94, %p95
    %p97 = scmp.ne.s32.totalorder %s89, %s91
    %p98 = scmp.eq.s32.totalorder %s18, 1
    %p99 = por %p97, %p98
    %p100 = scmp.ne.s32.totalorder %s91, %s92
    %p101 = scmp.eq.s32.totalorder %s18, 0
    %p102 = por %p100, %p101
    %p103 = scmp.ne.s32.totalorder %s91, %s92
    %p104 = scmp.eq.s32.totalorder %s19, 1
    %p105 = por %p103, %p104
    %p107 = scmp.ne.s32.totalorder %s92, %s106
    %p108 = scmp.eq.s32.totalorder %s19, 0
    %p109 = por %p107, %p108
    %s110 = ssub.s32 %s13, %s20
    %p111 = scmp.eq.s32.totalorder %s110, 0
    %s113 = sadd.s32 %s112, 1
    %s114 = scalar_select %p111, %s112, %s113
    %p117 = pneg %p111
    %p118 = scmp.eq.s32.totalorder %s13, 1
    %p119 = por %p117, %p118
    %p120 = scmp.ne.s32.totalorder %s112, %s115
    %p121 = scmp.eq.s32.totalorder %s13, 0
    %p122 = por %p120, %p121
    %p123 = scmp.ne.s32.totalorder %s112, %s115
    %p124 = scmp.eq.s32.totalorder %s18, 1
    %p125 = por %p123, %p124
    %p126 = scmp.ne.s32.totalorder %s115, %s116
    %p127 = scmp.eq.s32.totalorder %s18, 0
    %p128 = por %p126, %p127
    %p129 = scmp.ne.s32.totalorder %s115, %s116
    %p130 = scmp.eq.s32.totalorder %s19, 1
    %p131 = por %p129, %p130
    %p133 = scmp.ne.s32.totalorder %s116, %s132
    %p134 = scmp.eq.s32.totalorder %s19, 0
    %p135 = por %p133, %p134
    %s136 = ssub.s32 %s13, %s20
    %p137 = scmp.eq.s32.totalorder %s136, 0
    %s139 = sadd.s32 %s138, 1
    %s140 = scalar_select %p137, %s138, %s139
    %p143 = pneg %p137
    %p144 = scmp.eq.s32.totalorder %s13, 1
    %p145 = por %p143, %p144
    %p146 = scmp.ne.s32.totalorder %s138, %s141
    %p147 = scmp.eq.s32.totalorder %s13, 0
    %p148 = por %p146, %p147
    %p149 = scmp.ne.s32.totalorder %s138, %s141
    %p150 = scmp.eq.s32.totalorder %s18, 1
    %p151 = por %p149, %p150
    %p152 = scmp.ne.s32.totalorder %s141, %s142
    %p153 = scmp.eq.s32.totalorder %s18, 0
    %p154 = por %p152, %p153
    %p155 = scmp.ne.s32.totalorder %s141, %s142
    %p156 = scmp.eq.s32.totalorder %s19, 1
    %p157 = por %p155, %p156
    %p159 = scmp.ne.s32.totalorder %s142, %s158
    %p160 = scmp.eq.s32.totalorder %s19, 0
    %p161 = por %p159, %p160
    %s162 = ssub.s32 %s13, %s20
    %p163 = scmp.eq.s32.totalorder %s162, 0
    %s165 = sadd.s32 %s164, 1
    %s166 = scalar_select %p163, %s164, %s165
    %p169 = pneg %p163
    %p170 = scmp.eq.s32.totalorder %s13, 1
    %p171 = por %p169, %p170
    %p172 = scmp.ne.s32.totalorder %s164, %s167
    %p173 = scmp.eq.s32.totalorder %s13, 0
    %p174 = por %p172, %p173
    %p175 = scmp.ne.s32.totalorder %s164, %s167
    %p176 = scmp.eq.s32.totalorder %s18, 1
    %p177 = por %p175, %p176
    %p178 = scmp.ne.s32.totalorder %s167, %s168
    %p179 = scmp.eq.s32.totalorder %s18, 0
    %p180 = por %p178, %p179
    %p181 = scmp.ne.s32.totalorder %s167, %s168
    %p182 = scmp.eq.s32.totalorder %s19, 1
    %p183 = por %p181, %p182
    %p185 = scmp.ne.s32.totalorder %s168, %s184
    %p186 = scmp.eq.s32.totalorder %s19, 0
    %p187 = por %p185, %p186
    %p188 = scmp.le.s32.totalorder 1, %s13
    %p189 = scmp.lt.s32.totalorder %s13, 3
    %p190 = pnand %p188, %p189
    %p191 = pneg %p190
    // Predicated region
    $region9: #{bottleneck_forward.4} parent=5 // pred_check
      _
    $region10: #{bottleneck_forward.4} parent=5 // pred_check_branch
      %193 = sbr.rel (%p190) target = $region12
    $region11: #{bottleneck_forward.4} parent=5 // pred_region
      %s194 = ssub.s32 %s13, 1
      // Predicated region
      $region13: #{bottleneck_forward.4} parent=11 // pred_check
        %p195 = pneg %p60
      $region14: #{bottleneck_forward.4} parent=11 // pred_check_branch
        %197 = sbr.rel (%p195) target = $region16
      $region15: #{bottleneck_forward.4} parent=11 // pred_region
        _
      $region16: #{bottleneck_forward.4} parent=11 // pred_fallthru
        _
      // Predicated region
      $region17: #{bottleneck_forward.4} parent=11 // pred_check
        %p198 = pneg %p81
      $region18: #{bottleneck_forward.4} parent=11 // pred_check_branch
        %200 = sbr.rel (%p198) target = $region20
      $region19: #{bottleneck_forward.4} parent=11 // pred_region
        _
      $region20: #{bottleneck_forward.4} parent=11 // pred_fallthru
        _
      // Predicated region
      $region21: #{bottleneck_forward.4} parent=11 // pred_check
        %p201 = pneg %p102
      $region22: #{bottleneck_forward.4} parent=11 // pred_check_branch
        %203 = sbr.rel (%p201) target = $region24
      $region23: #{bottleneck_forward.4} parent=11 // pred_region
        _
      $region24: #{bottleneck_forward.4} parent=11 // pred_fallthru
        _
    $region12: #{bottleneck_forward.4} parent=5 // pred_fallthru
      _
    %p204 = scmp.lt.s32.totalorder %s13, 2
    // Predicated region
    $region25: #{bottleneck_forward.4} parent=5 // pred_check
      %p205 = pneg %p204
    $region26: #{bottleneck_forward.4} parent=5 // pred_check_branch
      %207 = sbr.rel (%p205) target = $region28
    $region27: #{bottleneck_forward.4} parent=5 // pred_region
      // Predicated region
      $region29: #{bottleneck_forward.4} parent=27 // pred_check
        %p208 = pneg %p33
      $region30: #{bottleneck_forward.4} parent=27 // pred_check_branch
        %210 = sbr.rel (%p208) target = $region32
      $region31: #{bottleneck_forward.4} parent=27 // pred_region
        %s211 = smul.u32 64, %s13
        %p212 = scmp.lt.s32.totalorder %s211, 127
        %s213 = scalar_select %p212, %s211, 127
        %s214 = smul.addr %s213, 4
        %s215 = scalar_lea.vmem %s0, %s214
        %s216 = smul.u32 64, %s13
      $region32: #{bottleneck_forward.4} parent=27 // pred_fallthru
        _
    $region28: #{bottleneck_forward.4} parent=5 // pred_fallthru
      _
    %p217 = scmp.le.s32.totalorder 1, %s13
    %p218 = scmp.lt.s32.totalorder %s13, 3
    %p219 = pnand %p217, %p218
    %p220 = pneg %p219
    // Predicated region
    $region33: #{bottleneck_forward.4} parent=5 // pred_check
      _
    $region34: #{bottleneck_forward.4} parent=5 // pred_check_branch
      %222 = sbr.rel (%p219) target = $region36
    $region35: #{bottleneck_forward.4} parent=5 // pred_region
      %s223 = ssub.s32 %s13, 1
      %s224 = smul.u32 64, %s18
      %p225 = scmp.lt.s32.totalorder %s224, 127
      %s226 = scalar_select %p225, %s224, 127
      %s227 = smul.addr %s226, 4
      %s228 = scalar_lea.vmem %s0, %s227
      %p229 = pneg %p39
      %p230 = pneg %p36
      %p231 = pneg %p60
      %p232 = pneg %p57
      %p233 = pneg %p81
      %p234 = pneg %p78
      %p235 = pneg %p102
      %p236 = pneg %p99
      %p237 = pneg %p128
      %p238 = pneg %p125
      %s239 = smul.u32 64, %s18
      %p240 = scmp.lt.s32.totalorder %s239, 127
      %s241 = scalar_select %p240, %s239, 127
      %s242 = smul.addr %s241, 4
      %s243 = scalar_lea.vmem %s4, %s242
      %p244 = pneg %p154
      %p245 = pneg %p151
      %p246 = scmp.lt.s32.totalorder %s18, 1
      %s247 = scalar_select %p246, %s18, 1
      %s248 = scalar_lea.vmem %s5, %s247
      %p249 = pneg %p180
      %p250 = pneg %p177
      %p251 = scmp.lt.s32.totalorder %s18, 1
      %s252 = scalar_select %p251, %s18, 1
      %s253 = scalar_lea.vmem %s6, %s252
      %s254 = smul.u32 64, %s18
      %p255 = scmp.lt.s32.totalorder %s254, 127
      %s256 = scalar_select %p255, %s254, 127
      %s257 = smul.addr %s256, 4
      %s258 = scalar_lea.vmem %s0, %s257
      %s259 = smul.u32 64, %s18
      %s260 = smul.u32 64, %s18
      %p261 = scmp.lt.s32.totalorder %s260, 127
      %s262 = scalar_select %p261, %s260, 127
      %s263 = smul.addr %s262, 4
      %s264 = scalar_lea.vmem %s4, %s263
      %s265 = smul.u32 64, %s18
      %p266 = scmp.lt.s32.totalorder %s18, 1
      %s267 = scalar_select %p266, %s18, 1
      %s268 = scalar_lea.vmem %s5, %s267
      %p269 = scmp.lt.s32.totalorder %s18, 1
      %s270 = scalar_select %p269, %s18, 1
      %s271 = scalar_lea.vmem %s6, %s270
      %v273 = vld [vmem:[%s258] sm:$0xf]
      %v274 = vld [vmem:[%s258 + $0x4] sm:$0xf]
      %v275 = vld [vmem:[%s258 + $0x8] sm:$0xf]
      %v276 = vld [vmem:[%s258 + $0xc] sm:$0xf]
      %v277 = vld [vmem:[%s258 + $0x10] sm:$0xf]
      %v278 = vld [vmem:[%s258 + $0x14] sm:$0xf]
      %v279 = vld [vmem:[%s258 + $0x18] sm:$0xf]
      %v280 = vld [vmem:[%s258 + $0x1c] sm:$0xf]
      %v281 = vld [vmem:[%s258 + $0x20] sm:$0xf]
      %v282 = vld [vmem:[%s258 + $0x24] sm:$0xf]
      %v283 = vld [vmem:[%s258 + $0x28] sm:$0xf]
      %v284 = vld [vmem:[%s258 + $0x2c] sm:$0xf]
      %v285 = vld [vmem:[%s258 + $0x30] sm:$0xf]
      %v286 = vld [vmem:[%s258 + $0x34] sm:$0xf]
      %v287 = vld [vmem:[%s258 + $0x38] sm:$0xf]
      %v288 = vld [vmem:[%s258 + $0x3c] sm:$0xf]
      %v289 = vld [vmem:[%s258 + $0x40] sm:$0xf]
      %v290 = vld [vmem:[%s258 + $0x44] sm:$0xf]
      %v291 = vld [vmem:[%s258 + $0x48] sm:$0xf]
      %v292 = vld [vmem:[%s258 + $0x4c] sm:$0xf]
      %v293 = vld [vmem:[%s258 + $0x50] sm:$0xf]
      %v294 = vld [vmem:[%s258 + $0x54] sm:$0xf]
      %v295 = vld [vmem:[%s258 + $0x58] sm:$0xf]
      %v296 = vld [vmem:[%s258 + $0x5c] sm:$0xf]
      %v297 = vld [vmem:[%s258 + $0x60] sm:$0xf]
      %v298 = vld [vmem:[%s258 + $0x64] sm:$0xf]
      %v299 = vld [vmem:[%s258 + $0x68] sm:$0xf]
      %v300 = vld [vmem:[%s258 + $0x6c] sm:$0xf]
      %v301 = vld [vmem:[%s258 + $0x70] sm:$0xf]
      %v302 = vld [vmem:[%s258 + $0x74] sm:$0xf]
      %v303 = vld [vmem:[%s258 + $0x78] sm:$0xf]
      %v304 = vld [vmem:[%s258 + $0x7c] sm:$0xf]
      %v305 = vld [vmem:[%s258 + $0x80] sm:$0xf]
      %v306 = vld [vmem:[%s258 + $0x84] sm:$0xf]
      %v307 = vld [vmem:[%s258 + $0x88] sm:$0xf]
      %v308 = vld [vmem:[%s258 + $0x8c] sm:$0xf]
      %v309 = vld [vmem:[%s258 + $0x90] sm:$0xf]
      %v310 = vld [vmem:[%s258 + $0x94] sm:$0xf]
      %v311 = vld [vmem:[%s258 + $0x98] sm:$0xf]
      %v312 = vld [vmem:[%s258 + $0x9c] sm:$0xf]
      %v313 = vld [vmem:[%s258 + $0xa0] sm:$0xf]
      %v314 = vld [vmem:[%s258 + $0xa4] sm:$0xf]
      %v315 = vld [vmem:[%s258 + $0xa8] sm:$0xf]
      %v316 = vld [vmem:[%s258 + $0xac] sm:$0xf]
      %v317 = vld [vmem:[%s258 + $0xb0] sm:$0xf]
      %v318 = vld [vmem:[%s258 + $0xb4] sm:$0xf]
      %v319 = vld [vmem:[%s258 + $0xb8] sm:$0xf]
      %v320 = vld [vmem:[%s258 + $0xbc] sm:$0xf]
      %v321 = vld [vmem:[%s258 + $0xc0] sm:$0xf]
      %v322 = vld [vmem:[%s258 + $0xc4] sm:$0xf]
      %v323 = vld [vmem:[%s258 + $0xc8] sm:$0xf]
      %v324 = vld [vmem:[%s258 + $0xcc] sm:$0xf]
      %v325 = vld [vmem:[%s258 + $0xd0] sm:$0xf]
      %v326 = vld [vmem:[%s258 + $0xd4] sm:$0xf]
      %v327 = vld [vmem:[%s258 + $0xd8] sm:$0xf]
      %v328 = vld [vmem:[%s258 + $0xdc] sm:$0xf]
      %v329 = vld [vmem:[%s258 + $0xe0] sm:$0xf]
      %v330 = vld [vmem:[%s258 + $0xe4] sm:$0xf]
      %v331 = vld [vmem:[%s258 + $0xe8] sm:$0xf]
      %v332 = vld [vmem:[%s258 + $0xec] sm:$0xf]
      %v333 = vld [vmem:[%s258 + $0xf0] sm:$0xf]
      %v334 = vld [vmem:[%s258 + $0xf4] sm:$0xf]
      %v335 = vld [vmem:[%s258 + $0xf8] sm:$0xf]
      %v336 = vld [vmem:[%s258 + $0xfc] sm:$0xf]
      %v337 = vld [vmem:[%s1] sm:$0xf]
      %v338 = vld [vmem:[%s1 + $0x4] sm:$0xf]
      %v339 = vld [vmem:[%s1 + $0x8] sm:$0xf]
      %v340 = vld [vmem:[%s1 + $0xc] sm:$0xf]
      %v405 = vunpack.c.l.b16 %v273
      %v406 = vunpack.c.l.b16 %v274
      %v407 = vunpack.c.l.b16 %v275
      %v408 = vunpack.c.l.b16 %v276
      %v409 = vunpack.c.l.b16 %v277
      %v410 = vunpack.c.l.b16 %v278
      %v411 = vunpack.c.l.b16 %v279
      %v412 = vunpack.c.l.b16 %v280
      %v413 = vunpack.c.l.b16 %v281
      %v414 = vunpack.c.l.b16 %v282
      %v415 = vunpack.c.l.b16 %v283
      %v416 = vunpack.c.l.b16 %v284
      %v417 = vunpack.c.l.b16 %v285
      %v418 = vunpack.c.l.b16 %v286
      %v419 = vunpack.c.l.b16 %v287
      %v420 = vunpack.c.l.b16 %v288
      %v421 = vunpack.c.l.b16 %v289
      %v422 = vunpack.c.l.b16 %v290
      %v423 = vunpack.c.l.b16 %v291
      %v424 = vunpack.c.l.b16 %v292
      %v425 = vunpack.c.l.b16 %v293
      %v426 = vunpack.c.l.b16 %v294
      %v427 = vunpack.c.l.b16 %v295
      %v428 = vunpack.c.l.b16 %v296
      %v429 = vunpack.c.l.b16 %v297
      %v430 = vunpack.c.l.b16 %v298
      %v431 = vunpack.c.l.b16 %v299
      %v432 = vunpack.c.l.b16 %v300
      %v433 = vunpack.c.l.b16 %v301
      %v434 = vunpack.c.l.b16 %v302
      %v435 = vunpack.c.l.b16 %v303
      %v436 = vunpack.c.l.b16 %v304
      %v437 = vunpack.c.l.b16 %v305
      %v438 = vunpack.c.l.b16 %v306
      %v439 = vunpack.c.l.b16 %v307
      %v440 = vunpack.c.l.b16 %v308
      %v441 = vunpack.c.l.b16 %v309
      %v442 = vunpack.c.l.b16 %v310
      %v443 = vunpack.c.l.b16 %v311
      %v444 = vunpack.c.l.b16 %v312
      %v445 = vunpack.c.l.b16 %v313
      %v446 = vunpack.c.l.b16 %v314
      %v447 = vunpack.c.l.b16 %v315
      %v448 = vunpack.c.l.b16 %v316
      %v449 = vunpack.c.l.b16 %v317
      %v450 = vunpack.c.l.b16 %v318
      %v451 = vunpack.c.l.b16 %v319
      %v452 = vunpack.c.l.b16 %v320
      %v453 = vunpack.c.l.b16 %v321
      %v454 = vunpack.c.l.b16 %v322
      %v455 = vunpack.c.l.b16 %v323
      %v456 = vunpack.c.l.b16 %v324
      %v457 = vunpack.c.l.b16 %v325
      %v458 = vunpack.c.l.b16 %v326
      %v459 = vunpack.c.l.b16 %v327
      %v460 = vunpack.c.l.b16 %v328
      %v461 = vunpack.c.l.b16 %v329
      %v462 = vunpack.c.l.b16 %v330
      %v463 = vunpack.c.l.b16 %v331
      %v464 = vunpack.c.l.b16 %v332
      %v465 = vunpack.c.l.b16 %v333
      %v466 = vunpack.c.l.b16 %v334
      %v467 = vunpack.c.l.b16 %v335
      %v468 = vunpack.c.l.b16 %v336
      %v469 = vpack.c.b16 %v406, %v405
      %v470 = vpack.c.b16 %v408, %v407
      %v471 = vpack.c.b16 %v410, %v409
      %v472 = vpack.c.b16 %v412, %v411
      %v473 = vpack.c.b16 %v414, %v413
      %v474 = vpack.c.b16 %v416, %v415
      %v475 = vpack.c.b16 %v418, %v417
      %v476 = vpack.c.b16 %v420, %v419
      %v477 = vpack.c.b16 %v422, %v421
      %v478 = vpack.c.b16 %v424, %v423
      %v479 = vpack.c.b16 %v426, %v425
      %v480 = vpack.c.b16 %v428, %v427
      %v481 = vpack.c.b16 %v430, %v429
      %v482 = vpack.c.b16 %v432, %v431
      %v483 = vpack.c.b16 %v434, %v433
      %v484 = vpack.c.b16 %v436, %v435
      %v485 = vpack.c.b16 %v438, %v437
      %v486 = vpack.c.b16 %v440, %v439
      %v487 = vpack.c.b16 %v442, %v441
      %v488 = vpack.c.b16 %v444, %v443
      %v489 = vpack.c.b16 %v446, %v445
      %v490 = vpack.c.b16 %v448, %v447
      %v491 = vpack.c.b16 %v450, %v449
      %v492 = vpack.c.b16 %v452, %v451
      %v493 = vpack.c.b16 %v454, %v453
      %v494 = vpack.c.b16 %v456, %v455
      %v495 = vpack.c.b16 %v458, %v457
      %v496 = vpack.c.b16 %v460, %v459
      %v497 = vpack.c.b16 %v462, %v461
      %v498 = vpack.c.b16 %v464, %v463
      %v499 = vpack.c.b16 %v466, %v465
      %v500 = vpack.c.b16 %v468, %v467
      %v505 = vunpack.c.l.b16 %v337
      %v506 = vunpack.c.l.b16 %v338
      %v507 = vunpack.c.l.b16 %v339
      %v508 = vunpack.c.l.b16 %v340
      %v509 = vpack.c.b16 %v506, %v505
      %v510 = vpack.c.b16 %v508, %v507
      %vm513 = vcmask 261120
      %v515 = vsel %vm513, %v469, 0
      %v518 = vsel %vm513, %v470, 0
      %v521 = vsel %vm513, %v471, 0
      %v524 = vsel %vm513, %v472, 0
      %v527 = vsel %vm513, %v473, 0
      %v530 = vsel %vm513, %v474, 0
      %v533 = vsel %vm513, %v475, 0
      %v536 = vsel %vm513, %v476, 0
      %v539 = vsel %vm513, %v477, 0
      %v542 = vsel %vm513, %v478, 0
      %v545 = vsel %vm513, %v479, 0
      %v548 = vsel %vm513, %v480, 0
      %v551 = vsel %vm513, %v481, 0
      %v554 = vsel %vm513, %v482, 0
      %v557 = vsel %vm513, %v483, 0
      %v560 = vsel %vm513, %v484, 0
      %v563 = vsel %vm513, %v485, 0
      %v566 = vsel %vm513, %v486, 0
      %v569 = vsel %vm513, %v487, 0
      %v572 = vsel %vm513, %v488, 0
      %v575 = vsel %vm513, %v489, 0
      %v578 = vsel %vm513, %v490, 0
      %v581 = vsel %vm513, %v491, 0
      %v584 = vsel %vm513, %v492, 0
      %v587 = vsel %vm513, %v493, 0
      %v590 = vsel %vm513, %v494, 0
      %v593 = vsel %vm513, %v495, 0
      %v596 = vsel %vm513, %v496, 0
      %v599 = vsel %vm513, %v497, 0
      %v602 = vsel %vm513, %v498, 0
      %v605 = vsel %vm513, %v499, 0
      %v608 = vsel %vm513, %v500, 0
      %610 = vmatprep.subr.bf16.mxu0 0
      %611 = vmatpush1.bf16.msra.mxu0 %v509
      %612 = vmatprep.subr.bf16.mxu0 0
      %613 = vmatpush1.bf16.msra.mxu0 %v510
      %614 = vmatprep.subr.bf16.mxu0 0
      %615 = vmatpush1.bf16.msra.mxu0 0
      %616 = vmatprep.subr.bf16.mxu0 0
      %617 = vmatpush1.bf16.msra.mxu0 0
      %618 = vmatprep.subr.bf16.mxu0 0
      %619 = vmatpush1.bf16.msra.mxu0 0
      %620 = vmatprep.subr.bf16.mxu0 0
      %621 = vmatpush1.bf16.msra.mxu0 0
      %622 = vmatprep.subr.bf16.mxu0 0
      %623 = vmatpush1.bf16.msra.mxu0 0
      %624 = vmatprep.subr.bf16.mxu0 0
      %625 = vmatpush1.bf16.msra.mxu0 0
      %626 = vmatprep.subr.bf16.mxu0 0
      %627 = vmatpush1.bf16.msra.mxu0 0
      %628 = vmatprep.subr.bf16.mxu0 0
      %629 = vmatpush1.bf16.msra.mxu0 0
      %630 = vmatprep.subr.bf16.mxu0 0
      %631 = vmatpush1.bf16.msra.mxu0 0
      %632 = vmatprep.subr.bf16.mxu0 0
      %633 = vmatpush1.bf16.msra.mxu0 0
      %634 = vmatprep.subr.bf16.mxu0 0
      %635 = vmatpush1.bf16.msra.mxu0 0
      %636 = vmatprep.subr.bf16.mxu0 0
      %637 = vmatpush1.bf16.msra.mxu0 0
      %638 = vmatprep.subr.bf16.mxu0 0
      %639 = vmatpush1.bf16.msra.mxu0 0
      %640 = vmatprep.subr.bf16.mxu0 0
      %641 = vmatpush1.bf16.msra.mxu0 0
      %642 = vmatprep.mubr.bf16.mxu0 0
      %643 = vmatmul.mubr.bf16.gmra.mrb[0].mxu0 %v515
      %v644 = vpop.f32.mrb[0].mxu0
      %v645 = vadd.f32 0.0, %v644
      %v646 = vpop.f32.mrb[0].mxu0
      %v647 = vpop.f32.mrb[0].mxu0
      %v648 = vadd.f32 0.0, %v647
      %v649 = vpop.f32.mrb[0].mxu0
      %650 = vmatprep.mubr.bf16.mxu0 0
      %651 = vmatmul.mubr.bf16.gmra.mrb[0].mxu0 %v518
      %v652 = vpop.f32.mrb[0].mxu0
      %v653 = vadd.f32 0.0, %v652
      %v654 = vpop.f32.mrb[0].mxu0
      %v655 = vpop.f32.mrb[0].mxu0
      %v656 = vadd.f32 0.0, %v655
      %v657 = vpop.f32.mrb[0].mxu0
      %658 = vmatprep.mubr.bf16.mxu0 0
      %659 = vmatmul.mubr.bf16.gmra.mrb[0].mxu0 %v521
      %v660 = vpop.f32.mrb[0].mxu0
      %v661 = vadd.f32 0.0, %v660
      %v662 = vpop.f32.mrb[0].mxu0
      %v663 = vpop.f32.mrb[0].mxu0
      %v664 = vadd.f32 0.0, %v663
      %v665 = vpop.f32.mrb[0].mxu0
      %666 = vmatprep.mubr.bf16.mxu0 0
      %667 = vmatmul.mubr.bf16.gmra.mrb[0].mxu0 %v524
      %v668 = vpop.f32.mrb[0].mxu0
      %v669 = vadd.f32 0.0, %v668
      %v670 = vpop.f32.mrb[0].mxu0
      %v671 = vpop.f32.mrb[0].mxu0
      %v672 = vadd.f32 0.0, %v671
      %v673 = vpop.f32.mrb[0].mxu0
      %674 = vmatprep.mubr.bf16.mxu0 0
      %675 = vmatmul.mubr.bf16.gmra.mrb[0].mxu0 %v527
      %v676 = vpop.f32.mrb[0].mxu0
      %v677 = vadd.f32 0.0, %v676
      %v678 = vpop.f32.mrb[0].mxu0
      %v679 = vpop.f32.mrb[0].mxu0
      %v680 = vadd.f32 0.0, %v679
      %v681 = vpop.f32.mrb[0].mxu0
      %682 = vmatprep.mubr.bf16.mxu0 0
      %683 = vmatmul.mubr.bf16.gmra.mrb[0].mxu0 %v530
      %v684 = vpop.f32.mrb[0].mxu0
      %v685 = vadd.f32 0.0, %v684
      %v686 = vpop.f32.mrb[0].mxu0
      %v687 = vpop.f32.mrb[0].mxu0
      %v688 = vadd.f32 0.0, %v687
      %v689 = vpop.f32.mrb[0].mxu0
      %690 = vmatprep.mubr.bf16.mxu0 0
      %691 = vmatmul.mubr.bf16.gmra.mrb[0].mxu0 %v533
      %v692 = vpop.f32.mrb[0].mxu0
      %v693 = vadd.f32 0.0, %v692
      %v694 = vpop.f32.mrb[0].mxu0
      %v695 = vpop.f32.mrb[0].mxu0
      %v696 = vadd.f32 0.0, %v695
      %v697 = vpop.f32.mrb[0].mxu0
      %698 = vmatprep.mubr.bf16.mxu0 0
      %699 = vmatmul.mubr.bf16.gmra.mrb[0].mxu0 %v536
      %v700 = vpop.f32.mrb[0].mxu0
      %v701 = vadd.f32 0.0, %v700
      %v702 = vpop.f32.mrb[0].mxu0
      %v703 = vpop.f32.mrb[0].mxu0
      %v704 = vadd.f32 0.0, %v703
      %v705 = vpop.f32.mrb[0].mxu0
      %706 = vmatprep.mubr.bf16.mxu0 0
      %707 = vmatmul.mubr.bf16.gmra.mrb[0].mxu0 %v539
      %v708 = vpop.f32.mrb[0].mxu0
      %v709 = vadd.f32 0.0, %v708
      %v710 = vpop.f32.mrb[0].mxu0
      %v711 = vpop.f32.mrb[0].mxu0
      %v712 = vadd.f32 0.0, %v711
      %v713 = vpop.f32.mrb[0].mxu0
      %714 = vmatprep.mubr.bf16.mxu0 0
      %715 = vmatmul.mubr.bf16.gmra.mrb[0].mxu0 %v542
      %v716 = vpop.f32.mrb[0].mxu0
      %v717 = vadd.f32 0.0, %v716
      %v718 = vpop.f32.mrb[0].mxu0
      %v719 = vpop.f32.mrb[0].mxu0
      %v720 = vadd.f32 0.0, %v719
      %v721 = vpop.f32.mrb[0].mxu0
      %722 = vmatprep.mubr.bf16.mxu0 0
      %723 = vmatmul.mubr.bf16.gmra.mrb[0].mxu0 %v545
      %v724 = vpop.f32.mrb[0].mxu0
      %v725 = vadd.f32 0.0, %v724
      %v726 = vpop.f32.mrb[0].mxu0
      %v727 = vpop.f32.mrb[0].mxu0
      %v728 = vadd.f32 0.0, %v727
      %v729 = vpop.f32.mrb[0].mxu0
      %730 = vmatprep.mubr.bf16.mxu0 0
      %731 = vmatmul.mubr.bf16.gmra.mrb[0].mxu0 %v548
      %v732 = vpop.f32.mrb[0].mxu0
      %v733 = vadd.f32 0.0, %v732
      %v734 = vpop.f32.mrb[0].mxu0
      %v735 = vpop.f32.mrb[0].mxu0
      %v736 = vadd.f32 0.0, %v735
      %v737 = vpop.f32.mrb[0].mxu0
      %738 = vmatprep.mubr.bf16.mxu0 0
      %739 = vmatmul.mubr.bf16.gmra.mrb[0].mxu0 %v551
      %v740 = vpop.f32.mrb[0].mxu0
      %v741 = vadd.f32 0.0, %v740
      %v742 = vpop.f32.mrb[0].mxu0
      %v743 = vpop.f32.mrb[0].mxu0
      %v744 = vadd.f32 0.0, %v743
      %v745 = vpop.f32.mrb[0].mxu0
      %746 = vmatprep.mubr.bf16.mxu0 0
      %747 = vmatmul.mubr.bf16.gmra.mrb[0].mxu0 %v554
      %v748 = vpop.f32.mrb[0].mxu0
      %v749 = vadd.f32 0.0, %v748
      %v750 = vpop.f32.mrb[0].mxu0
      %v751 = vpop.f32.mrb[0].mxu0
      %v752 = vadd.f32 0.0, %v751
      %v753 = vpop.f32.mrb[0].mxu0
      %754 = vmatprep.mubr.bf16.mxu0 0
      %755 = vmatmul.mubr.bf16.gmra.mrb[0].mxu0 %v557
      %v756 = vpop.f32.mrb[0].mxu0
      %v757 = vadd.f32 0.0, %v756
      %v758 = vpop.f32.mrb[0].mxu0
      %v759 = vpop.f32.mrb[0].mxu0
      %v760 = vadd.f32 0.0, %v759
      %v761 = vpop.f32.mrb[0].mxu0
      %762 = vmatprep.mubr.bf16.mxu0 0
      %763 = vmatmul.mubr.bf16.gmra.mrb[0].mxu0 %v560
      %v764 = vpop.f32.mrb[0].mxu0
      %v765 = vadd.f32 0.0, %v764
      %v766 = vpop.f32.mrb[0].mxu0
      %v767 = vpop.f32.mrb[0].mxu0
      %v768 = vadd.f32 0.0, %v767
      %v769 = vpop.f32.mrb[0].mxu0
      %770 = vmatprep.mubr.bf16.mxu0 0
      %771 = vmatmul.mubr.bf16.gmra.mrb[0].mxu0 %v563
      %v772 = vpop.f32.mrb[0].mxu0
      %v773 = vadd.f32 0.0, %v772
      %v774 = vpop.f32.mrb[0].mxu0
      %v775 = vpop.f32.mrb[0].mxu0
      %v776 = vadd.f32 0.0, %v775
      %v777 = vpop.f32.mrb[0].mxu0
      %778 = vmatprep.mubr.bf16.mxu0 0
      %779 = vmatmul.mubr.bf16.gmra.mrb[0].mxu0 %v566
      %v780 = vpop.f32.mrb[0].mxu0
      %v781 = vadd.f32 0.0, %v780
      %v782 = vpop.f32.mrb[0].mxu0
      %v783 = vpop.f32.mrb[0].mxu0
      %v784 = vadd.f32 0.0, %v783
      %v785 = vpop.f32.mrb[0].mxu0
      %786 = vmatprep.mubr.bf16.mxu0 0
      %787 = vmatmul.mubr.bf16.gmra.mrb[0].mxu0 %v569
      %v788 = vpop.f32.mrb[0].mxu0
      %v789 = vadd.f32 0.0, %v788
      %v790 = vpop.f32.mrb[0].mxu0
      %v791 = vpop.f32.mrb[0].mxu0
      %v792 = vadd.f32 0.0, %v791
      %v793 = vpop.f32.mrb[0].mxu0
      %794 = vmatprep.mubr.bf16.mxu0 0
      %795 = vmatmul.mubr.bf16.gmra.mrb[0].mxu0 %v572
      %v796 = vpop.f32.mrb[0].mxu0
      %v797 = vadd.f32 0.0, %v796
      %v798 = vpop.f32.mrb[0].mxu0
      %v799 = vpop.f32.mrb[0].mxu0
      %v800 = vadd.f32 0.0, %v799
      %v801 = vpop.f32.mrb[0].mxu0
      %802 = vmatprep.mubr.bf16.mxu0 0
      %803 = vmatmul.mubr.bf16.gmra.mrb[0].mxu0 %v575
      %v804 = vpop.f32.mrb[0].mxu0
      %v805 = vadd.f32 0.0, %v804
      %v806 = vpop.f32.mrb[0].mxu0
      %v807 = vpop.f32.mrb[0].mxu0
      %v808 = vadd.f32 0.0, %v807
      %v809 = vpop.f32.mrb[0].mxu0
      %810 = vmatprep.mubr.bf16.mxu0 0
      %811 = vmatmul.mubr.bf16.gmra.mrb[0].mxu0 %v578
      %v812 = vpop.f32.mrb[0].mxu0
      %v813 = vadd.f32 0.0, %v812
      %v814 = vpop.f32.mrb[0].mxu0
      %v815 = vpop.f32.mrb[0].mxu0
      %v816 = vadd.f32 0.0, %v815
      %v817 = vpop.f32.mrb[0].mxu0
      %818 = vmatprep.mubr.bf16.mxu0 0
      %819 = vmatmul.mubr.bf16.gmra.mrb[0].mxu0 %v581
      %v820 = vpop.f32.mrb[0].mxu0
      %v821 = vadd.f32 0.0, %v820
      %v822 = vpop.f32.mrb[0].mxu0
      %v823 = vpop.f32.mrb[0].mxu0
      %v824 = vadd.f32 0.0, %v823
      %v825 = vpop.f32.mrb[0].mxu0
      %826 = vmatprep.mubr.bf16.mxu0 0
      %827 = vmatmul.mubr.bf16.gmra.mrb[0].mxu0 %v584
      %v828 = vpop.f32.mrb[0].mxu0
      %v829 = vadd.f32 0.0, %v828
      %v830 = vpop.f32.mrb[0].mxu0
      %v831 = vpop.f32.mrb[0].mxu0
      %v832 = vadd.f32 0.0, %v831
      %v833 = vpop.f32.mrb[0].mxu0
      %834 = vmatprep.mubr.bf16.mxu0 0
      %835 = vmatmul.mubr.bf16.gmra.mrb[0].mxu0 %v587
      %v836 = vpop.f32.mrb[0].mxu0
      %v837 = vadd.f32 0.0, %v836
      %v838 = vpop.f32.mrb[0].mxu0
      %v839 = vpop.f32.mrb[0].mxu0
      %v840 = vadd.f32 0.0, %v839
      %v841 = vpop.f32.mrb[0].mxu0
      %842 = vmatprep.mubr.bf16.mxu0 0
      %843 = vmatmul.mubr.bf16.gmra.mrb[0].mxu0 %v590
      %v844 = vpop.f32.mrb[0].mxu0
      %v845 = vadd.f32 0.0, %v844
      %v846 = vpop.f32.mrb[0].mxu0
      %v847 = vpop.f32.mrb[0].mxu0
      %v848 = vadd.f32 0.0, %v847
      %v849 = vpop.f32.mrb[0].mxu0
      %850 = vmatprep.mubr.bf16.mxu0 0
      %851 = vmatmul.mubr.bf16.gmra.mrb[0].mxu0 %v593
      %v852 = vpop.f32.mrb[0].mxu0
      %v853 = vadd.f32 0.0, %v852
      %v854 = vpop.f32.mrb[0].mxu0
      %v855 = vpop.f32.mrb[0].mxu0
      %v856 = vadd.f32 0.0, %v855
      %v857 = vpop.f32.mrb[0].mxu0
      %858 = vmatprep.mubr.bf16.mxu0 0
      %859 = vmatmul.mubr.bf16.gmra.mrb[0].mxu0 %v596
      %v860 = vpop.f32.mrb[0].mxu0
      %v861 = vadd.f32 0.0, %v860
      %v862 = vpop.f32.mrb[0].mxu0
      %v863 = vpop.f32.mrb[0].mxu0
      %v864 = vadd.f32 0.0, %v863
      %v865 = vpop.f32.mrb[0].mxu0
      %866 = vmatprep.mubr.bf16.mxu0 0
      %867 = vmatmul.mubr.bf16.gmra.mrb[0].mxu0 %v599
      %v868 = vpop.f32.mrb[0].mxu0
      %v869 = vadd.f32 0.0, %v868
      %v870 = vpop.f32.mrb[0].mxu0
      %v871 = vpop.f32.mrb[0].mxu0
      %v872 = vadd.f32 0.0, %v871
      %v873 = vpop.f32.mrb[0].mxu0
      %874 = vmatprep.mubr.bf16.mxu0 0
      %875 = vmatmul.mubr.bf16.gmra.mrb[0].mxu0 %v602
      %v876 = vpop.f32.mrb[0].mxu0
      %v877 = vadd.f32 0.0, %v876
      %v878 = vpop.f32.mrb[0].mxu0
      %v879 = vpop.f32.mrb[0].mxu0
      %v880 = vadd.f32 0.0, %v879
      %v881 = vpop.f32.mrb[0].mxu0
      %882 = vmatprep.mubr.bf16.mxu0 0
      %883 = vmatmul.mubr.bf16.gmra.mrb[0].mxu0 %v605
      %v884 = vpop.f32.mrb[0].mxu0
      %v885 = vadd.f32 0.0, %v884
      %v886 = vpop.f32.mrb[0].mxu0
      %v887 = vpop.f32.mrb[0].mxu0
      %v888 = vadd.f32 0.0, %v887
      %v889 = vpop.f32.mrb[0].mxu0
      %890 = vmatprep.mubr.bf16.mxu0 0
      %891 = vmatmul.mubr.bf16.gmra.mrb[0].mxu0 %v608
      %v892 = vpop.f32.mrb[0].mxu0
      %v893 = vadd.f32 0.0, %v892
      %v894 = vpop.f32.mrb[0].mxu0
      %v895 = vpop.f32.mrb[0].mxu0
      %v896 = vadd.f32 0.0, %v895
      %v897 = vpop.f32.mrb[0].mxu0
      %898 = vdwg.mxu0
      %v899 = vpack.c.bf16 %v648, %v645
      %v900 = vpack.c.bf16 %v656, %v653
      %v901 = vpack.c.bf16 %v664, %v661
      %v902 = vpack.c.bf16 %v672, %v669
      %v903 = vpack.c.bf16 %v680, %v677
      %v904 = vpack.c.bf16 %v688, %v685
      %v905 = vpack.c.bf16 %v696, %v693
      %v906 = vpack.c.bf16 %v704, %v701
      %v907 = vpack.c.bf16 %v712, %v709
      %v908 = vpack.c.bf16 %v720, %v717
      %v909 = vpack.c.bf16 %v728, %v725
      %v910 = vpack.c.bf16 %v736, %v733
      %v911 = vpack.c.bf16 %v744, %v741
      %v912 = vpack.c.bf16 %v752, %v749
      %v913 = vpack.c.bf16 %v760, %v757
      %v914 = vpack.c.bf16 %v768, %v765
      %v915 = vpack.c.bf16 %v776, %v773
      %v916 = vpack.c.bf16 %v784, %v781
      %v917 = vpack.c.bf16 %v792, %v789
      %v918 = vpack.c.bf16 %v800, %v797
      %v919 = vpack.c.bf16 %v808, %v805
      %v920 = vpack.c.bf16 %v816, %v813
      %v921 = vpack.c.bf16 %v824, %v821
      %v922 = vpack.c.bf16 %v832, %v829
      %v923 = vpack.c.bf16 %v840, %v837
      %v924 = vpack.c.bf16 %v848, %v845
      %v925 = vpack.c.bf16 %v856, %v853
      %v926 = vpack.c.bf16 %v864, %v861
      %v927 = vpack.c.bf16 %v872, %v869
      %v928 = vpack.c.bf16 %v880, %v877
      %v929 = vpack.c.bf16 %v888, %v885
      %v930 = vpack.c.bf16 %v896, %v893
      %v963 = vunpack.c.l.b16 %v899
      %v964 = vunpack.c.h.b16 %v899
      %v965 = vunpack.c.l.b16 %v900
      %v966 = vunpack.c.h.b16 %v900
      %v967 = vunpack.c.l.b16 %v901
      %v968 = vunpack.c.h.b16 %v901
      %v969 = vunpack.c.l.b16 %v902
      %v970 = vunpack.c.h.b16 %v902
      %v971 = vunpack.c.l.b16 %v903
      %v972 = vunpack.c.h.b16 %v903
      %v973 = vunpack.c.l.b16 %v904
      %v974 = vunpack.c.h.b16 %v904
      %v975 = vunpack.c.l.b16 %v905
      %v976 = vunpack.c.h.b16 %v905
      %v977 = vunpack.c.l.b16 %v906
      %v978 = vunpack.c.h.b16 %v906
      %v979 = vunpack.c.l.b16 %v907
      %v980 = vunpack.c.h.b16 %v907
      %v981 = vunpack.c.l.b16 %v908
      %v982 = vunpack.c.h.b16 %v908
      %v983 = vunpack.c.l.b16 %v909
      %v984 = vunpack.c.h.b16 %v909
      %v985 = vunpack.c.l.b16 %v910
      %v986 = vunpack.c.h.b16 %v910
      %v987 = vunpack.c.l.b16 %v911
      %v988 = vunpack.c.h.b16 %v911
      %v989 = vunpack.c.l.b16 %v912
      %v990 = vunpack.c.h.b16 %v912
      %v991 = vunpack.c.l.b16 %v913
      %v992 = vunpack.c.h.b16 %v913
      %v993 = vunpack.c.l.b16 %v914
      %v994 = vunpack.c.h.b16 %v914
      %v995 = vunpack.c.l.b16 %v915
      %v996 = vunpack.c.h.b16 %v915
      %v997 = vunpack.c.l.b16 %v916
      %v998 = vunpack.c.h.b16 %v916
      %v999 = vunpack.c.l.b16 %v917
      %v1000 = vunpack.c.h.b16 %v917
      %v1001 = vunpack.c.l.b16 %v918
      %v1002 = vunpack.c.h.b16 %v918
      %v1003 = vunpack.c.l.b16 %v919
      %v1004 = vunpack.c.h.b16 %v919
      %v1005 = vunpack.c.l.b16 %v920
      %v1006 = vunpack.c.h.b16 %v920
      %v1007 = vunpack.c.l.b16 %v921
      %v1008 = vunpack.c.h.b16 %v921
      %v1009 = vunpack.c.l.b16 %v922
      %v1010 = vunpack.c.h.b16 %v922
      %v1011 = vunpack.c.l.b16 %v923
      %v1012 = vunpack.c.h.b16 %v923
      %v1013 = vunpack.c.l.b16 %v924
      %v1014 = vunpack.c.h.b16 %v924
      %v1015 = vunpack.c.l.b16 %v925
      %v1016 = vunpack.c.h.b16 %v925
      %v1017 = vunpack.c.l.b16 %v926
      %v1018 = vunpack.c.h.b16 %v926
      %v1019 = vunpack.c.l.b16 %v927
      %v1020 = vunpack.c.h.b16 %v927
      %v1021 = vunpack.c.l.b16 %v928
      %v1022 = vunpack.c.h.b16 %v928
      %v1023 = vunpack.c.l.b16 %v929
      %v1024 = vunpack.c.h.b16 %v929
      %v1025 = vunpack.c.l.b16 %v930
      %v1026 = vunpack.c.h.b16 %v930
      %v1027 = vpack.c.b16 %v963, %v963
      %v1028 = vpack.c.b16 %v964, %v964
      %v1029 = vpack.c.b16 %v965, %v965
      %v1030 = vpack.c.b16 %v966, %v966
      %v1031 = vpack.c.b16 %v967, %v967
      %v1032 = vpack.c.b16 %v968, %v968
      %v1033 = vpack.c.b16 %v969, %v969
      %v1034 = vpack.c.b16 %v970, %v970
      %v1035 = vpack.c.b16 %v971, %v971
      %v1036 = vpack.c.b16 %v972, %v972
      %v1037 = vpack.c.b16 %v973, %v973
      %v1038 = vpack.c.b16 %v974, %v974
      %v1039 = vpack.c.b16 %v975, %v975
      %v1040 = vpack.c.b16 %v976, %v976
      %v1041 = vpack.c.b16 %v977, %v977
      %v1042 = vpack.c.b16 %v978, %v978
      %v1043 = vpack.c.b16 %v979, %v979
      %v1044 = vpack.c.b16 %v980, %v980
      %v1045 = vpack.c.b16 %v981, %v981
      %v1046 = vpack.c.b16 %v982, %v982
      %v1047 = vpack.c.b16 %v983, %v983
      %v1048 = vpack.c.b16 %v984, %v984
      %v1049 = vpack.c.b16 %v985, %v985
      %v1050 = vpack.c.b16 %v986, %v986
      %v1051 = vpack.c.b16 %v987, %v987
      %v1052 = vpack.c.b16 %v988, %v988
      %v1053 = vpack.c.b16 %v989, %v989
      %v1054 = vpack.c.b16 %v990, %v990
      %v1055 = vpack.c.b16 %v991, %v991
      %v1056 = vpack.c.b16 %v992, %v992
      %v1057 = vpack.c.b16 %v993, %v993
      %v1058 = vpack.c.b16 %v994, %v994
      %v1059 = vpack.c.b16 %v995, %v995
      %v1060 = vpack.c.b16 %v996, %v996
      %v1061 = vpack.c.b16 %v997, %v997
      %v1062 = vpack.c.b16 %v998, %v998
      %v1063 = vpack.c.b16 %v999, %v999
      %v1064 = vpack.c.b16 %v1000, %v1000
      %v1065 = vpack.c.b16 %v1001, %v1001
      %v1066 = vpack.c.b16 %v1002, %v1002
      %v1067 = vpack.c.b16 %v1003, %v1003
      %v1068 = vpack.c.b16 %v1004, %v1004
      %v1069 = vpack.c.b16 %v1005, %v1005
      %v1070 = vpack.c.b16 %v1006, %v1006
      %v1071 = vpack.c.b16 %v1007, %v1007
      %v1072 = vpack.c.b16 %v1008, %v1008
      %v1073 = vpack.c.b16 %v1009, %v1009
      %v1074 = vpack.c.b16 %v1010, %v1010
      %v1075 = vpack.c.b16 %v1011, %v1011
      %v1076 = vpack.c.b16 %v1012, %v1012
      %v1077 = vpack.c.b16 %v1013, %v1013
      %v1078 = vpack.c.b16 %v1014, %v1014
      %v1079 = vpack.c.b16 %v1015, %v1015
      %v1080 = vpack.c.b16 %v1016, %v1016
      %v1081 = vpack.c.b16 %v1017, %v1017
      %v1082 = vpack.c.b16 %v1018, %v1018
      %v1083 = vpack.c.b16 %v1019, %v1019
      %v1084 = vpack.c.b16 %v1020, %v1020
      %v1085 = vpack.c.b16 %v1021, %v1021
      %v1086 = vpack.c.b16 %v1022, %v1022
      %v1087 = vpack.c.b16 %v1023, %v1023
      %v1088 = vpack.c.b16 %v1024, %v1024
      %v1089 = vpack.c.b16 %v1025, %v1025
      %v1090 = vpack.c.b16 %v1026, %v1026
      %vm1155 = vcmask 60416
      %1156 = vst.msk [vmem:[%s264] sm:$0xf] %vm1155, %v1027
      %1157 = vst.msk [vmem:[%s264 + $0x4] sm:$0xf] %vm1155, %v1028
      %1158 = vst.msk [vmem:[%s264 + $0x8] sm:$0xf] %vm1155, %v1029
      %1159 = vst.msk [vmem:[%s264 + $0xc] sm:$0xf] %vm1155, %v1030
      %1160 = vst.msk [vmem:[%s264 + $0x10] sm:$0xf] %vm1155, %v1031
      %1161 = vst.msk [vmem:[%s264 + $0x14] sm:$0xf] %vm1155, %v1032
      %1162 = vst.msk [vmem:[%s264 + $0x18] sm:$0xf] %vm1155, %v1033
      %1163 = vst.msk [vmem:[%s264 + $0x1c] sm:$0xf] %vm1155, %v1034
      %1164 = vst.msk [vmem:[%s264 + $0x20] sm:$0xf] %vm1155, %v1035
      %1165 = vst.msk [vmem:[%s264 + $0x24] sm:$0xf] %vm1155, %v1036
      %1166 = vst.msk [vmem:[%s264 + $0x28] sm:$0xf] %vm1155, %v1037
      %1167 = vst.msk [vmem:[%s264 + $0x2c] sm:$0xf] %vm1155, %v1038
      %1168 = vst.msk [vmem:[%s264 + $0x30] sm:$0xf] %vm1155, %v1039
      %1169 = vst.msk [vmem:[%s264 + $0x34] sm:$0xf] %vm1155, %v1040
      %1170 = vst.msk [vmem:[%s264 + $0x38] sm:$0xf] %vm1155, %v1041
      %1171 = vst.msk [vmem:[%s264 + $0x3c] sm:$0xf] %vm1155, %v1042
      %1172 = vst.msk [vmem:[%s264 + $0x40] sm:$0xf] %vm1155, %v1043
      %1173 = vst.msk [vmem:[%s264 + $0x44] sm:$0xf] %vm1155, %v1044
      %1174 = vst.msk [vmem:[%s264 + $0x48] sm:$0xf] %vm1155, %v1045
      %1175 = vst.msk [vmem:[%s264 + $0x4c] sm:$0xf] %vm1155, %v1046
      %1176 = vst.msk [vmem:[%s264 + $0x50] sm:$0xf] %vm1155, %v1047
      %1177 = vst.msk [vmem:[%s264 + $0x54] sm:$0xf] %vm1155, %v1048
      %1178 = vst.msk [vmem:[%s264 + $0x58] sm:$0xf] %vm1155, %v1049
      %1179 = vst.msk [vmem:[%s264 + $0x5c] sm:$0xf] %vm1155, %v1050
      %1180 = vst.msk [vmem:[%s264 + $0x60] sm:$0xf] %vm1155, %v1051
      %1181 = vst.msk [vmem:[%s264 + $0x64] sm:$0xf] %vm1155, %v1052
      %1182 = vst.msk [vmem:[%s264 + $0x68] sm:$0xf] %vm1155, %v1053
      %1183 = vst.msk [vmem:[%s264 + $0x6c] sm:$0xf] %vm1155, %v1054
      %1184 = vst.msk [vmem:[%s264 + $0x70] sm:$0xf] %vm1155, %v1055
      %1185 = vst.msk [vmem:[%s264 + $0x74] sm:$0xf] %vm1155, %v1056
      %1186 = vst.msk [vmem:[%s264 + $0x78] sm:$0xf] %vm1155, %v1057
      %1187 = vst.msk [vmem:[%s264 + $0x7c] sm:$0xf] %vm1155, %v1058
      %1188 = vst.msk [vmem:[%s264 + $0x80] sm:$0xf] %vm1155, %v1059
      %1189 = vst.msk [vmem:[%s264 + $0x84] sm:$0xf] %vm1155, %v1060
      %1190 = vst.msk [vmem:[%s264 + $0x88] sm:$0xf] %vm1155, %v1061
      %1191 = vst.msk [vmem:[%s264 + $0x8c] sm:$0xf] %vm1155, %v1062
      %1192 = vst.msk [vmem:[%s264 + $0x90] sm:$0xf] %vm1155, %v1063
      %1193 = vst.msk [vmem:[%s264 + $0x94] sm:$0xf] %vm1155, %v1064
      %1194 = vst.msk [vmem:[%s264 + $0x98] sm:$0xf] %vm1155, %v1065
      %1195 = vst.msk [vmem:[%s264 + $0x9c] sm:$0xf] %vm1155, %v1066
      %1196 = vst.msk [vmem:[%s264 + $0xa0] sm:$0xf] %vm1155, %v1067
      %1197 = vst.msk [vmem:[%s264 + $0xa4] sm:$0xf] %vm1155, %v1068
      %1198 = vst.msk [vmem:[%s264 + $0xa8] sm:$0xf] %vm1155, %v1069
      %1199 = vst.msk [vmem:[%s264 + $0xac] sm:$0xf] %vm1155, %v1070
      %1200 = vst.msk [vmem:[%s264 + $0xb0] sm:$0xf] %vm1155, %v1071
      %1201 = vst.msk [vmem:[%s264 + $0xb4] sm:$0xf] %vm1155, %v1072
      %1202 = vst.msk [vmem:[%s264 + $0xb8] sm:$0xf] %vm1155, %v1073
      %1203 = vst.msk [vmem:[%s264 + $0xbc] sm:$0xf] %vm1155, %v1074
      %1204 = vst.msk [vmem:[%s264 + $0xc0] sm:$0xf] %vm1155, %v1075
      %1205 = vst.msk [vmem:[%s264 + $0xc4] sm:$0xf] %vm1155, %v1076
      %1206 = vst.msk [vmem:[%s264 + $0xc8] sm:$0xf] %vm1155, %v1077
      %1207 = vst.msk [vmem:[%s264 + $0xcc] sm:$0xf] %vm1155, %v1078
      %1208 = vst.msk [vmem:[%s264 + $0xd0] sm:$0xf] %vm1155, %v1079
      %1209 = vst.msk [vmem:[%s264 + $0xd4] sm:$0xf] %vm1155, %v1080
      %1210 = vst.msk [vmem:[%s264 + $0xd8] sm:$0xf] %vm1155, %v1081
      %1211 = vst.msk [vmem:[%s264 + $0xdc] sm:$0xf] %vm1155, %v1082
      %1212 = vst.msk [vmem:[%s264 + $0xe0] sm:$0xf] %vm1155, %v1083
      %1213 = vst.msk [vmem:[%s264 + $0xe4] sm:$0xf] %vm1155, %v1084
      %1214 = vst.msk [vmem:[%s264 + $0xe8] sm:$0xf] %vm1155, %v1085
      %1215 = vst.msk [vmem:[%s264 + $0xec] sm:$0xf] %vm1155, %v1086
      %1216 = vst.msk [vmem:[%s264 + $0xf0] sm:$0xf] %vm1155, %v1087
      %1217 = vst.msk [vmem:[%s264 + $0xf4] sm:$0xf] %vm1155, %v1088
      %1218 = vst.msk [vmem:[%s264 + $0xf8] sm:$0xf] %vm1155, %v1089
      %1219 = vst.msk [vmem:[%s264 + $0xfc] sm:$0xf] %vm1155, %v1090
      %vm1220 = vcmask 64512
      %v1221 = vsel %vm1220, %v645, 0.0
      %v1222 = vsel %vm1220, %v648, 0.0
      %v1223 = vadd.f32 %v1221, %v1222
      %v1224 = vsel %vm1220, %v653, 0.0
      %v1225 = vadd.f32 %v1223, %v1224
      %v1226 = vsel %vm1220, %v656, 0.0
      %v1227 = vadd.f32 %v1225, %v1226
      %v1228 = vsel %vm1220, %v661, 0.0
      %v1229 = vadd.f32 %v1227, %v1228
      %v1230 = vsel %vm1220, %v664, 0.0
      %v1231 = vadd.f32 %v1229, %v1230
      %v1232 = vsel %vm1220, %v669, 0.0
      %v1233 = vadd.f32 %v1231, %v1232
      %v1234 = vsel %vm1220, %v672, 0.0
      %v1235 = vadd.f32 %v1233, %v1234
      %v1236 = vsel %vm1220, %v677, 0.0
      %v1237 = vadd.f32 %v1235, %v1236
      %v1238 = vsel %vm1220, %v680, 0.0
      %v1239 = vadd.f32 %v1237, %v1238
      %v1240 = vsel %vm1220, %v685, 0.0
      %v1241 = vadd.f32 %v1239, %v1240
      %v1242 = vsel %vm1220, %v688, 0.0
      %v1243 = vadd.f32 %v1241, %v1242
      %v1244 = vsel %vm1220, %v693, 0.0
      %v1245 = vadd.f32 %v1243, %v1244
      %v1246 = vsel %vm1220, %v696, 0.0
      %v1247 = vadd.f32 %v1245, %v1246
      %v1248 = vsel %vm1220, %v701, 0.0
      %v1249 = vadd.f32 %v1247, %v1248
      %v1250 = vsel %vm1220, %v704, 0.0
      %v1251 = vadd.f32 %v1249, %v1250
      %v1252 = vsel %vm1220, %v709, 0.0
      %v1253 = vadd.f32 %v1251, %v1252
      %v1254 = vsel %vm1220, %v712, 0.0
      %v1255 = vadd.f32 %v1253, %v1254
      %v1256 = vsel %vm1220, %v717, 0.0
      %v1257 = vadd.f32 %v1255, %v1256
      %v1258 = vsel %vm1220, %v720, 0.0
      %v1259 = vadd.f32 %v1257, %v1258
      %v1260 = vsel %vm1220, %v725, 0.0
      %v1261 = vadd.f32 %v1259, %v1260
      %v1262 = vsel %vm1220, %v728, 0.0
      %v1263 = vadd.f32 %v1261, %v1262
      %v1264 = vsel %vm1220, %v733, 0.0
      %v1265 = vadd.f32 %v1263, %v1264
      %v1266 = vsel %vm1220, %v736, 0.0
      %v1267 = vadd.f32 %v1265, %v1266
      %v1268 = vsel %vm1220, %v741, 0.0
      %v1269 = vadd.f32 %v1267, %v1268
      %v1270 = vsel %vm1220, %v744, 0.0
      %v1271 = vadd.f32 %v1269, %v1270
      %v1272 = vsel %vm1220, %v749, 0.0
      %v1273 = vadd.f32 %v1271, %v1272
      %v1274 = vsel %vm1220, %v752, 0.0
      %v1275 = vadd.f32 %v1273, %v1274
      %v1276 = vsel %vm1220, %v757, 0.0
      %v1277 = vadd.f32 %v1275, %v1276
      %v1278 = vsel %vm1220, %v760, 0.0
      %v1279 = vadd.f32 %v1277, %v1278
      %v1280 = vsel %vm1220, %v765, 0.0
      %v1281 = vadd.f32 %v1279, %v1280
      %v1282 = vsel %vm1220, %v768, 0.0
      %v1283 = vadd.f32 %v1281, %v1282
      %v1284 = vsel %vm1220, %v773, 0.0
      %v1285 = vadd.f32 %v1283, %v1284
      %v1286 = vsel %vm1220, %v776, 0.0
      %v1287 = vadd.f32 %v1285, %v1286
      %v1288 = vsel %vm1220, %v781, 0.0
      %v1289 = vadd.f32 %v1287, %v1288
      %v1290 = vsel %vm1220, %v784, 0.0
      %v1291 = vadd.f32 %v1289, %v1290
      %v1292 = vsel %vm1220, %v789, 0.0
      %v1293 = vadd.f32 %v1291, %v1292
      %v1294 = vsel %vm1220, %v792, 0.0
      %v1295 = vadd.f32 %v1293, %v1294
      %v1296 = vsel %vm1220, %v797, 0.0
      %v1297 = vadd.f32 %v1295, %v1296
      %v1298 = vsel %vm1220, %v800, 0.0
      %v1299 = vadd.f32 %v1297, %v1298
      %v1300 = vsel %vm1220, %v805, 0.0
      %v1301 = vadd.f32 %v1299, %v1300
      %v1302 = vsel %vm1220, %v808, 0.0
      %v1303 = vadd.f32 %v1301, %v1302
      %v1304 = vsel %vm1220, %v813, 0.0
      %v1305 = vadd.f32 %v1303, %v1304
      %v1306 = vsel %vm1220, %v816, 0.0
      %v1307 = vadd.f32 %v1305, %v1306
      %v1308 = vsel %vm1220, %v821, 0.0
      %v1309 = vadd.f32 %v1307, %v1308
      %v1310 = vsel %vm1220, %v824, 0.0
      %v1311 = vadd.f32 %v1309, %v1310
      %v1312 = vsel %vm1220, %v829, 0.0
      %v1313 = vadd.f32 %v1311, %v1312
      %v1314 = vsel %vm1220, %v832, 0.0
      %v1315 = vadd.f32 %v1313, %v1314
      %v1316 = vsel %vm1220, %v837, 0.0
      %v1317 = vadd.f32 %v1315, %v1316
      %v1318 = vsel %vm1220, %v840, 0.0
      %v1319 = vadd.f32 %v1317, %v1318
      %v1320 = vsel %vm1220, %v845, 0.0
      %v1321 = vadd.f32 %v1319, %v1320
      %v1322 = vsel %vm1220, %v848, 0.0
      %v1323 = vadd.f32 %v1321, %v1322
      %v1324 = vsel %vm1220, %v853, 0.0
      %v1325 = vadd.f32 %v1323, %v1324
      %v1326 = vsel %vm1220, %v856, 0.0
      %v1327 = vadd.f32 %v1325, %v1326
      %v1328 = vsel %vm1220, %v861, 0.0
      %v1329 = vadd.f32 %v1327, %v1328
      %v1330 = vsel %vm1220, %v864, 0.0
      %v1331 = vadd.f32 %v1329, %v1330
      %v1332 = vsel %vm1220, %v869, 0.0
      %v1333 = vadd.f32 %v1331, %v1332
      %v1334 = vsel %vm1220, %v872, 0.0
      %v1335 = vadd.f32 %v1333, %v1334
      %v1336 = vsel %vm1220, %v877, 0.0
      %v1337 = vadd.f32 %v1335, %v1336
      %v1338 = vsel %vm1220, %v880, 0.0
      %v1339 = vadd.f32 %v1337, %v1338
      %v1340 = vsel %vm1220, %v885, 0.0
      %v1341 = vadd.f32 %v1339, %v1340
      %v1342 = vsel %vm1220, %v888, 0.0
      %v1343 = vadd.f32 %v1341, %v1342
      %v1344 = vsel %vm1220, %v893, 0.0
      %v1345 = vadd.f32 %v1343, %v1344
      %v1346 = vsel %vm1220, %v896, 0.0
      %v1347 = vadd.f32 %v1345, %v1346
      %v1348 = vrot.slane %v1347, 4
      %v1349 = vadd.f32 %v1347, %v1348
      %v1350 = vrot.slane %v1349, 2
      %v1351 = vadd.f32 %v1349, %v1350
      %v1352 = vrot.slane %v1351, 1
      %v1353 = vadd.f32 %v1351, %v1352
      %vm1354 = vcmask 57344
      %1355 = vst.msk [vmem:[%s268] sm:$0x1] %vm1354, %v1353
      %v1356 = vmul.f32 %v645, %v645
      %v1357 = vmul.f32 %v648, %v648
      %v1358 = vmul.f32 %v653, %v653
      %v1359 = vmul.f32 %v656, %v656
      %v1360 = vmul.f32 %v661, %v661
      %v1361 = vmul.f32 %v664, %v664
      %v1362 = vmul.f32 %v669, %v669
      %v1363 = vmul.f32 %v672, %v672
      %v1364 = vmul.f32 %v677, %v677
      %v1365 = vmul.f32 %v680, %v680
      %v1366 = vmul.f32 %v685, %v685
      %v1367 = vmul.f32 %v688, %v688
      %v1368 = vmul.f32 %v693, %v693
      %v1369 = vmul.f32 %v696, %v696
      %v1370 = vmul.f32 %v701, %v701
      %v1371 = vmul.f32 %v704, %v704
      %v1372 = vmul.f32 %v709, %v709
      %v1373 = vmul.f32 %v712, %v712
      %v1374 = vmul.f32 %v717, %v717
      %v1375 = vmul.f32 %v720, %v720
      %v1376 = vmul.f32 %v725, %v725
      %v1377 = vmul.f32 %v728, %v728
      %v1378 = vmul.f32 %v733, %v733
      %v1379 = vmul.f32 %v736, %v736
      %v1380 = vmul.f32 %v741, %v741
      %v1381 = vmul.f32 %v744, %v744
      %v1382 = vmul.f32 %v749, %v749
      %v1383 = vmul.f32 %v752, %v752
      %v1384 = vmul.f32 %v757, %v757
      %v1385 = vmul.f32 %v760, %v760
      %v1386 = vmul.f32 %v765, %v765
      %v1387 = vmul.f32 %v768, %v768
      %v1388 = vmul.f32 %v773, %v773
      %v1389 = vmul.f32 %v776, %v776
      %v1390 = vmul.f32 %v781, %v781
      %v1391 = vmul.f32 %v784, %v784
      %v1392 = vmul.f32 %v789, %v789
      %v1393 = vmul.f32 %v792, %v792
      %v1394 = vmul.f32 %v797, %v797
      %v1395 = vmul.f32 %v800, %v800
      %v1396 = vmul.f32 %v805, %v805
      %v1397 = vmul.f32 %v808, %v808
      %v1398 = vmul.f32 %v813, %v813
      %v1399 = vmul.f32 %v816, %v816
      %v1400 = vmul.f32 %v821, %v821
      %v1401 = vmul.f32 %v824, %v824
      %v1402 = vmul.f32 %v829, %v829
      %v1403 = vmul.f32 %v832, %v832
      %v1404 = vmul.f32 %v837, %v837
      %v1405 = vmul.f32 %v840, %v840
      %v1406 = vmul.f32 %v845, %v845
      %v1407 = vmul.f32 %v848, %v848
      %v1408 = vmul.f32 %v853, %v853
      %v1409 = vmul.f32 %v856, %v856
      %v1410 = vmul.f32 %v861, %v861
      %v1411 = vmul.f32 %v864, %v864
      %v1412 = vmul.f32 %v869, %v869
      %v1413 = vmul.f32 %v872, %v872
      %v1414 = vmul.f32 %v877, %v877
      %v1415 = vmul.f32 %v880, %v880
      %v1416 = vmul.f32 %v885, %v885
      %v1417 = vmul.f32 %v888, %v888
      %v1418 = vmul.f32 %v893, %v893
      %v1419 = vmul.f32 %v896, %v896
      %v1420 = vsel %vm1220, %v1356, 0.0
      %v1421 = vsel %vm1220, %v1357, 0.0
      %v1422 = vadd.f32 %v1420, %v1421
      %v1423 = vsel %vm1220, %v1358, 0.0
      %v1424 = vadd.f32 %v1422, %v1423
      %v1425 = vsel %vm1220, %v1359, 0.0
      %v1426 = vadd.f32 %v1424, %v1425
      %v1427 = vsel %vm1220, %v1360, 0.0
      %v1428 = vadd.f32 %v1426, %v1427
      %v1429 = vsel %vm1220, %v1361, 0.0
      %v1430 = vadd.f32 %v1428, %v1429
      %v1431 = vsel %vm1220, %v1362, 0.0
      %v1432 = vadd.f32 %v1430, %v1431
      %v1433 = vsel %vm1220, %v1363, 0.0
      %v1434 = vadd.f32 %v1432, %v1433
      %v1435 = vsel %vm1220, %v1364, 0.0
      %v1436 = vadd.f32 %v1434, %v1435
      %v1437 = vsel %vm1220, %v1365, 0.0
      %v1438 = vadd.f32 %v1436, %v1437
      %v1439 = vsel %vm1220, %v1366, 0.0
      %v1440 = vadd.f32 %v1438, %v1439
      %v1441 = vsel %vm1220, %v1367, 0.0
      %v1442 = vadd.f32 %v1440, %v1441
      %v1443 = vsel %vm1220, %v1368, 0.0
      %v1444 = vadd.f32 %v1442, %v1443
      %v1445 = vsel %vm1220, %v1369, 0.0
      %v1446 = vadd.f32 %v1444, %v1445
      %v1447 = vsel %vm1220, %v1370, 0.0
      %v1448 = vadd.f32 %v1446, %v1447
      %v1449 = vsel %vm1220, %v1371, 0.0
      %v1450 = vadd.f32 %v1448, %v1449
      %v1451 = vsel %vm1220, %v1372, 0.0
      %v1452 = vadd.f32 %v1450, %v1451
      %v1453 = vsel %vm1220, %v1373, 0.0
      %v1454 = vadd.f32 %v1452, %v1453
      %v1455 = vsel %vm1220, %v1374, 0.0
      %v1456 = vadd.f32 %v1454, %v1455
      %v1457 = vsel %vm1220, %v1375, 0.0
      %v1458 = vadd.f32 %v1456, %v1457
      %v1459 = vsel %vm1220, %v1376, 0.0
      %v1460 = vadd.f32 %v1458, %v1459
      %v1461 = vsel %vm1220, %v1377, 0.0
      %v1462 = vadd.f32 %v1460, %v1461
      %v1463 = vsel %vm1220, %v1378, 0.0
      %v1464 = vadd.f32 %v1462, %v1463
      %v1465 = vsel %vm1220, %v1379, 0.0
      %v1466 = vadd.f32 %v1464, %v1465
      %v1467 = vsel %vm1220, %v1380, 0.0
      %v1468 = vadd.f32 %v1466, %v1467
      %v1469 = vsel %vm1220, %v1381, 0.0
      %v1470 = vadd.f32 %v1468, %v1469
      %v1471 = vsel %vm1220, %v1382, 0.0
      %v1472 = vadd.f32 %v1470, %v1471
      %v1473 = vsel %vm1220, %v1383, 0.0
      %v1474 = vadd.f32 %v1472, %v1473
      %v1475 = vsel %vm1220, %v1384, 0.0
      %v1476 = vadd.f32 %v1474, %v1475
      %v1477 = vsel %vm1220, %v1385, 0.0
      %v1478 = vadd.f32 %v1476, %v1477
      %v1479 = vsel %vm1220, %v1386, 0.0
      %v1480 = vadd.f32 %v1478, %v1479
      %v1481 = vsel %vm1220, %v1387, 0.0
      %v1482 = vadd.f32 %v1480, %v1481
      %v1483 = vsel %vm1220, %v1388, 0.0
      %v1484 = vadd.f32 %v1482, %v1483
      %v1485 = vsel %vm1220, %v1389, 0.0
      %v1486 = vadd.f32 %v1484, %v1485
      %v1487 = vsel %vm1220, %v1390, 0.0
      %v1488 = vadd.f32 %v1486, %v1487
      %v1489 = vsel %vm1220, %v1391, 0.0
      %v1490 = vadd.f32 %v1488, %v1489
      %v1491 = vsel %vm1220, %v1392, 0.0
      %v1492 = vadd.f32 %v1490, %v1491
      %v1493 = vsel %vm1220, %v1393, 0.0
      %v1494 = vadd.f32 %v1492, %v1493
      %v1495 = vsel %vm1220, %v1394, 0.0
      %v1496 = vadd.f32 %v1494, %v1495
      %v1497 = vsel %vm1220, %v1395, 0.0
      %v1498 = vadd.f32 %v1496, %v1497
      %v1499 = vsel %vm1220, %v1396, 0.0
      %v1500 = vadd.f32 %v1498, %v1499
      %v1501 = vsel %vm1220, %v1397, 0.0
      %v1502 = vadd.f32 %v1500, %v1501
      %v1503 = vsel %vm1220, %v1398, 0.0
      %v1504 = vadd.f32 %v1502, %v1503
      %v1505 = vsel %vm1220, %v1399, 0.0
      %v1506 = vadd.f32 %v1504, %v1505
      %v1507 = vsel %vm1220, %v1400, 0.0
      %v1508 = vadd.f32 %v1506, %v1507
      %v1509 = vsel %vm1220, %v1401, 0.0
      %v1510 = vadd.f32 %v1508, %v1509
      %v1511 = vsel %vm1220, %v1402, 0.0
      %v1512 = vadd.f32 %v1510, %v1511
      %v1513 = vsel %vm1220, %v1403, 0.0
      %v1514 = vadd.f32 %v1512, %v1513
      %v1515 = vsel %vm1220, %v1404, 0.0
      %v1516 = vadd.f32 %v1514, %v1515
      %v1517 = vsel %vm1220, %v1405, 0.0
      %v1518 = vadd.f32 %v1516, %v1517
      %v1519 = vsel %vm1220, %v1406, 0.0
      %v1520 = vadd.f32 %v1518, %v1519
      %v1521 = vsel %vm1220, %v1407, 0.0
      %v1522 = vadd.f32 %v1520, %v1521
      %v1523 = vsel %vm1220, %v1408, 0.0
      %v1524 = vadd.f32 %v1522, %v1523
      %v1525 = vsel %vm1220, %v1409, 0.0
      %v1526 = vadd.f32 %v1524, %v1525
      %v1527 = vsel %vm1220, %v1410, 0.0
      %v1528 = vadd.f32 %v1526, %v1527
      %v1529 = vsel %vm1220, %v1411, 0.0
      %v1530 = vadd.f32 %v1528, %v1529
      %v1531 = vsel %vm1220, %v1412, 0.0
      %v1532 = vadd.f32 %v1530, %v1531
      %v1533 = vsel %vm1220, %v1413, 0.0
      %v1534 = vadd.f32 %v1532, %v1533
      %v1535 = vsel %vm1220, %v1414, 0.0
      %v1536 = vadd.f32 %v1534, %v1535
      %v1537 = vsel %vm1220, %v1415, 0.0
      %v1538 = vadd.f32 %v1536, %v1537
      %v1539 = vsel %vm1220, %v1416, 0.0
      %v1540 = vadd.f32 %v1538, %v1539
      %v1541 = vsel %vm1220, %v1417, 0.0
      %v1542 = vadd.f32 %v1540, %v1541
      %v1543 = vsel %vm1220, %v1418, 0.0
      %v1544 = vadd.f32 %v1542, %v1543
      %v1545 = vsel %vm1220, %v1419, 0.0
      %v1546 = vadd.f32 %v1544, %v1545
      %v1547 = vrot.slane %v1546, 4
      %v1548 = vadd.f32 %v1546, %v1547
      %v1549 = vrot.slane %v1548, 2
      %v1550 = vadd.f32 %v1548, %v1549
      %v1551 = vrot.slane %v1550, 1
      %v1552 = vadd.f32 %v1550, %v1551
      %1553 = vst.msk [vmem:[%s271] sm:$0x1] %vm1354, %v1552
      %s1554 = smul.u32 64, %s18
      %p1555 = scmp.lt.s32.totalorder %s1554, 127
      %s1556 = scalar_select %p1555, %s1554, 127
      %s1557 = smul.addr %s1556, 4
      %s1558 = scalar_lea.vmem %s4, %s1557
      %p1559 = scmp.lt.s32.totalorder %s18, 1
      %s1560 = scalar_select %p1559, %s18, 1
      %s1561 = scalar_lea.vmem %s5, %s1560
      %p1562 = scmp.lt.s32.totalorder %s18, 1
      %s1563 = scalar_select %p1562, %s18, 1
      %s1564 = scalar_lea.vmem %s6, %s1563
      // Predicated region
      $region37: #{bottleneck_forward.4} parent=35 // pred_check
        %p1565 = pneg %p125
      $region38: #{bottleneck_forward.4} parent=35 // pred_check_branch
        %1567 = sbr.rel (%p1565) target = $region40
      $region39: #{bottleneck_forward.4} parent=35 // pred_region
        %s1568 = smul.u32 64, %s18
      $region40: #{bottleneck_forward.4} parent=35 // pred_fallthru
        _
      // Predicated region
      $region41: #{bottleneck_forward.4} parent=35 // pred_check
        %p1569 = pneg %p151
      $region42: #{bottleneck_forward.4} parent=35 // pred_check_branch
        %1571 = sbr.rel (%p1569) target = $region44
      $region43: #{bottleneck_forward.4} parent=35 // pred_region
        _
      $region44: #{bottleneck_forward.4} parent=35 // pred_fallthru
        _
      // Predicated region
      $region45: #{bottleneck_forward.4} parent=35 // pred_check
        %p1572 = pneg %p177
      $region46: #{bottleneck_forward.4} parent=35 // pred_check_branch
        %1574 = sbr.rel (%p1572) target = $region48
      $region47: #{bottleneck_forward.4} parent=35 // pred_region
        _
      $region48: #{bottleneck_forward.4} parent=35 // pred_fallthru
        _
    $region36: #{bottleneck_forward.4} parent=5 // pred_fallthru
      _
    %p1575 = scmp.le.s32.totalorder 2, %s13
    // Predicated region
    $region49: #{bottleneck_forward.4} parent=5 // pred_check
      %p1576 = pneg %p1575
    $region50: #{bottleneck_forward.4} parent=5 // pred_check_branch
      %1578 = sbr.rel (%p1576) target = $region52
    $region51: #{bottleneck_forward.4} parent=5 // pred_region
      %s1579 = ssub.s32 %s13, 2
      // Predicated region
      $region53: #{bottleneck_forward.4} parent=51 // pred_check
        %p1580 = pneg %p131
      $region54: #{bottleneck_forward.4} parent=51 // pred_check_branch
        %1582 = sbr.rel (%p1580) target = $region56
      $region55: #{bottleneck_forward.4} parent=51 // pred_region
        %s1583 = smul.u32 64, %s19
        %p1584 = scmp.lt.s32.totalorder %s1583, 127
        %s1585 = scalar_select %p1584, %s1583, 127
        %s1586 = smul.addr %s1585, 4
        %s1587 = scalar_lea.vmem %s4, %s1586
      $region56: #{bottleneck_forward.4} parent=51 // pred_fallthru
        _
      // Predicated region
      $region57: #{bottleneck_forward.4} parent=51 // pred_check
        %p1588 = pneg %p157
      $region58: #{bottleneck_forward.4} parent=51 // pred_check_branch
        %1590 = sbr.rel (%p1588) target = $region60
      $region59: #{bottleneck_forward.4} parent=51 // pred_region
        %p1591 = scmp.lt.s32.totalorder %s19, 1
        %s1592 = scalar_select %p1591, %s19, 1
        %s1593 = scalar_lea.vmem %s5, %s1592
      $region60: #{bottleneck_forward.4} parent=51 // pred_fallthru
        _
      // Predicated region
      $region61: #{bottleneck_forward.4} parent=51 // pred_check
        %p1594 = pneg %p183
      $region62: #{bottleneck_forward.4} parent=51 // pred_check_branch
        %1596 = sbr.rel (%p1594) target = $region64
      $region63: #{bottleneck_forward.4} parent=51 // pred_region
        %p1597 = scmp.lt.s32.totalorder %s19, 1
        %s1598 = scalar_select %p1597, %s19, 1
        %s1599 = scalar_lea.vmem %s6, %s1598
      $region64: #{bottleneck_forward.4} parent=51 // pred_fallthru
        _
    $region52: #{bottleneck_forward.4} parent=5 // pred_fallthru
      _
  $region6: #{bottleneck_forward.4} parent=0 // loop_footer
    %s17 = sadd.s32 1, %s13
  $region7: #{bottleneck_forward.4} parent=0 // loop_footer_branch
    %12 = sbr.rel target = $region3
  $region8: #{bottleneck_forward.4} parent=0 // loop_exit
    _

// kernel: bottleneck_forward.5
$region0: #{bottleneck_forward.5}
  #allocation0 [shape = 'u32[]', space=smem, size = 0x4, offset = 0x4, fixed_abs, tag = 'smem constant byte address 0x4 - core index']
  #allocation1 [shape = 'u32[144,128]{1,0:T(1,128)}', space=vmem, size = 0x12000, scoped, tag = 'internal scratch']
  #allocation2 [shape = 'f32[82,8]{1,0:T(8,128)}', space=vmem, size = 0xb000, scoped, tag = 'scratch operand']
  #allocation3 [shape = 'f32[64,8]{1,0:T(8,128)}', space=vmem, size = 0x8000, scoped, tag = 'scratch operand']
  %s0 = inlined_call_operand.vmem [shape: bf16[16,64,8], index: 0, kind: input, shape index: {}]
  %s1 = inlined_call_operand.vmem [shape: f32[1,8], index: 1, kind: input, shape index: {}]
  %s2 = inlined_call_operand.vmem [shape: f32[1,8], index: 2, kind: input, shape index: {}]
  %s3 = inlined_call_operand.vmem [shape: bf16[3,9,8,8], index: 3, kind: input, shape index: {}]
  %s4 = inlined_call_operand.vmem [shape: f32[9,64,1], index: 4, kind: input, shape index: {}]
  %s5 = inlined_call_operand.vmem [shape: bf16[16,64,8], index: 5, kind: output, shape index: {0}]
  %s6 = inlined_call_operand.vmem [shape: f32[16,1,8], index: 6, kind: output, shape index: {1}]
  %s7 = inlined_call_operand.vmem [shape: f32[16,1,8], index: 7, kind: output, shape index: {2}]
  %8 = xla_tuple %s5, %s6, %s7
  %s9 = sld [smem:[#allocation0]]
  $region81: #{bottleneck_forward.5} parent=0
    _
  %s11 = ssub.s32 1, %s9
  %s12 = scalar_select 0, %s11, %s9
  loop: start=0, step=1, limit=50
  $region2: #{bottleneck_forward.5} parent=0 // loop_pre_header
    _
  $region3: #{bottleneck_forward.5} parent=0 // loop_header
    %s14 = sphi 0, %s18
    %p15 = scmp.ge.s32.totalorder %s14, 50
    %s21 = sphi 0, %s40
    %s22 = sphi 0, %s36
    %s23 = sphi 0, %s32
    %s24 = sphi 0, %s21
    %s25 = sphi 0, %s22
    %s26 = sphi 0, %s23
    %s27 = sphi 0, %s24
    %s28 = sphi 0, %s25
    %s29 = sphi 0, %s26
    %s59 = sphi 0, %s61
    %s62 = sphi 0, %s59
    %s63 = sphi 0, %s62
    %s79 = sphi 0, %s63
    %s83 = sphi 0, %s83
    %s85 = sphi 0, %s83
    %s86 = sphi 0, %s85
    %s100 = sphi 0, %s86
    %s104 = sphi 0, %s104
    %s106 = sphi 0, %s104
    %s107 = sphi 0, %s106
    %s121 = sphi 0, %s107
    %s127 = sphi 0, %s129
    %s130 = sphi 0, %s127
    %s131 = sphi 0, %s130
    %s147 = sphi 0, %s131
    %s151 = sphi 0, %s151
    %s153 = sphi 0, %s151
    %s154 = sphi 0, %s153
    %s168 = sphi 0, %s154
    %s178 = sphi 0, %s180
    %s181 = sphi 0, %s178
    %s182 = sphi 0, %s181
    %s198 = sphi 0, %s182
    %s208 = sphi 0, %s210
    %s211 = sphi 0, %s208
    %s212 = sphi 0, %s211
    %s228 = sphi 0, %s212
    %s238 = sphi 0, %s240
    %s241 = sphi 0, %s238
    %s242 = sphi 0, %s241
    %s258 = sphi 0, %s242
  $region4: #{bottleneck_forward.5} parent=0 // loop_header_branch
    %17 = sbr.rel (%p15) target = $region8
  $region5: #{bottleneck_forward.5} parent=0 // loop_body
    %s19 = ssub.s32 %s14, 1
    %s20 = ssub.s32 %s14, 2
    %s30 = sadd.s32 1, %s23
    %p31 = scmp.ge.s32.totalorder %s30, 3
    %s32 = scalar_select %p31, 0, %s30
    %s33 = sadd.s32 1, %s22
    %s34 = scalar_select %p31, %s33, %s22
    %p35 = scmp.ge.s32.totalorder %s34, 8
    %s36 = scalar_select %p35, 0, %s34
    %s37 = sadd.s32 1, %s21
    %s38 = scalar_select %p35, %s37, %s21
    %p39 = scmp.ge.s32.totalorder %s38, 2
    %s40 = scalar_select %p39, 0, %s38
    %s41 = smul.u32 %s21, 8
    %s42 = sadd.s32 %s22, %s23
    %s43 = ssub.s32 %s42, 1
    %p44 = scmp.gt.s32.totalorder %s43, 0
    %s45 = scalar_select %p44, %s43, 0
    %p46 = scmp.lt.s32.totalorder %s45, 7
    %s47 = scalar_select %p46, %s45, 7
    %s48 = sadd.s32 %s41, %s47
    %s49 = smul.u32 %s40, 8
    %s50 = sadd.s32 %s36, %s32
    %s51 = ssub.s32 %s50, 1
    %p52 = scmp.gt.s32.totalorder %s51, 0
    %s53 = scalar_select %p52, %s51, 0
    %p54 = scmp.lt.s32.totalorder %s53, 7
    %s55 = scalar_select %p54, %s53, 7
    %s56 = sadd.s32 %s49, %s55
    %s57 = ssub.s32 %s48, %s56
    %p58 = scmp.eq.s32.totalorder %s57, 0
    %s60 = sadd.s32 %s59, 1
    %s61 = scalar_select %p58, %s59, %s60
    %p64 = pneg %p58
    %p65 = scmp.eq.s32.totalorder %s14, 47
    %p66 = por %p64, %p65
    %p67 = scmp.ne.s32.totalorder %s59, %s62
    %p68 = scmp.eq.s32.totalorder %s14, 0
    %p69 = por %p67, %p68
    %p70 = scmp.ne.s32.totalorder %s59, %s62
    %p71 = scmp.eq.s32.totalorder %s19, 47
    %p72 = por %p70, %p71
    %p73 = scmp.ne.s32.totalorder %s62, %s63
    %p74 = scmp.eq.s32.totalorder %s19, 0
    %p75 = por %p73, %p74
    %p76 = scmp.ne.s32.totalorder %s62, %s63
    %p77 = scmp.eq.s32.totalorder %s20, 47
    %p78 = por %p76, %p77
    %p80 = scmp.ne.s32.totalorder %s63, %s79
    %p81 = scmp.eq.s32.totalorder %s20, 0
    %p82 = por %p80, %p81
    %s84 = sadd.s32 %s83, 1
    %p87 = scmp.eq.s32.totalorder %s14, 47
    %p88 = scmp.ne.s32.totalorder %s83, %s85
    %p89 = scmp.eq.s32.totalorder %s14, 0
    %p90 = por %p88, %p89
    %p91 = scmp.ne.s32.totalorder %s83, %s85
    %p92 = scmp.eq.s32.totalorder %s19, 47
    %p93 = por %p91, %p92
    %p94 = scmp.ne.s32.totalorder %s85, %s86
    %p95 = scmp.eq.s32.totalorder %s19, 0
    %p96 = por %p94, %p95
    %p97 = scmp.ne.s32.totalorder %s85, %s86
    %p98 = scmp.eq.s32.totalorder %s20, 47
    %p99 = por %p97, %p98
    %p101 = scmp.ne.s32.totalorder %s86, %s100
    %p102 = scmp.eq.s32.totalorder %s20, 0
    %p103 = por %p101, %p102
    %s105 = sadd.s32 %s104, 1
    %p108 = scmp.eq.s32.totalorder %s14, 47
    %p109 = scmp.ne.s32.totalorder %s104, %s106
    %p110 = scmp.eq.s32.totalorder %s14, 0
    %p111 = por %p109, %p110
    %p112 = scmp.ne.s32.totalorder %s104, %s106
    %p113 = scmp.eq.s32.totalorder %s19, 47
    %p114 = por %p112, %p113
    %p115 = scmp.ne.s32.totalorder %s106, %s107
    %p116 = scmp.eq.s32.totalorder %s19, 0
    %p117 = por %p115, %p116
    %p118 = scmp.ne.s32.totalorder %s106, %s107
    %p119 = scmp.eq.s32.totalorder %s20, 47
    %p120 = por %p118, %p119
    %p122 = scmp.ne.s32.totalorder %s107, %s121
    %p123 = scmp.eq.s32.totalorder %s20, 0
    %p124 = por %p122, %p123
    %s125 = ssub.s32 %s23, %s32
    %p126 = scmp.eq.s32.totalorder %s125, 0
    %s128 = sadd.s32 %s127, 1
    %s129 = scalar_select %p126, %s127, %s128
    %p132 = pneg %p126
    %p133 = scmp.eq.s32.totalorder %s14, 47
    %p134 = por %p132, %p133
    %p135 = scmp.ne.s32.totalorder %s127, %s130
    %p136 = scmp.eq.s32.totalorder %s14, 0
    %p137 = por %p135, %p136
    %p138 = scmp.ne.s32.totalorder %s127, %s130
    %p139 = scmp.eq.s32.totalorder %s19, 47
    %p140 = por %p138, %p139
    %p141 = scmp.ne.s32.totalorder %s130, %s131
    %p142 = scmp.eq.s32.totalorder %s19, 0
    %p143 = por %p141, %p142
    %p144 = scmp.ne.s32.totalorder %s130, %s131
    %p145 = scmp.eq.s32.totalorder %s20, 47
    %p146 = por %p144, %p145
    %p148 = scmp.ne.s32.totalorder %s131, %s147
    %p149 = scmp.eq.s32.totalorder %s20, 0
    %p150 = por %p148, %p149
    %s152 = sadd.s32 %s151, 1
    %p155 = scmp.eq.s32.totalorder %s14, 47
    %p156 = scmp.ne.s32.totalorder %s151, %s153
    %p157 = scmp.eq.s32.totalorder %s14, 0
    %p158 = por %p156, %p157
    %p159 = scmp.ne.s32.totalorder %s151, %s153
    %p160 = scmp.eq.s32.totalorder %s19, 47
    %p161 = por %p159, %p160
    %p162 = scmp.ne.s32.totalorder %s153, %s154
    %p163 = scmp.eq.s32.totalorder %s19, 0
    %p164 = por %p162, %p163
    %p165 = scmp.ne.s32.totalorder %s153, %s154
    %p166 = scmp.eq.s32.totalorder %s20, 47
    %p167 = por %p165, %p166
    %p169 = scmp.ne.s32.totalorder %s154, %s168
    %p170 = scmp.eq.s32.totalorder %s20, 0
    %p171 = por %p169, %p170
    %s172 = smul.u32 %s21, 8
    %s173 = sadd.s32 %s172, %s22
    %s174 = smul.u32 %s40, 8
    %s175 = sadd.s32 %s174, %s36
    %s176 = ssub.s32 %s173, %s175
    %p177 = scmp.eq.s32.totalorder %s176, 0
    %s179 = sadd.s32 %s178, 1
    %s180 = scalar_select %p177, %s178, %s179
    %p183 = pneg %p177
    %p184 = scmp.eq.s32.totalorder %s14, 47
    %p185 = por %p183, %p184
    %p186 = scmp.ne.s32.totalorder %s178, %s181
    %p187 = scmp.eq.s32.totalorder %s14, 0
    %p188 = por %p186, %p187
    %p189 = scmp.ne.s32.totalorder %s178, %s181
    %p190 = scmp.eq.s32.totalorder %s19, 47
    %p191 = por %p189, %p190
    %p192 = scmp.ne.s32.totalorder %s181, %s182
    %p193 = scmp.eq.s32.totalorder %s19, 0
    %p194 = por %p192, %p193
    %p195 = scmp.ne.s32.totalorder %s181, %s182
    %p196 = scmp.eq.s32.totalorder %s20, 47
    %p197 = por %p195, %p196
    %p199 = scmp.ne.s32.totalorder %s182, %s198
    %p200 = scmp.eq.s32.totalorder %s20, 0
    %p201 = por %p199, %p200
    %s202 = smul.u32 %s21, 8
    %s203 = sadd.s32 %s202, %s22
    %s204 = smul.u32 %s40, 8
    %s205 = sadd.s32 %s204, %s36
    %s206 = ssub.s32 %s203, %s205
    %p207 = scmp.eq.s32.totalorder %s206, 0
    %s209 = sadd.s32 %s208, 1
    %s210 = scalar_select %p207, %s208, %s209
    %p213 = pneg %p207
    %p214 = scmp.eq.s32.totalorder %s14, 47
    %p215 = por %p213, %p214
    %p216 = scmp.ne.s32.totalorder %s208, %s211
    %p217 = scmp.eq.s32.totalorder %s14, 0
    %p218 = por %p216, %p217
    %p219 = scmp.ne.s32.totalorder %s208, %s211
    %p220 = scmp.eq.s32.totalorder %s19, 47
    %p221 = por %p219, %p220
    %p222 = scmp.ne.s32.totalorder %s211, %s212
    %p223 = scmp.eq.s32.totalorder %s19, 0
    %p224 = por %p222, %p223
    %p225 = scmp.ne.s32.totalorder %s211, %s212
    %p226 = scmp.eq.s32.totalorder %s20, 47
    %p227 = por %p225, %p226
    %p229 = scmp.ne.s32.totalorder %s212, %s228
    %p230 = scmp.eq.s32.totalorder %s20, 0
    %p231 = por %p229, %p230
    %s232 = smul.u32 %s21, 8
    %s233 = sadd.s32 %s232, %s22
    %s234 = smul.u32 %s40, 8
    %s235 = sadd.s32 %s234, %s36
    %s236 = ssub.s32 %s233, %s235
    %p237 = scmp.eq.s32.totalorder %s236, 0
    %s239 = sadd.s32 %s238, 1
    %s240 = scalar_select %p237, %s238, %s239
    %p243 = pneg %p237
    %p244 = scmp.eq.s32.totalorder %s14, 47
    %p245 = por %p243, %p244
    %p246 = scmp.ne.s32.totalorder %s238, %s241
    %p247 = scmp.eq.s32.totalorder %s14, 0
    %p248 = por %p246, %p247
    %p249 = scmp.ne.s32.totalorder %s238, %s241
    %p250 = scmp.eq.s32.totalorder %s19, 47
    %p251 = por %p249, %p250
    %p252 = scmp.ne.s32.totalorder %s241, %s242
    %p253 = scmp.eq.s32.totalorder %s19, 0
    %p254 = por %p252, %p253
    %p255 = scmp.ne.s32.totalorder %s241, %s242
    %p256 = scmp.eq.s32.totalorder %s20, 47
    %p257 = por %p255, %p256
    %p259 = scmp.ne.s32.totalorder %s242, %s258
    %p260 = scmp.eq.s32.totalorder %s20, 0
    %p261 = por %p259, %p260
    %p262 = scmp.le.s32.totalorder 1, %s14
    %p263 = scmp.lt.s32.totalorder %s14, 49
    %p264 = pnand %p262, %p263
    %p265 = pneg %p264
    // Predicated region
    $region9: #{bottleneck_forward.5} parent=5 // pred_check
      _
    $region10: #{bottleneck_forward.5} parent=5 // pred_check_branch
      %267 = sbr.rel (%p264) target = $region12
    $region11: #{bottleneck_forward.5} parent=5 // pred_region
      %s268 = ssub.s32 %s14, 1
      // Predicated region
      $region13: #{bottleneck_forward.5} parent=11 // pred_check
        %p269 = pneg %p96
      $region14: #{bottleneck_forward.5} parent=11 // pred_check_branch
        %271 = sbr.rel (%p269) target = $region16
      $region15: #{bottleneck_forward.5} parent=11 // pred_region
        _
      $region16: #{bottleneck_forward.5} parent=11 // pred_fallthru
        _
      // Predicated region
      $region17: #{bottleneck_forward.5} parent=11 // pred_check
        %p272 = pneg %p117
      $region18: #{bottleneck_forward.5} parent=11 // pred_check_branch
        %274 = sbr.rel (%p272) target = $region20
      $region19: #{bottleneck_forward.5} parent=11 // pred_region
        _
      $region20: #{bottleneck_forward.5} parent=11 // pred_fallthru
        _
      // Predicated region
      $region21: #{bottleneck_forward.5} parent=11 // pred_check
        %p275 = pneg %p164
      $region22: #{bottleneck_forward.5} parent=11 // pred_check_branch
        %277 = sbr.rel (%p275) target = $region24
      $region23: #{bottleneck_forward.5} parent=11 // pred_region
        _
      $region24: #{bottleneck_forward.5} parent=11 // pred_fallthru
        _
    $region12: #{bottleneck_forward.5} parent=5 // pred_fallthru
      _
    %p278 = scmp.lt.s32.totalorder %s14, 48
    // Predicated region
    $region25: #{bottleneck_forward.5} parent=5 // pred_check
      %p279 = pneg %p278
    $region26: #{bottleneck_forward.5} parent=5 // pred_check_branch
      %281 = sbr.rel (%p279) target = $region28
    $region27: #{bottleneck_forward.5} parent=5 // pred_region
      // Predicated region
      $region29: #{bottleneck_forward.5} parent=27 // pred_check
        %p282 = pneg %p69
      $region30: #{bottleneck_forward.5} parent=27 // pred_check_branch
        %284 = sbr.rel (%p282) target = $region32
      $region31: #{bottleneck_forward.5} parent=27 // pred_region
        %s285 = smul.u32 %s21, 8
        %s286 = sadd.s32 %s22, %s23
        %s287 = ssub.s32 %s286, 1
        %p288 = scmp.gt.s32.totalorder %s287, 0
        %s289 = scalar_select %p288, %s287, 0
        %p290 = scmp.lt.s32.totalorder %s289, 7
        %s291 = scalar_select %p290, %s289, 7
        %s292 = sadd.s32 %s285, %s291
        %p293 = scmp.lt.s32.totalorder %s292, 15
        %s294 = scalar_select %p293, %s292, 15
        %s295 = smul.addr %s294, 8
        %s296 = smul.addr %s295, 4
        %s297 = scalar_lea.vmem %s0, %s296
        %s298 = smul.u32 %s21, 8
        %s299 = sadd.s32 %s22, %s23
        %s300 = ssub.s32 %s299, 1
        %p301 = scmp.gt.s32.totalorder %s300, 0
        %s302 = scalar_select %p301, %s300, 0
        %p303 = scmp.lt.s32.totalorder %s302, 7
        %s304 = scalar_select %p303, %s302, 7
        %s305 = sadd.s32 %s298, %s304
      $region32: #{bottleneck_forward.5} parent=27 // pred_fallthru
        _
      // Predicated region
      $region33: #{bottleneck_forward.5} parent=27 // pred_check
        %p306 = pneg %p137
      $region34: #{bottleneck_forward.5} parent=27 // pred_check_branch
        %308 = sbr.rel (%p306) target = $region36
      $region35: #{bottleneck_forward.5} parent=27 // pred_region
        %p309 = scmp.lt.s32.totalorder %s23, 2
        %s310 = scalar_select %p309, %s23, 2
        %s311 = smul.addr %s310, 9
        %s312 = smul.addr %s311, 4
        %s313 = scalar_lea.vmem %s3, %s312
      $region36: #{bottleneck_forward.5} parent=27 // pred_fallthru
        _
    $region28: #{bottleneck_forward.5} parent=5 // pred_fallthru
      _
    %p314 = scmp.le.s32.totalorder 1, %s14
    %p315 = scmp.lt.s32.totalorder %s14, 49
    %p316 = pnand %p314, %p315
    %p317 = pneg %p316
    // Predicated region
    $region37: #{bottleneck_forward.5} parent=5 // pred_check
      _
    $region38: #{bottleneck_forward.5} parent=5 // pred_check_branch
      %319 = sbr.rel (%p316) target = $region40
    $region39: #{bottleneck_forward.5} parent=5 // pred_region
      %s320 = ssub.s32 %s14, 1
      %s321 = smul.u32 %s24, 8
      %s322 = sadd.s32 %s25, %s26
      %s323 = ssub.s32 %s322, 1
      %p324 = scmp.gt.s32.totalorder %s323, 0
      %s325 = scalar_select %p324, %s323, 0
      %p326 = scmp.lt.s32.totalorder %s325, 7
      %s327 = scalar_select %p326, %s325, 7
      %s328 = sadd.s32 %s321, %s327
      %p329 = scmp.lt.s32.totalorder %s328, 15
      %s330 = scalar_select %p329, %s328, 15
      %s331 = smul.addr %s330, 8
      %s332 = smul.addr %s331, 4
      %s333 = scalar_lea.vmem %s0, %s332
      %p334 = pneg %p75
      %p335 = pneg %p72
      %p336 = pneg %p96
      %p337 = pneg %p93
      %p338 = pneg %p117
      %p339 = pneg %p114
      %p340 = scmp.lt.s32.totalorder %s26, 2
      %s341 = scalar_select %p340, %s26, 2
      %s342 = smul.addr %s341, 9
      %s343 = smul.addr %s342, 4
      %s344 = scalar_lea.vmem %s3, %s343
      %p345 = pneg %p143
      %p346 = pneg %p140
      %p347 = pneg %p164
      %p348 = pneg %p161
      %p349 = pneg %p194
      %p350 = pneg %p191
      %s351 = smul.u32 %s24, 8
      %s352 = sadd.s32 %s351, %s25
      %p353 = scmp.lt.s32.totalorder %s352, 15
      %s354 = scalar_select %p353, %s352, 15
      %s355 = smul.addr %s354, 8
      %s356 = smul.addr %s355, 4
      %s357 = scalar_lea.vmem %s5, %s356
      %p358 = pneg %p224
      %p359 = pneg %p221
      %s360 = smul.u32 %s24, 8
      %s361 = sadd.s32 %s360, %s25
      %p362 = scmp.lt.s32.totalorder %s361, 15
      %s363 = scalar_select %p362, %s361, 15
      %s364 = scalar_lea.vmem %s6, %s363
      %p365 = pneg %p254
      %p366 = pneg %p251
      %s367 = smul.u32 %s24, 8
      %s368 = sadd.s32 %s367, %s25
      %p369 = scmp.lt.s32.totalorder %s368, 15
      %s370 = scalar_select %p369, %s368, 15
      %s371 = scalar_lea.vmem %s7, %s370
      %s372 = smul.u32 %s24, 8
      %s373 = sadd.s32 %s25, %s26
      %s374 = ssub.s32 %s373, 1
      %p375 = scmp.gt.s32.totalorder %s374, 0
      %s376 = scalar_select %p375, %s374, 0
      %p377 = scmp.lt.s32.totalorder %s376, 7
      %s378 = scalar_select %p377, %s376, 7
      %s379 = sadd.s32 %s372, %s378
      %p380 = scmp.lt.s32.totalorder %s379, 15
      %s381 = scalar_select %p380, %s379, 15
      %s382 = smul.addr %s381, 8
      %s383 = smul.addr %s382, 4
      %s384 = scalar_lea.vmem %s0, %s383
      %s385 = smul.u32 %s24, 8
      %s386 = sadd.s32 %s25, %s26
      %s387 = ssub.s32 %s386, 1
      %p388 = scmp.gt.s32.totalorder %s387, 0
      %s389 = scalar_select %p388, %s387, 0
      %p390 = scmp.lt.s32.totalorder %s389, 7
      %s391 = scalar_select %p390, %s389, 7
      %s392 = sadd.s32 %s385, %s391
      %p393 = scmp.lt.s32.totalorder %s26, 2
      %s394 = scalar_select %p393, %s26, 2
      %s395 = smul.addr %s394, 9
      %s396 = smul.addr %s395, 4
      %s397 = scalar_lea.vmem %s3, %s396
      %s398 = smul.u32 %s24, 8
      %s399 = sadd.s32 %s398, %s25
      %p400 = scmp.lt.s32.totalorder %s399, 15
      %s401 = scalar_select %p400, %s399, 15
      %s402 = smul.addr %s401, 8
      %s403 = smul.addr %s402, 4
      %s404 = scalar_lea.vmem %s5, %s403
      %s405 = smul.u32 %s24, 8
      %s406 = sadd.s32 %s405, %s25
      %s407 = smul.u32 %s24, 8
      %s408 = sadd.s32 %s407, %s25
      %p409 = scmp.lt.s32.totalorder %s408, 15
      %s410 = scalar_select %p409, %s408, 15
      %s411 = scalar_lea.vmem %s6, %s410
      %s412 = smul.u32 %s24, 8
      %s413 = sadd.s32 %s412, %s25
      %s414 = smul.u32 %s24, 8
      %s415 = sadd.s32 %s414, %s25
      %p416 = scmp.lt.s32.totalorder %s415, 15
      %s417 = scalar_select %p416, %s415, 15
      %s418 = scalar_lea.vmem %s7, %s417
      %s419 = smul.u32 %s24, 8
      %s420 = sadd.s32 %s419, %s25
      %p422 = scmp.eq.s32.totalorder %s26, 0
      // Predicated region
      $region41: #{bottleneck_forward.5} parent=39 // pred_check
        %p423 = pneg %p422
      $region42: #{bottleneck_forward.5} parent=39 // pred_check_branch
        %425 = sbr.rel (%p423) target = $region44
      $region43: #{bottleneck_forward.5} parent=39 // pred_region
        %vm426 = vcmask 64512
        %427 = vst.msk [vmem:[#allocation3] sm:$0xff] %vm426, 0.0
        %428 = vst.msk [vmem:[#allocation3 + $0x8] sm:$0xff] %vm426, 0.0
        %429 = vst.msk [vmem:[#allocation3 + $0x10] sm:$0xff] %vm426, 0.0
        %430 = vst.msk [vmem:[#allocation3 + $0x18] sm:$0xff] %vm426, 0.0
        %431 = vst.msk [vmem:[#allocation3 + $0x20] sm:$0xff] %vm426, 0.0
        %432 = vst.msk [vmem:[#allocation3 + $0x28] sm:$0xff] %vm426, 0.0
        %433 = vst.msk [vmem:[#allocation3 + $0x30] sm:$0xff] %vm426, 0.0
        %434 = vst.msk [vmem:[#allocation3 + $0x38] sm:$0xff] %vm426, 0.0
      $region44: #{bottleneck_forward.5} parent=39 // pred_fallthru
        _
      %s435 = sadd.s32 %s25, %s26
      %s436 = ssub.s32 %s435, 1
      %p437 = scmp.ge.s32.totalorder %s436, 0
      %p438 = scmp.lt.s32.totalorder %s436, 8
      %p439 = pnand %p437, %p438
      %p440 = pneg %p439
      // Predicated region
      $region45: #{bottleneck_forward.5} parent=39 // pred_check
        _
      $region46: #{bottleneck_forward.5} parent=39 // pred_check_branch
        %442 = sbr.rel (%p439) target = $region48
      $region47: #{bottleneck_forward.5} parent=39 // pred_region
        %v443 = vld [vmem:[%s384] sm:$0xf]
        %v444 = vld [vmem:[%s384 + $0x4] sm:$0xf]
        %v445 = vld [vmem:[%s384 + $0x8] sm:$0xf]
        %v446 = vld [vmem:[%s384 + $0xc] sm:$0xf]
        %v447 = vld [vmem:[%s384 + $0x10] sm:$0xf]
        %v448 = vld [vmem:[%s384 + $0x14] sm:$0xf]
        %v449 = vld [vmem:[%s384 + $0x18] sm:$0xf]
        %v450 = vld [vmem:[%s384 + $0x1c] sm:$0xf]
        %v451 = vunpack.c.l.bf16 %v443
        %v452 = vunpack.c.l.bf16 %v444
        %v453 = vunpack.c.l.bf16 %v445
        %v454 = vunpack.c.l.bf16 %v446
        %v455 = vunpack.c.l.bf16 %v447
        %v456 = vunpack.c.l.bf16 %v448
        %v457 = vunpack.c.l.bf16 %v449
        %v458 = vunpack.c.l.bf16 %v450
        %v459 = vld [vmem:[%s1] sm:$0x1]
        %v461 = vlaneseq
        %v462 = vshrl.u32 %v461, 7
        %v463 = vsub.s32 0, %v462
        %v464 = vrot.slane %v459, %v463
        %v466 = vmul.f32 %v451, %v464
        %v467 = vmul.f32 %v452, %v464
        %v468 = vmul.f32 %v453, %v464
        %v469 = vmul.f32 %v454, %v464
        %v470 = vmul.f32 %v455, %v464
        %v471 = vmul.f32 %v456, %v464
        %v472 = vmul.f32 %v457, %v464
        %v473 = vmul.f32 %v458, %v464
        %v474 = vld [vmem:[%s2] sm:$0x1]
        %v476 = vlaneseq
        %v477 = vshrl.u32 %v476, 7
        %v478 = vsub.s32 0, %v477
        %v479 = vrot.slane %v474, %v478
        %v481 = vadd.f32 %v466, %v479
        %v482 = vadd.f32 %v467, %v479
        %v483 = vadd.f32 %v468, %v479
        %v484 = vadd.f32 %v469, %v479
        %v485 = vadd.f32 %v470, %v479
        %v486 = vadd.f32 %v471, %v479
        %v487 = vadd.f32 %v472, %v479
        %v488 = vadd.f32 %v473, %v479
        %v489 = vmax.f32 %v481, 0.0
        %v490 = vmax.f32 %v482, 0.0
        %v491 = vmax.f32 %v483, 0.0
        %v492 = vmax.f32 %v484, 0.0
        %v493 = vmax.f32 %v485, 0.0
        %v494 = vmax.f32 %v486, 0.0
        %v495 = vmax.f32 %v487, 0.0
        %v496 = vmax.f32 %v488, 0.0
        %vm497 = vcmask 64512
        %498 = vst.msk [vmem:[#allocation2] sm:$0xff] %vm497, 0.0
        %vm499 = vcmask 57344
        %500 = vst.msk [vmem:[#allocation2 + $0x8] sm:$0x1] %vm499, 0.0
        %501 = vst.msk [vmem:[#allocation2 + $0x49] sm:$0xff] %vm497, 0.0
        %502 = vst.msk [vmem:[#allocation2 + $0x51] sm:$0x1] %vm499, 0.0
        %503 = vst.msk [vmem:[#allocation2 + $0x9] sm:$0xff] %vm497, %v489
        %504 = vst.msk [vmem:[#allocation2 + $0x11] sm:$0xff] %vm497, %v490
        %505 = vst.msk [vmem:[#allocation2 + $0x19] sm:$0xff] %vm497, %v491
        %506 = vst.msk [vmem:[#allocation2 + $0x21] sm:$0xff] %vm497, %v492
        %507 = vst.msk [vmem:[#allocation2 + $0x29] sm:$0xff] %vm497, %v493
        %508 = vst.msk [vmem:[#allocation2 + $0x31] sm:$0xff] %vm497, %v494
        %509 = vst.msk [vmem:[#allocation2 + $0x39] sm:$0xff] %vm497, %v495
        %510 = vst.msk [vmem:[#allocation2 + $0x41] sm:$0xff] %vm497, %v496
        %v511 = vld [vmem:[#allocation3] sm:$0xff]
        %v512 = vld [vmem:[#allocation3 + $0x8] sm:$0xff]
        %v513 = vld [vmem:[#allocation3 + $0x10] sm:$0xff]
        %v514 = vld [vmem:[#allocation3 + $0x18] sm:$0xff]
        %v515 = vld [vmem:[#allocation3 + $0x20] sm:$0xff]
        %v516 = vld [vmem:[#allocation3 + $0x28] sm:$0xff]
        %v517 = vld [vmem:[#allocation3 + $0x30] sm:$0xff]
        %v518 = vld [vmem:[#allocation3 + $0x38] sm:$0xff]
        %v519 = vld [vmem:[#allocation2] sm:$0xff]
        %v520 = vld [vmem:[#allocation2 + $0x8] sm:$0xff]
        %v521 = vld [vmem:[#allocation2 + $0x10] sm:$0xff]
        %v522 = vld [vmem:[#allocation2 + $0x18] sm:$0xff]
        %v523 = vld [vmem:[#allocation2 + $0x20] sm:$0xff]
        %v524 = vld [vmem:[#allocation2 + $0x28] sm:$0xff]
        %v525 = vld [vmem:[#allocation2 + $0x30] sm:$0xff]
        %v526 = vld [vmem:[#allocation2 + $0x38] sm:$0xff]
        %v527 = vld [vmem:[%s4] sm:$0xff]
        %v528 = vld [vmem:[%s4 + $0x8] sm:$0xff]
        %v529 = vld [vmem:[%s4 + $0x10] sm:$0xff]
        %v530 = vld [vmem:[%s4 + $0x18] sm:$0xff]
        %v531 = vld [vmem:[%s4 + $0x20] sm:$0xff]
        %v532 = vld [vmem:[%s4 + $0x28] sm:$0xff]
        %v533 = vld [vmem:[%s4 + $0x30] sm:$0xff]
        %v534 = vld [vmem:[%s4 + $0x38] sm:$0xff]
        %536 = vset.pattern.permute.xlu0 0
        %537 = vperm.xlu0 %536, %v527
        %v538 = vpop.permute.xlu0 %537
        %541 = vset.pattern.permute.xlu0 0
        %542 = vperm.xlu0 %541, %v528
        %v543 = vpop.permute.xlu0 %542
        %546 = vset.pattern.permute.xlu0 0
        %547 = vperm.xlu0 %546, %v529
        %v548 = vpop.permute.xlu0 %547
        %551 = vset.pattern.permute.xlu0 0
        %552 = vperm.xlu0 %551, %v530
        %v553 = vpop.permute.xlu0 %552
        %556 = vset.pattern.permute.xlu0 0
        %557 = vperm.xlu0 %556, %v531
        %v558 = vpop.permute.xlu0 %557
        %561 = vset.pattern.permute.xlu0 0
        %562 = vperm.xlu0 %561, %v532
        %v563 = vpop.permute.xlu0 %562
        %566 = vset.pattern.permute.xlu0 0
        %567 = vperm.xlu0 %566, %v533
        %v568 = vpop.permute.xlu0 %567
        %571 = vset.pattern.permute.xlu0 0
        %572 = vperm.xlu0 %571, %v534
        %v573 = vpop.permute.xlu0 %572
        %v575 = vmul.f32 %v519, %v538
        %v576 = vmul.f32 %v520, %v543
        %v577 = vmul.f32 %v521, %v548
        %v578 = vmul.f32 %v522, %v553
        %v579 = vmul.f32 %v523, %v558
        %v580 = vmul.f32 %v524, %v563
        %v581 = vmul.f32 %v525, %v568
        %v582 = vmul.f32 %v526, %v573
        %v583 = vpack.c.bf16 %v576, %v575
        %v584 = vpack.c.bf16 %v578, %v577
        %v585 = vpack.c.bf16 %v580, %v579
        %v586 = vpack.c.bf16 %v582, %v581
        %v587 = vld [vmem:[%s397] sm:$0xf]
        %v589 = vsel %vm497, %v583, 0
        %v592 = vsel %vm497, %v584, 0
        %v595 = vsel %vm497, %v585, 0
        %v598 = vsel %vm497, %v586, 0
        %vm600 = vcmask 1043456
        %v602 = vsel %vm600, %v587, 0
        %604 = vmatprep.subr.bf16.mxu0 0
        %605 = vmatpush1.bf16.msra.mxu0 %v602
        %606 = vmatprep.subr.bf16.mxu0 0
        %607 = vmatpush1.bf16.msra.mxu0 0
        %608 = vmatprep.subr.bf16.mxu0 0
        %609 = vmatpush1.bf16.msra.mxu0 0
        %610 = vmatprep.subr.bf16.mxu0 0
        %611 = vmatpush1.bf16.msra.mxu0 0
        %612 = vmatprep.subr.bf16.mxu0 0
        %613 = vmatpush1.bf16.msra.mxu0 0
        %614 = vmatprep.subr.bf16.mxu0 0
        %615 = vmatpush1.bf16.msra.mxu0 0
        %616 = vmatprep.subr.bf16.mxu0 0
        %617 = vmatpush1.bf16.msra.mxu0 0
        %618 = vmatprep.subr.bf16.mxu0 0
        %619 = vmatpush1.bf16.msra.mxu0 0
        %620 = vmatprep.subr.bf16.mxu0 0
        %621 = vmatpush1.bf16.msra.mxu0 0
        %622 = vmatprep.subr.bf16.mxu0 0
        %623 = vmatpush1.bf16.msra.mxu0 0
        %624 = vmatprep.subr.bf16.mxu0 0
        %625 = vmatpush1.bf16.msra.mxu0 0
        %626 = vmatprep.subr.bf16.mxu0 0
        %627 = vmatpush1.bf16.msra.mxu0 0
        %628 = vmatprep.subr.bf16.mxu0 0
        %629 = vmatpush1.bf16.msra.mxu0 0
        %630 = vmatprep.subr.bf16.mxu0 0
        %631 = vmatpush1.bf16.msra.mxu0 0
        %632 = vmatprep.subr.bf16.mxu0 0
        %633 = vmatpush1.bf16.msra.mxu0 0
        %634 = vmatprep.subr.bf16.mxu0 0
        %635 = vmatpush1.bf16.msra.mxu0 0
        %636 = vmatprep.mubr.bf16.mxu0 0
        %637 = vmatmul.mubr.bf16.gmra.mrb[0].mxu0 %v589
        %v638 = vpop.f32.mrb[0].mxu0
        %v639 = vadd.f32 0.0, %v638
        %v640 = vpop.f32.mrb[0].mxu0
        %v641 = vpop.f32.mrb[0].mxu0
        %v642 = vadd.f32 0.0, %v641
        %v643 = vpop.f32.mrb[0].mxu0
        %644 = vmatprep.mubr.bf16.mxu0 0
        %645 = vmatmul.mubr.bf16.gmra.mrb[0].mxu0 %v592
        %v646 = vpop.f32.mrb[0].mxu0
        %v647 = vadd.f32 0.0, %v646
        %v648 = vpop.f32.mrb[0].mxu0
        %v649 = vpop.f32.mrb[0].mxu0
        %v650 = vadd.f32 0.0, %v649
        %v651 = vpop.f32.mrb[0].mxu0
        %652 = vmatprep.mubr.bf16.mxu0 0
        %653 = vmatmul.mubr.bf16.gmra.mrb[0].mxu0 %v595
        %v654 = vpop.f32.mrb[0].mxu0
        %v655 = vadd.f32 0.0, %v654
        %v656 = vpop.f32.mrb[0].mxu0
        %v657 = vpop.f32.mrb[0].mxu0
        %v658 = vadd.f32 0.0, %v657
        %v659 = vpop.f32.mrb[0].mxu0
        %660 = vmatprep.mubr.bf16.mxu0 0
        %661 = vmatmul.mubr.bf16.gmra.mrb[0].mxu0 %v598
        %v662 = vpop.f32.mrb[0].mxu0
        %v663 = vadd.f32 0.0, %v662
        %v664 = vpop.f32.mrb[0].mxu0
        %v665 = vpop.f32.mrb[0].mxu0
        %v666 = vadd.f32 0.0, %v665
        %v667 = vpop.f32.mrb[0].mxu0
        %668 = vdwg.mxu0
        %v669 = vadd.f32 %v511, %v639
        %v670 = vadd.f32 %v512, %v642
        %v671 = vadd.f32 %v513, %v647
        %v672 = vadd.f32 %v514, %v650
        %v673 = vadd.f32 %v515, %v655
        %v674 = vadd.f32 %v516, %v658
        %v675 = vadd.f32 %v517, %v663
        %v676 = vadd.f32 %v518, %v666
        %v677 = vld [vmem:[#allocation2 + $0x1] sm:$0xff]
        %v678 = vld [vmem:[#allocation2 + $0x9] sm:$0xff]
        %v679 = vld [vmem:[#allocation2 + $0x11] sm:$0xff]
        %v680 = vld [vmem:[#allocation2 + $0x19] sm:$0xff]
        %v681 = vld [vmem:[#allocation2 + $0x21] sm:$0xff]
        %v682 = vld [vmem:[#allocation2 + $0x29] sm:$0xff]
        %v683 = vld [vmem:[#allocation2 + $0x31] sm:$0xff]
        %v684 = vld [vmem:[#allocation2 + $0x39] sm:$0xff]
        %s685 = scalar_lea.vmem %s4, 64
        %v686 = vld [vmem:[%s685] sm:$0xff]
        %v687 = vld [vmem:[%s685 + $0x8] sm:$0xff]
        %v688 = vld [vmem:[%s685 + $0x10] sm:$0xff]
        %v689 = vld [vmem:[%s685 + $0x18] sm:$0xff]
        %v690 = vld [vmem:[%s685 + $0x20] sm:$0xff]
        %v691 = vld [vmem:[%s685 + $0x28] sm:$0xff]
        %v692 = vld [vmem:[%s685 + $0x30] sm:$0xff]
        %v693 = vld [vmem:[%s685 + $0x38] sm:$0xff]
        %695 = vset.pattern.permute.xlu0 0
        %696 = vperm.xlu0 %695, %v686
        %v697 = vpop.permute.xlu0 %696
        %700 = vset.pattern.permute.xlu0 0
        %701 = vperm.xlu0 %700, %v687
        %v702 = vpop.permute.xlu0 %701
        %705 = vset.pattern.permute.xlu0 0
        %706 = vperm.xlu0 %705, %v688
        %v707 = vpop.permute.xlu0 %706
        %710 = vset.pattern.permute.xlu0 0
        %711 = vperm.xlu0 %710, %v689
        %v712 = vpop.permute.xlu0 %711
        %715 = vset.pattern.permute.xlu0 0
        %716 = vperm.xlu0 %715, %v690
        %v717 = vpop.permute.xlu0 %716
        %720 = vset.pattern.permute.xlu0 0
        %721 = vperm.xlu0 %720, %v691
        %v722 = vpop.permute.xlu0 %721
        %725 = vset.pattern.permute.xlu0 0
        %726 = vperm.xlu0 %725, %v692
        %v727 = vpop.permute.xlu0 %726
        %730 = vset.pattern.permute.xlu0 0
        %731 = vperm.xlu0 %730, %v693
        %v732 = vpop.permute.xlu0 %731
        %v734 = vmul.f32 %v677, %v697
        %v735 = vmul.f32 %v678, %v702
        %v736 = vmul.f32 %v679, %v707
        %v737 = vmul.f32 %v680, %v712
        %v738 = vmul.f32 %v681, %v717
        %v739 = vmul.f32 %v682, %v722
        %v740 = vmul.f32 %v683, %v727
        %v741 = vmul.f32 %v684, %v732
        %v742 = vpack.c.bf16 %v735, %v734
        %v743 = vpack.c.bf16 %v737, %v736
        %v744 = vpack.c.bf16 %v739, %v738
        %v745 = vpack.c.bf16 %v741, %v740
        %s746 = scalar_lea.vmem %s397, 4
        %v747 = vld [vmem:[%s746] sm:$0xf]
        %v749 = vsel %vm497, %v742, 0
        %v752 = vsel %vm497, %v743, 0
        %v755 = vsel %vm497, %v744, 0
        %v758 = vsel %vm497, %v745, 0
        %v761 = vsel %vm600, %v747, 0
        %763 = vmatprep.subr.bf16.mxu0 0
        %764 = vmatpush1.bf16.msra.mxu0 %v761
        %765 = vmatprep.subr.bf16.mxu0 0
        %766 = vmatpush1.bf16.msra.mxu0 0
        %767 = vmatprep.subr.bf16.mxu0 0
        %768 = vmatpush1.bf16.msra.mxu0 0
        %769 = vmatprep.subr.bf16.mxu0 0
        %770 = vmatpush1.bf16.msra.mxu0 0
        %771 = vmatprep.subr.bf16.mxu0 0
        %772 = vmatpush1.bf16.msra.mxu0 0
        %773 = vmatprep.subr.bf16.mxu0 0
        %774 = vmatpush1.bf16.msra.mxu0 0
        %775 = vmatprep.subr.bf16.mxu0 0
        %776 = vmatpush1.bf16.msra.mxu0 0
        %777 = vmatprep.subr.bf16.mxu0 0
        %778 = vmatpush1.bf16.msra.mxu0 0
        %779 = vmatprep.subr.bf16.mxu0 0
        %780 = vmatpush1.bf16.msra.mxu0 0
        %781 = vmatprep.subr.bf16.mxu0 0
        %782 = vmatpush1.bf16.msra.mxu0 0
        %783 = vmatprep.subr.bf16.mxu0 0
        %784 = vmatpush1.bf16.msra.mxu0 0
        %785 = vmatprep.subr.bf16.mxu0 0
        %786 = vmatpush1.bf16.msra.mxu0 0
        %787 = vmatprep.subr.bf16.mxu0 0
        %788 = vmatpush1.bf16.msra.mxu0 0
        %789 = vmatprep.subr.bf16.mxu0 0
        %790 = vmatpush1.bf16.msra.mxu0 0
        %791 = vmatprep.subr.bf16.mxu0 0
        %792 = vmatpush1.bf16.msra.mxu0 0
        %793 = vmatprep.subr.bf16.mxu0 0
        %794 = vmatpush1.bf16.msra.mxu0 0
        %795 = vmatprep.mubr.bf16.mxu0 0
        %796 = vmatmul.mubr.bf16.gmra.mrb[0].mxu0 %v749
        %v797 = vpop.f32.mrb[0].mxu0
        %v798 = vadd.f32 0.0, %v797
        %v799 = vpop.f32.mrb[0].mxu0
        %v800 = vpop.f32.mrb[0].mxu0
        %v801 = vadd.f32 0.0, %v800
        %v802 = vpop.f32.mrb[0].mxu0
        %803 = vmatprep.mubr.bf16.mxu0 0
        %804 = vmatmul.mubr.bf16.gmra.mrb[0].mxu0 %v752
        %v805 = vpop.f32.mrb[0].mxu0
        %v806 = vadd.f32 0.0, %v805
        %v807 = vpop.f32.mrb[0].mxu0
        %v808 = vpop.f32.mrb[0].mxu0
        %v809 = vadd.f32 0.0, %v808
        %v810 = vpop.f32.mrb[0].mxu0
        %811 = vmatprep.mubr.bf16.mxu0 0
        %812 = vmatmul.mubr.bf16.gmra.mrb[0].mxu0 %v755
        %v813 = vpop.f32.mrb[0].mxu0
        %v814 = vadd.f32 0.0, %v813
        %v815 = vpop.f32.mrb[0].mxu0
        %v816 = vpop.f32.mrb[0].mxu0
        %v817 = vadd.f32 0.0, %v816
        %v818 = vpop.f32.mrb[0].mxu0
        %819 = vmatprep.mubr.bf16.mxu0 0
        %820 = vmatmul.mubr.bf16.gmra.mrb[0].mxu0 %v758
        %v821 = vpop.f32.mrb[0].mxu0
        %v822 = vadd.f32 0.0, %v821
        %v823 = vpop.f32.mrb[0].mxu0
        %v824 = vpop.f32.mrb[0].mxu0
        %v825 = vadd.f32 0.0, %v824
        %v826 = vpop.f32.mrb[0].mxu0
        %827 = vdwg.mxu0
        %v828 = vadd.f32 %v669, %v798
        %v829 = vadd.f32 %v670, %v801
        %v830 = vadd.f32 %v671, %v806
        %v831 = vadd.f32 %v672, %v809
        %v832 = vadd.f32 %v673, %v814
        %v833 = vadd.f32 %v674, %v817
        %v834 = vadd.f32 %v675, %v822
        %v835 = vadd.f32 %v676, %v825
        %v836 = vld [vmem:[#allocation2 + $0x2] sm:$0xff]
        %v837 = vld [vmem:[#allocation2 + $0xa] sm:$0xff]
        %v838 = vld [vmem:[#allocation2 + $0x12] sm:$0xff]
        %v839 = vld [vmem:[#allocation2 + $0x1a] sm:$0xff]
        %v840 = vld [vmem:[#allocation2 + $0x22] sm:$0xff]
        %v841 = vld [vmem:[#allocation2 + $0x2a] sm:$0xff]
        %v842 = vld [vmem:[#allocation2 + $0x32] sm:$0xff]
        %v843 = vld [vmem:[#allocation2 + $0x3a] sm:$0xff]
        %s844 = scalar_lea.vmem %s4, 128
        %v845 = vld [vmem:[%s844] sm:$0xff]
        %v846 = vld [vmem:[%s844 + $0x8] sm:$0xff]
        %v847 = vld [vmem:[%s844 + $0x10] sm:$0xff]
        %v848 = vld [vmem:[%s844 + $0x18] sm:$0xff]
        %v849 = vld [vmem:[%s844 + $0x20] sm:$0xff]
        %v850 = vld [vmem:[%s844 + $0x28] sm:$0xff]
        %v851 = vld [vmem:[%s844 + $0x30] sm:$0xff]
        %v852 = vld [vmem:[%s844 + $0x38] sm:$0xff]
        %854 = vset.pattern.permute.xlu0 0
        %855 = vperm.xlu0 %854, %v845
        %v856 = vpop.permute.xlu0 %855
        %859 = vset.pattern.permute.xlu0 0
        %860 = vperm.xlu0 %859, %v846
        %v861 = vpop.permute.xlu0 %860
        %864 = vset.pattern.permute.xlu0 0
        %865 = vperm.xlu0 %864, %v847
        %v866 = vpop.permute.xlu0 %865
        %869 = vset.pattern.permute.xlu0 0
        %870 = vperm.xlu0 %869, %v848
        %v871 = vpop.permute.xlu0 %870
        %874 = vset.pattern.permute.xlu0 0
        %875 = vperm.xlu0 %874, %v849
        %v876 = vpop.permute.xlu0 %875
        %879 = vset.pattern.permute.xlu0 0
        %880 = vperm.xlu0 %879, %v850
        %v881 = vpop.permute.xlu0 %880
        %884 = vset.pattern.permute.xlu0 0
        %885 = vperm.xlu0 %884, %v851
        %v886 = vpop.permute.xlu0 %885
        %889 = vset.pattern.permute.xlu0 0
        %890 = vperm.xlu0 %889, %v852
        %v891 = vpop.permute.xlu0 %890
        %v893 = vmul.f32 %v836, %v856
        %v894 = vmul.f32 %v837, %v861
        %v895 = vmul.f32 %v838, %v866
        %v896 = vmul.f32 %v839, %v871
        %v897 = vmul.f32 %v840, %v876
        %v898 = vmul.f32 %v841, %v881
        %v899 = vmul.f32 %v842, %v886
        %v900 = vmul.f32 %v843, %v891
        %v901 = vpack.c.bf16 %v894, %v893
        %v902 = vpack.c.bf16 %v896, %v895
        %v903 = vpack.c.bf16 %v898, %v897
        %v904 = vpack.c.bf16 %v900, %v899
        %s905 = scalar_lea.vmem %s397, 8
        %v906 = vld [vmem:[%s905] sm:$0xf]
        %v908 = vsel %vm497, %v901, 0
        %v911 = vsel %vm497, %v902, 0
        %v914 = vsel %vm497, %v903, 0
        %v917 = vsel %vm497, %v904, 0
        %v920 = vsel %vm600, %v906, 0
        %922 = vmatprep.subr.bf16.mxu0 0
        %923 = vmatpush1.bf16.msra.mxu0 %v920
        %924 = vmatprep.subr.bf16.mxu0 0
        %925 = vmatpush1.bf16.msra.mxu0 0
        %926 = vmatprep.subr.bf16.mxu0 0
        %927 = vmatpush1.bf16.msra.mxu0 0
        %928 = vmatprep.subr.bf16.mxu0 0
        %929 = vmatpush1.bf16.msra.mxu0 0
        %930 = vmatprep.subr.bf16.mxu0 0
        %931 = vmatpush1.bf16.msra.mxu0 0
        %932 = vmatprep.subr.bf16.mxu0 0
        %933 = vmatpush1.bf16.msra.mxu0 0
        %934 = vmatprep.subr.bf16.mxu0 0
        %935 = vmatpush1.bf16.msra.mxu0 0
        %936 = vmatprep.subr.bf16.mxu0 0
        %937 = vmatpush1.bf16.msra.mxu0 0
        %938 = vmatprep.subr.bf16.mxu0 0
        %939 = vmatpush1.bf16.msra.mxu0 0
        %940 = vmatprep.subr.bf16.mxu0 0
        %941 = vmatpush1.bf16.msra.mxu0 0
        %942 = vmatprep.subr.bf16.mxu0 0
        %943 = vmatpush1.bf16.msra.mxu0 0
        %944 = vmatprep.subr.bf16.mxu0 0
        %945 = vmatpush1.bf16.msra.mxu0 0
        %946 = vmatprep.subr.bf16.mxu0 0
        %947 = vmatpush1.bf16.msra.mxu0 0
        %948 = vmatprep.subr.bf16.mxu0 0
        %949 = vmatpush1.bf16.msra.mxu0 0
        %950 = vmatprep.subr.bf16.mxu0 0
        %951 = vmatpush1.bf16.msra.mxu0 0
        %952 = vmatprep.subr.bf16.mxu0 0
        %953 = vmatpush1.bf16.msra.mxu0 0
        %954 = vmatprep.mubr.bf16.mxu0 0
        %955 = vmatmul.mubr.bf16.gmra.mrb[0].mxu0 %v908
        %v956 = vpop.f32.mrb[0].mxu0
        %v957 = vadd.f32 0.0, %v956
        %v958 = vpop.f32.mrb[0].mxu0
        %v959 = vpop.f32.mrb[0].mxu0
        %v960 = vadd.f32 0.0, %v959
        %v961 = vpop.f32.mrb[0].mxu0
        %962 = vmatprep.mubr.bf16.mxu0 0
        %963 = vmatmul.mubr.bf16.gmra.mrb[0].mxu0 %v911
        %v964 = vpop.f32.mrb[0].mxu0
        %v965 = vadd.f32 0.0, %v964
        %v966 = vpop.f32.mrb[0].mxu0
        %v967 = vpop.f32.mrb[0].mxu0
        %v968 = vadd.f32 0.0, %v967
        %v969 = vpop.f32.mrb[0].mxu0
        %970 = vmatprep.mubr.bf16.mxu0 0
        %971 = vmatmul.mubr.bf16.gmra.mrb[0].mxu0 %v914
        %v972 = vpop.f32.mrb[0].mxu0
        %v973 = vadd.f32 0.0, %v972
        %v974 = vpop.f32.mrb[0].mxu0
        %v975 = vpop.f32.mrb[0].mxu0
        %v976 = vadd.f32 0.0, %v975
        %v977 = vpop.f32.mrb[0].mxu0
        %978 = vmatprep.mubr.bf16.mxu0 0
        %979 = vmatmul.mubr.bf16.gmra.mrb[0].mxu0 %v917
        %v980 = vpop.f32.mrb[0].mxu0
        %v981 = vadd.f32 0.0, %v980
        %v982 = vpop.f32.mrb[0].mxu0
        %v983 = vpop.f32.mrb[0].mxu0
        %v984 = vadd.f32 0.0, %v983
        %v985 = vpop.f32.mrb[0].mxu0
        %986 = vdwg.mxu0
        %v987 = vadd.f32 %v828, %v957
        %v988 = vadd.f32 %v829, %v960
        %v989 = vadd.f32 %v830, %v965
        %v990 = vadd.f32 %v831, %v968
        %v991 = vadd.f32 %v832, %v973
        %v992 = vadd.f32 %v833, %v976
        %v993 = vadd.f32 %v834, %v981
        %v994 = vadd.f32 %v835, %v984
        %v995 = vld [vmem:[#allocation2 + $0x8] sm:$0xff]
        %v996 = vld [vmem:[#allocation2 + $0x10] sm:$0xff]
        %v997 = vld [vmem:[#allocation2 + $0x18] sm:$0xff]
        %v998 = vld [vmem:[#allocation2 + $0x20] sm:$0xff]
        %v999 = vld [vmem:[#allocation2 + $0x28] sm:$0xff]
        %v1000 = vld [vmem:[#allocation2 + $0x30] sm:$0xff]
        %v1001 = vld [vmem:[#allocation2 + $0x38] sm:$0xff]
        %v1002 = vld [vmem:[#allocation2 + $0x40] sm:$0xff]
        %s1003 = scalar_lea.vmem %s4, 192
        %v1004 = vld [vmem:[%s1003] sm:$0xff]
        %v1005 = vld [vmem:[%s1003 + $0x8] sm:$0xff]
        %v1006 = vld [vmem:[%s1003 + $0x10] sm:$0xff]
        %v1007 = vld [vmem:[%s1003 + $0x18] sm:$0xff]
        %v1008 = vld [vmem:[%s1003 + $0x20] sm:$0xff]
        %v1009 = vld [vmem:[%s1003 + $0x28] sm:$0xff]
        %v1010 = vld [vmem:[%s1003 + $0x30] sm:$0xff]
        %v1011 = vld [vmem:[%s1003 + $0x38] sm:$0xff]
        %1013 = vset.pattern.permute.xlu0 0
        %1014 = vperm.xlu0 %1013, %v1004
        %v1015 = vpop.permute.xlu0 %1014
        %1018 = vset.pattern.permute.xlu0 0
        %1019 = vperm.xlu0 %1018, %v1005
        %v1020 = vpop.permute.xlu0 %1019
        %1023 = vset.pattern.permute.xlu0 0
        %1024 = vperm.xlu0 %1023, %v1006
        %v1025 = vpop.permute.xlu0 %1024
        %1028 = vset.pattern.permute.xlu0 0
        %1029 = vperm.xlu0 %1028, %v1007
        %v1030 = vpop.permute.xlu0 %1029
        %1033 = vset.pattern.permute.xlu0 0
        %1034 = vperm.xlu0 %1033, %v1008
        %v1035 = vpop.permute.xlu0 %1034
        %1038 = vset.pattern.permute.xlu0 0
        %1039 = vperm.xlu0 %1038, %v1009
        %v1040 = vpop.permute.xlu0 %1039
        %1043 = vset.pattern.permute.xlu0 0
        %1044 = vperm.xlu0 %1043, %v1010
        %v1045 = vpop.permute.xlu0 %1044
        %1048 = vset.pattern.permute.xlu0 0
        %1049 = vperm.xlu0 %1048, %v1011
        %v1050 = vpop.permute.xlu0 %1049
        %v1052 = vmul.f32 %v995, %v1015
        %v1053 = vmul.f32 %v996, %v1020
        %v1054 = vmul.f32 %v997, %v1025
        %v1055 = vmul.f32 %v998, %v1030
        %v1056 = vmul.f32 %v999, %v1035
        %v1057 = vmul.f32 %v1000, %v1040
        %v1058 = vmul.f32 %v1001, %v1045
        %v1059 = vmul.f32 %v1002, %v1050
        %v1060 = vpack.c.bf16 %v1053, %v1052
        %v1061 = vpack.c.bf16 %v1055, %v1054
        %v1062 = vpack.c.bf16 %v1057, %v1056
        %v1063 = vpack.c.bf16 %v1059, %v1058
        %s1064 = scalar_lea.vmem %s397, 12
        %v1065 = vld [vmem:[%s1064] sm:$0xf]
        %v1067 = vsel %vm497, %v1060, 0
        %v1070 = vsel %vm497, %v1061, 0
        %v1073 = vsel %vm497, %v1062, 0
        %v1076 = vsel %vm497, %v1063, 0
        %v1079 = vsel %vm600, %v1065, 0
        %1081 = vmatprep.subr.bf16.mxu0 0
        %1082 = vmatpush1.bf16.msra.mxu0 %v1079
        %1083 = vmatprep.subr.bf16.mxu0 0
        %1084 = vmatpush1.bf16.msra.mxu0 0
        %1085 = vmatprep.subr.bf16.mxu0 0
        %1086 = vmatpush1.bf16.msra.mxu0 0
        %1087 = vmatprep.subr.bf16.mxu0 0
        %1088 = vmatpush1.bf16.msra.mxu0 0
        %1089 = vmatprep.subr.bf16.mxu0 0
        %1090 = vmatpush1.bf16.msra.mxu0 0
        %1091 = vmatprep.subr.bf16.mxu0 0
        %1092 = vmatpush1.bf16.msra.mxu0 0
        %1093 = vmatprep.subr.bf16.mxu0 0
        %1094 = vmatpush1.bf16.msra.mxu0 0
        %1095 = vmatprep.subr.bf16.mxu0 0
        %1096 = vmatpush1.bf16.msra.mxu0 0
        %1097 = vmatprep.subr.bf16.mxu0 0
        %1098 = vmatpush1.bf16.msra.mxu0 0
        %1099 = vmatprep.subr.bf16.mxu0 0
        %1100 = vmatpush1.bf16.msra.mxu0 0
        %1101 = vmatprep.subr.bf16.mxu0 0
        %1102 = vmatpush1.bf16.msra.mxu0 0
        %1103 = vmatprep.subr.bf16.mxu0 0
        %1104 = vmatpush1.bf16.msra.mxu0 0
        %1105 = vmatprep.subr.bf16.mxu0 0
        %1106 = vmatpush1.bf16.msra.mxu0 0
        %1107 = vmatprep.subr.bf16.mxu0 0
        %1108 = vmatpush1.bf16.msra.mxu0 0
        %1109 = vmatprep.subr.bf16.mxu0 0
        %1110 = vmatpush1.bf16.msra.mxu0 0
        %1111 = vmatprep.subr.bf16.mxu0 0
        %1112 = vmatpush1.bf16.msra.mxu0 0
        %1113 = vmatprep.mubr.bf16.mxu0 0
        %1114 = vmatmul.mubr.bf16.gmra.mrb[0].mxu0 %v1067
        %v1115 = vpop.f32.mrb[0].mxu0
        %v1116 = vadd.f32 0.0, %v1115
        %v1117 = vpop.f32.mrb[0].mxu0
        %v1118 = vpop.f32.mrb[0].mxu0
        %v1119 = vadd.f32 0.0, %v1118
        %v1120 = vpop.f32.mrb[0].mxu0
        %1121 = vmatprep.mubr.bf16.mxu0 0
        %1122 = vmatmul.mubr.bf16.gmra.mrb[0].mxu0 %v1070
        %v1123 = vpop.f32.mrb[0].mxu0
        %v1124 = vadd.f32 0.0, %v1123
        %v1125 = vpop.f32.mrb[0].mxu0
        %v1126 = vpop.f32.mrb[0].mxu0
        %v1127 = vadd.f32 0.0, %v1126
        %v1128 = vpop.f32.mrb[0].mxu0
        %1129 = vmatprep.mubr.bf16.mxu0 0
        %1130 = vmatmul.mubr.bf16.gmra.mrb[0].mxu0 %v1073
        %v1131 = vpop.f32.mrb[0].mxu0
        %v1132 = vadd.f32 0.0, %v1131
        %v1133 = vpop.f32.mrb[0].mxu0
        %v1134 = vpop.f32.mrb[0].mxu0
        %v1135 = vadd.f32 0.0, %v1134
        %v1136 = vpop.f32.mrb[0].mxu0
        %1137 = vmatprep.mubr.bf16.mxu0 0
        %1138 = vmatmul.mubr.bf16.gmra.mrb[0].mxu0 %v1076
        %v1139 = vpop.f32.mrb[0].mxu0
        %v1140 = vadd.f32 0.0, %v1139
        %v1141 = vpop.f32.mrb[0].mxu0
        %v1142 = vpop.f32.mrb[0].mxu0
        %v1143 = vadd.f32 0.0, %v1142
        %v1144 = vpop.f32.mrb[0].mxu0
        %1145 = vdwg.mxu0
        %v1146 = vadd.f32 %v987, %v1116
        %v1147 = vadd.f32 %v988, %v1119
        %v1148 = vadd.f32 %v989, %v1124
        %v1149 = vadd.f32 %v990, %v1127
        %v1150 = vadd.f32 %v991, %v1132
        %v1151 = vadd.f32 %v992, %v1135
        %v1152 = vadd.f32 %v993, %v1140
        %v1153 = vadd.f32 %v994, %v1143
        %v1154 = vld [vmem:[#allocation2 + $0x9] sm:$0xff]
        %v1155 = vld [vmem:[#allocation2 + $0x11] sm:$0xff]
        %v1156 = vld [vmem:[#allocation2 + $0x19] sm:$0xff]
        %v1157 = vld [vmem:[#allocation2 + $0x21] sm:$0xff]
        %v1158 = vld [vmem:[#allocation2 + $0x29] sm:$0xff]
        %v1159 = vld [vmem:[#allocation2 + $0x31] sm:$0xff]
        %v1160 = vld [vmem:[#allocation2 + $0x39] sm:$0xff]
        %v1161 = vld [vmem:[#allocation2 + $0x41] sm:$0xff]
        %s1162 = scalar_lea.vmem %s4, 256
        %v1163 = vld [vmem:[%s1162] sm:$0xff]
        %v1164 = vld [vmem:[%s1162 + $0x8] sm:$0xff]
        %v1165 = vld [vmem:[%s1162 + $0x10] sm:$0xff]
        %v1166 = vld [vmem:[%s1162 + $0x18] sm:$0xff]
        %v1167 = vld [vmem:[%s1162 + $0x20] sm:$0xff]
        %v1168 = vld [vmem:[%s1162 + $0x28] sm:$0xff]
        %v1169 = vld [vmem:[%s1162 + $0x30] sm:$0xff]
        %v1170 = vld [vmem:[%s1162 + $0x38] sm:$0xff]
        %1172 = vset.pattern.permute.xlu0 0
        %1173 = vperm.xlu0 %1172, %v1163
        %v1174 = vpop.permute.xlu0 %1173
        %1177 = vset.pattern.permute.xlu0 0
        %1178 = vperm.xlu0 %1177, %v1164
        %v1179 = vpop.permute.xlu0 %1178
        %1182 = vset.pattern.permute.xlu0 0
        %1183 = vperm.xlu0 %1182, %v1165
        %v1184 = vpop.permute.xlu0 %1183
        %1187 = vset.pattern.permute.xlu0 0
        %1188 = vperm.xlu0 %1187, %v1166
        %v1189 = vpop.permute.xlu0 %1188
        %1192 = vset.pattern.permute.xlu0 0
        %1193 = vperm.xlu0 %1192, %v1167
        %v1194 = vpop.permute.xlu0 %1193
        %1197 = vset.pattern.permute.xlu0 0
        %1198 = vperm.xlu0 %1197, %v1168
        %v1199 = vpop.permute.xlu0 %1198
        %1202 = vset.pattern.permute.xlu0 0
        %1203 = vperm.xlu0 %1202, %v1169
        %v1204 = vpop.permute.xlu0 %1203
        %1207 = vset.pattern.permute.xlu0 0
        %1208 = vperm.xlu0 %1207, %v1170
        %v1209 = vpop.permute.xlu0 %1208
        %v1211 = vmul.f32 %v1154, %v1174
        %v1212 = vmul.f32 %v1155, %v1179
        %v1213 = vmul.f32 %v1156, %v1184
        %v1214 = vmul.f32 %v1157, %v1189
        %v1215 = vmul.f32 %v1158, %v1194
        %v1216 = vmul.f32 %v1159, %v1199
        %v1217 = vmul.f32 %v1160, %v1204
        %v1218 = vmul.f32 %v1161, %v1209
        %v1219 = vpack.c.bf16 %v1212, %v1211
        %v1220 = vpack.c.bf16 %v1214, %v1213
        %v1221 = vpack.c.bf16 %v1216, %v1215
        %v1222 = vpack.c.bf16 %v1218, %v1217
        %s1223 = scalar_lea.vmem %s397, 16
        %v1224 = vld [vmem:[%s1223] sm:$0xf]
        %v1226 = vsel %vm497, %v1219, 0
        %v1229 = vsel %vm497, %v1220, 0
        %v1232 = vsel %vm497, %v1221, 0
        %v1235 = vsel %vm497, %v1222, 0
        %v1238 = vsel %vm600, %v1224, 0
        %1240 = vmatprep.subr.bf16.mxu0 0
        %1241 = vmatpush1.bf16.msra.mxu0 %v1238
        %1242 = vmatprep.subr.bf16.mxu0 0
        %1243 = vmatpush1.bf16.msra.mxu0 0
        %1244 = vmatprep.subr.bf16.mxu0 0
        %1245 = vmatpush1.bf16.msra.mxu0 0
        %1246 = vmatprep.subr.bf16.mxu0 0
        %1247 = vmatpush1.bf16.msra.mxu0 0
        %1248 = vmatprep.subr.bf16.mxu0 0
        %1249 = vmatpush1.bf16.msra.mxu0 0
        %1250 = vmatprep.subr.bf16.mxu0 0
        %1251 = vmatpush1.bf16.msra.mxu0 0
        %1252 = vmatprep.subr.bf16.mxu0 0
        %1253 = vmatpush1.bf16.msra.mxu0 0
        %1254 = vmatprep.subr.bf16.mxu0 0
        %1255 = vmatpush1.bf16.msra.mxu0 0
        %1256 = vmatprep.subr.bf16.mxu0 0
        %1257 = vmatpush1.bf16.msra.mxu0 0
        %1258 = vmatprep.subr.bf16.mxu0 0
        %1259 = vmatpush1.bf16.msra.mxu0 0
        %1260 = vmatprep.subr.bf16.mxu0 0
        %1261 = vmatpush1.bf16.msra.mxu0 0
        %1262 = vmatprep.subr.bf16.mxu0 0
        %1263 = vmatpush1.bf16.msra.mxu0 0
        %1264 = vmatprep.subr.bf16.mxu0 0
        %1265 = vmatpush1.bf16.msra.mxu0 0
        %1266 = vmatprep.subr.bf16.mxu0 0
        %1267 = vmatpush1.bf16.msra.mxu0 0
        %1268 = vmatprep.subr.bf16.mxu0 0
        %1269 = vmatpush1.bf16.msra.mxu0 0
        %1270 = vmatprep.subr.bf16.mxu0 0
        %1271 = vmatpush1.bf16.msra.mxu0 0
        %1272 = vmatprep.mubr.bf16.mxu0 0
        %1273 = vmatmul.mubr.bf16.gmra.mrb[0].mxu0 %v1226
        %v1274 = vpop.f32.mrb[0].mxu0
        %v1275 = vadd.f32 0.0, %v1274
        %v1276 = vpop.f32.mrb[0].mxu0
        %v1277 = vpop.f32.mrb[0].mxu0
        %v1278 = vadd.f32 0.0, %v1277
        %v1279 = vpop.f32.mrb[0].mxu0
        %1280 = vmatprep.mubr.bf16.mxu0 0
        %1281 = vmatmul.mubr.bf16.gmra.mrb[0].mxu0 %v1229
        %v1282 = vpop.f32.mrb[0].mxu0
        %v1283 = vadd.f32 0.0, %v1282
        %v1284 = vpop.f32.mrb[0].mxu0
        %v1285 = vpop.f32.mrb[0].mxu0
        %v1286 = vadd.f32 0.0, %v1285
        %v1287 = vpop.f32.mrb[0].mxu0
        %1288 = vmatprep.mubr.bf16.mxu0 0
        %1289 = vmatmul.mubr.bf16.gmra.mrb[0].mxu0 %v1232
        %v1290 = vpop.f32.mrb[0].mxu0
        %v1291 = vadd.f32 0.0, %v1290
        %v1292 = vpop.f32.mrb[0].mxu0
        %v1293 = vpop.f32.mrb[0].mxu0
        %v1294 = vadd.f32 0.0, %v1293
        %v1295 = vpop.f32.mrb[0].mxu0
        %1296 = vmatprep.mubr.bf16.mxu0 0
        %1297 = vmatmul.mubr.bf16.gmra.mrb[0].mxu0 %v1235
        %v1298 = vpop.f32.mrb[0].mxu0
        %v1299 = vadd.f32 0.0, %v1298
        %v1300 = vpop.f32.mrb[0].mxu0
        %v1301 = vpop.f32.mrb[0].mxu0
        %v1302 = vadd.f32 0.0, %v1301
        %v1303 = vpop.f32.mrb[0].mxu0
        %1304 = vdwg.mxu0
        %v1305 = vadd.f32 %v1146, %v1275
        %v1306 = vadd.f32 %v1147, %v1278
        %v1307 = vadd.f32 %v1148, %v1283
        %v1308 = vadd.f32 %v1149, %v1286
        %v1309 = vadd.f32 %v1150, %v1291
        %v1310 = vadd.f32 %v1151, %v1294
        %v1311 = vadd.f32 %v1152, %v1299
        %v1312 = vadd.f32 %v1153, %v1302
        %v1313 = vld [vmem:[#allocation2 + $0xa] sm:$0xff]
        %v1314 = vld [vmem:[#allocation2 + $0x12] sm:$0xff]
        %v1315 = vld [vmem:[#allocation2 + $0x1a] sm:$0xff]
        %v1316 = vld [vmem:[#allocation2 + $0x22] sm:$0xff]
        %v1317 = vld [vmem:[#allocation2 + $0x2a] sm:$0xff]
        %v1318 = vld [vmem:[#allocation2 + $0x32] sm:$0xff]
        %v1319 = vld [vmem:[#allocation2 + $0x3a] sm:$0xff]
        %v1320 = vld [vmem:[#allocation2 + $0x42] sm:$0xff]
        %s1321 = scalar_lea.vmem %s4, 320
        %v1322 = vld [vmem:[%s1321] sm:$0xff]
        %v1323 = vld [vmem:[%s1321 + $0x8] sm:$0xff]
        %v1324 = vld [vmem:[%s1321 + $0x10] sm:$0xff]
        %v1325 = vld [vmem:[%s1321 + $0x18] sm:$0xff]
        %v1326 = vld [vmem:[%s1321 + $0x20] sm:$0xff]
        %v1327 = vld [vmem:[%s1321 + $0x28] sm:$0xff]
        %v1328 = vld [vmem:[%s1321 + $0x30] sm:$0xff]
        %v1329 = vld [vmem:[%s1321 + $0x38] sm:$0xff]
        %1331 = vset.pattern.permute.xlu0 0
        %1332 = vperm.xlu0 %1331, %v1322
        %v1333 = vpop.permute.xlu0 %1332
        %1336 = vset.pattern.permute.xlu0 0
        %1337 = vperm.xlu0 %1336, %v1323
        %v1338 = vpop.permute.xlu0 %1337
        %1341 = vset.pattern.permute.xlu0 0
        %1342 = vperm.xlu0 %1341, %v1324
        %v1343 = vpop.permute.xlu0 %1342
        %1346 = vset.pattern.permute.xlu0 0
        %1347 = vperm.xlu0 %1346, %v1325
        %v1348 = vpop.permute.xlu0 %1347
        %1351 = vset.pattern.permute.xlu0 0
        %1352 = vperm.xlu0 %1351, %v1326
        %v1353 = vpop.permute.xlu0 %1352
        %1356 = vset.pattern.permute.xlu0 0
        %1357 = vperm.xlu0 %1356, %v1327
        %v1358 = vpop.permute.xlu0 %1357
        %1361 = vset.pattern.permute.xlu0 0
        %1362 = vperm.xlu0 %1361, %v1328
        %v1363 = vpop.permute.xlu0 %1362
        %1366 = vset.pattern.permute.xlu0 0
        %1367 = vperm.xlu0 %1366, %v1329
        %v1368 = vpop.permute.xlu0 %1367
        %v1370 = vmul.f32 %v1313, %v1333
        %v1371 = vmul.f32 %v1314, %v1338
        %v1372 = vmul.f32 %v1315, %v1343
        %v1373 = vmul.f32 %v1316, %v1348
        %v1374 = vmul.f32 %v1317, %v1353
        %v1375 = vmul.f32 %v1318, %v1358
        %v1376 = vmul.f32 %v1319, %v1363
        %v1377 = vmul.f32 %v1320, %v1368
        %v1378 = vpack.c.bf16 %v1371, %v1370
        %v1379 = vpack.c.bf16 %v1373, %v1372
        %v1380 = vpack.c.bf16 %v1375, %v1374
        %v1381 = vpack.c.bf16 %v1377, %v1376
        %s1382 = scalar_lea.vmem %s397, 20
        %v1383 = vld [vmem:[%s1382] sm:$0xf]
        %v1385 = vsel %vm497, %v1378, 0
        %v1388 = vsel %vm497, %v1379, 0
        %v1391 = vsel %vm497, %v1380, 0
        %v1394 = vsel %vm497, %v1381, 0
        %v1397 = vsel %vm600, %v1383, 0
        %1399 = vmatprep.subr.bf16.mxu0 0
        %1400 = vmatpush1.bf16.msra.mxu0 %v1397
        %1401 = vmatprep.subr.bf16.mxu0 0
        %1402 = vmatpush1.bf16.msra.mxu0 0
        %1403 = vmatprep.subr.bf16.mxu0 0
        %1404 = vmatpush1.bf16.msra.mxu0 0
        %1405 = vmatprep.subr.bf16.mxu0 0
        %1406 = vmatpush1.bf16.msra.mxu0 0
        %1407 = vmatprep.subr.bf16.mxu0 0
        %1408 = vmatpush1.bf16.msra.mxu0 0
        %1409 = vmatprep.subr.bf16.mxu0 0
        %1410 = vmatpush1.bf16.msra.mxu0 0
        %1411 = vmatprep.subr.bf16.mxu0 0
        %1412 = vmatpush1.bf16.msra.mxu0 0
        %1413 = vmatprep.subr.bf16.mxu0 0
        %1414 = vmatpush1.bf16.msra.mxu0 0
        %1415 = vmatprep.subr.bf16.mxu0 0
        %1416 = vmatpush1.bf16.msra.mxu0 0
        %1417 = vmatprep.subr.bf16.mxu0 0
        %1418 = vmatpush1.bf16.msra.mxu0 0
        %1419 = vmatprep.subr.bf16.mxu0 0
        %1420 = vmatpush1.bf16.msra.mxu0 0
        %1421 = vmatprep.subr.bf16.mxu0 0
        %1422 = vmatpush1.bf16.msra.mxu0 0
        %1423 = vmatprep.subr.bf16.mxu0 0
        %1424 = vmatpush1.bf16.msra.mxu0 0
        %1425 = vmatprep.subr.bf16.mxu0 0
        %1426 = vmatpush1.bf16.msra.mxu0 0
        %1427 = vmatprep.subr.bf16.mxu0 0
        %1428 = vmatpush1.bf16.msra.mxu0 0
        %1429 = vmatprep.subr.bf16.mxu0 0
        %1430 = vmatpush1.bf16.msra.mxu0 0
        %1431 = vmatprep.mubr.bf16.mxu0 0
        %1432 = vmatmul.mubr.bf16.gmra.mrb[0].mxu0 %v1385
        %v1433 = vpop.f32.mrb[0].mxu0
        %v1434 = vadd.f32 0.0, %v1433
        %v1435 = vpop.f32.mrb[0].mxu0
        %v1436 = vpop.f32.mrb[0].mxu0
        %v1437 = vadd.f32 0.0, %v1436
        %v1438 = vpop.f32.mrb[0].mxu0
        %1439 = vmatprep.mubr.bf16.mxu0 0
        %1440 = vmatmul.mubr.bf16.gmra.mrb[0].mxu0 %v1388
        %v1441 = vpop.f32.mrb[0].mxu0
        %v1442 = vadd.f32 0.0, %v1441
        %v1443 = vpop.f32.mrb[0].mxu0
        %v1444 = vpop.f32.mrb[0].mxu0
        %v1445 = vadd.f32 0.0, %v1444
        %v1446 = vpop.f32.mrb[0].mxu0
        %1447 = vmatprep.mubr.bf16.mxu0 0
        %1448 = vmatmul.mubr.bf16.gmra.mrb[0].mxu0 %v1391
        %v1449 = vpop.f32.mrb[0].mxu0
        %v1450 = vadd.f32 0.0, %v1449
        %v1451 = vpop.f32.mrb[0].mxu0
        %v1452 = vpop.f32.mrb[0].mxu0
        %v1453 = vadd.f32 0.0, %v1452
        %v1454 = vpop.f32.mrb[0].mxu0
        %1455 = vmatprep.mubr.bf16.mxu0 0
        %1456 = vmatmul.mubr.bf16.gmra.mrb[0].mxu0 %v1394
        %v1457 = vpop.f32.mrb[0].mxu0
        %v1458 = vadd.f32 0.0, %v1457
        %v1459 = vpop.f32.mrb[0].mxu0
        %v1460 = vpop.f32.mrb[0].mxu0
        %v1461 = vadd.f32 0.0, %v1460
        %v1462 = vpop.f32.mrb[0].mxu0
        %1463 = vdwg.mxu0
        %v1464 = vadd.f32 %v1305, %v1434
        %v1465 = vadd.f32 %v1306, %v1437
        %v1466 = vadd.f32 %v1307, %v1442
        %v1467 = vadd.f32 %v1308, %v1445
        %v1468 = vadd.f32 %v1309, %v1450
        %v1469 = vadd.f32 %v1310, %v1453
        %v1470 = vadd.f32 %v1311, %v1458
        %v1471 = vadd.f32 %v1312, %v1461
        %v1472 = vld [vmem:[#allocation2 + $0x10] sm:$0xff]
        %v1473 = vld [vmem:[#allocation2 + $0x18] sm:$0xff]
        %v1474 = vld [vmem:[#allocation2 + $0x20] sm:$0xff]
        %v1475 = vld [vmem:[#allocation2 + $0x28] sm:$0xff]
        %v1476 = vld [vmem:[#allocation2 + $0x30] sm:$0xff]
        %v1477 = vld [vmem:[#allocation2 + $0x38] sm:$0xff]
        %v1478 = vld [vmem:[#allocation2 + $0x40] sm:$0xff]
        %v1479 = vld [vmem:[#allocation2 + $0x48] sm:$0xff]
        %s1480 = scalar_lea.vmem %s4, 384
        %v1481 = vld [vmem:[%s1480] sm:$0xff]
        %v1482 = vld [vmem:[%s1480 + $0x8] sm:$0xff]
        %v1483 = vld [vmem:[%s1480 + $0x10] sm:$0xff]
        %v1484 = vld [vmem:[%s1480 + $0x18] sm:$0xff]
        %v1485 = vld [vmem:[%s1480 + $0x20] sm:$0xff]
        %v1486 = vld [vmem:[%s1480 + $0x28] sm:$0xff]
        %v1487 = vld [vmem:[%s1480 + $0x30] sm:$0xff]
        %v1488 = vld [vmem:[%s1480 + $0x38] sm:$0xff]
        %1490 = vset.pattern.permute.xlu0 0
        %1491 = vperm.xlu0 %1490, %v1481
        %v1492 = vpop.permute.xlu0 %1491
        %1495 = vset.pattern.permute.xlu0 0
        %1496 = vperm.xlu0 %1495, %v1482
        %v1497 = vpop.permute.xlu0 %1496
        %1500 = vset.pattern.permute.xlu0 0
        %1501 = vperm.xlu0 %1500, %v1483
        %v1502 = vpop.permute.xlu0 %1501
        %1505 = vset.pattern.permute.xlu0 0
        %1506 = vperm.xlu0 %1505, %v1484
        %v1507 = vpop.permute.xlu0 %1506
        %1510 = vset.pattern.permute.xlu0 0
        %1511 = vperm.xlu0 %1510, %v1485
        %v1512 = vpop.permute.xlu0 %1511
        %1515 = vset.pattern.permute.xlu0 0
        %1516 = vperm.xlu0 %1515, %v1486
        %v1517 = vpop.permute.xlu0 %1516
        %1520 = vset.pattern.permute.xlu0 0
        %1521 = vperm.xlu0 %1520, %v1487
        %v1522 = vpop.permute.xlu0 %1521
        %1525 = vset.pattern.permute.xlu0 0
        %1526 = vperm.xlu0 %1525, %v1488
        %v1527 = vpop.permute.xlu0 %1526
        %v1529 = vmul.f32 %v1472, %v1492
        %v1530 = vmul.f32 %v1473, %v1497
        %v1531 = vmul.f32 %v1474, %v1502
        %v1532 = vmul.f32 %v1475, %v1507
        %v1533 = vmul.f32 %v1476, %v1512
        %v1534 = vmul.f32 %v1477, %v1517
        %v1535 = vmul.f32 %v1478, %v1522
        %v1536 = vmul.f32 %v1479, %v1527
        %v1537 = vpack.c.bf16 %v1530, %v1529
        %v1538 = vpack.c.bf16 %v1532, %v1531
        %v1539 = vpack.c.bf16 %v1534, %v1533
        %v1540 = vpack.c.bf16 %v1536, %v1535
        %s1541 = scalar_lea.vmem %s397, 24
        %v1542 = vld [vmem:[%s1541] sm:$0xf]
        %v1544 = vsel %vm497, %v1537, 0
        %v1547 = vsel %vm497, %v1538, 0
        %v1550 = vsel %vm497, %v1539, 0
        %v1553 = vsel %vm497, %v1540, 0
        %v1556 = vsel %vm600, %v1542, 0
        %1558 = vmatprep.subr.bf16.mxu0 0
        %1559 = vmatpush1.bf16.msra.mxu0 %v1556
        %1560 = vmatprep.subr.bf16.mxu0 0
        %1561 = vmatpush1.bf16.msra.mxu0 0
        %1562 = vmatprep.subr.bf16.mxu0 0
        %1563 = vmatpush1.bf16.msra.mxu0 0
        %1564 = vmatprep.subr.bf16.mxu0 0
        %1565 = vmatpush1.bf16.msra.mxu0 0
        %1566 = vmatprep.subr.bf16.mxu0 0
        %1567 = vmatpush1.bf16.msra.mxu0 0
        %1568 = vmatprep.subr.bf16.mxu0 0
        %1569 = vmatpush1.bf16.msra.mxu0 0
        %1570 = vmatprep.subr.bf16.mxu0 0
        %1571 = vmatpush1.bf16.msra.mxu0 0
        %1572 = vmatprep.subr.bf16.mxu0 0
        %1573 = vmatpush1.bf16.msra.mxu0 0
        %1574 = vmatprep.subr.bf16.mxu0 0
        %1575 = vmatpush1.bf16.msra.mxu0 0
        %1576 = vmatprep.subr.bf16.mxu0 0
        %1577 = vmatpush1.bf16.msra.mxu0 0
        %1578 = vmatprep.subr.bf16.mxu0 0
        %1579 = vmatpush1.bf16.msra.mxu0 0
        %1580 = vmatprep.subr.bf16.mxu0 0
        %1581 = vmatpush1.bf16.msra.mxu0 0
        %1582 = vmatprep.subr.bf16.mxu0 0
        %1583 = vmatpush1.bf16.msra.mxu0 0
        %1584 = vmatprep.subr.bf16.mxu0 0
        %1585 = vmatpush1.bf16.msra.mxu0 0
        %1586 = vmatprep.subr.bf16.mxu0 0
        %1587 = vmatpush1.bf16.msra.mxu0 0
        %1588 = vmatprep.subr.bf16.mxu0 0
        %1589 = vmatpush1.bf16.msra.mxu0 0
        %1590 = vmatprep.mubr.bf16.mxu0 0
        %1591 = vmatmul.mubr.bf16.gmra.mrb[0].mxu0 %v1544
        %v1592 = vpop.f32.mrb[0].mxu0
        %v1593 = vadd.f32 0.0, %v1592
        %v1594 = vpop.f32.mrb[0].mxu0
        %v1595 = vpop.f32.mrb[0].mxu0
        %v1596 = vadd.f32 0.0, %v1595
        %v1597 = vpop.f32.mrb[0].mxu0
        %1598 = vmatprep.mubr.bf16.mxu0 0
        %1599 = vmatmul.mubr.bf16.gmra.mrb[0].mxu0 %v1547
        %v1600 = vpop.f32.mrb[0].mxu0
        %v1601 = vadd.f32 0.0, %v1600
        %v1602 = vpop.f32.mrb[0].mxu0
        %v1603 = vpop.f32.mrb[0].mxu0
        %v1604 = vadd.f32 0.0, %v1603
        %v1605 = vpop.f32.mrb[0].mxu0
        %1606 = vmatprep.mubr.bf16.mxu0 0
        %1607 = vmatmul.mubr.bf16.gmra.mrb[0].mxu0 %v1550
        %v1608 = vpop.f32.mrb[0].mxu0
        %v1609 = vadd.f32 0.0, %v1608
        %v1610 = vpop.f32.mrb[0].mxu0
        %v1611 = vpop.f32.mrb[0].mxu0
        %v1612 = vadd.f32 0.0, %v1611
        %v1613 = vpop.f32.mrb[0].mxu0
        %1614 = vmatprep.mubr.bf16.mxu0 0
        %1615 = vmatmul.mubr.bf16.gmra.mrb[0].mxu0 %v1553
        %v1616 = vpop.f32.mrb[0].mxu0
        %v1617 = vadd.f32 0.0, %v1616
        %v1618 = vpop.f32.mrb[0].mxu0
        %v1619 = vpop.f32.mrb[0].mxu0
        %v1620 = vadd.f32 0.0, %v1619
        %v1621 = vpop.f32.mrb[0].mxu0
        %1622 = vdwg.mxu0
        %v1623 = vadd.f32 %v1464, %v1593
        %v1624 = vadd.f32 %v1465, %v1596
        %v1625 = vadd.f32 %v1466, %v1601
        %v1626 = vadd.f32 %v1467, %v1604
        %v1627 = vadd.f32 %v1468, %v1609
        %v1628 = vadd.f32 %v1469, %v1612
        %v1629 = vadd.f32 %v1470, %v1617
        %v1630 = vadd.f32 %v1471, %v1620
        %v1631 = vld [vmem:[#allocation2 + $0x11] sm:$0xff]
        %v1632 = vld [vmem:[#allocation2 + $0x19] sm:$0xff]
        %v1633 = vld [vmem:[#allocation2 + $0x21] sm:$0xff]
        %v1634 = vld [vmem:[#allocation2 + $0x29] sm:$0xff]
        %v1635 = vld [vmem:[#allocation2 + $0x31] sm:$0xff]
        %v1636 = vld [vmem:[#allocation2 + $0x39] sm:$0xff]
        %v1637 = vld [vmem:[#allocation2 + $0x41] sm:$0xff]
        %v1638 = vld [vmem:[#allocation2 + $0x49] sm:$0xff]
        %s1639 = scalar_lea.vmem %s4, 448
        %v1640 = vld [vmem:[%s1639] sm:$0xff]
        %v1641 = vld [vmem:[%s1639 + $0x8] sm:$0xff]
        %v1642 = vld [vmem:[%s1639 + $0x10] sm:$0xff]
        %v1643 = vld [vmem:[%s1639 + $0x18] sm:$0xff]
        %v1644 = vld [vmem:[%s1639 + $0x20] sm:$0xff]
        %v1645 = vld [vmem:[%s1639 + $0x28] sm:$0xff]
        %v1646 = vld [vmem:[%s1639 + $0x30] sm:$0xff]
        %v1647 = vld [vmem:[%s1639 + $0x38] sm:$0xff]
        %1649 = vset.pattern.permute.xlu0 0
        %1650 = vperm.xlu0 %1649, %v1640
        %v1651 = vpop.permute.xlu0 %1650
        %1654 = vset.pattern.permute.xlu0 0
        %1655 = vperm.xlu0 %1654, %v1641
        %v1656 = vpop.permute.xlu0 %1655
        %1659 = vset.pattern.permute.xlu0 0
        %1660 = vperm.xlu0 %1659, %v1642
        %v1661 = vpop.permute.xlu0 %1660
        %1664 = vset.pattern.permute.xlu0 0
        %1665 = vperm.xlu0 %1664, %v1643
        %v1666 = vpop.permute.xlu0 %1665
        %1669 = vset.pattern.permute.xlu0 0
        %1670 = vperm.xlu0 %1669, %v1644
        %v1671 = vpop.permute.xlu0 %1670
        %1674 = vset.pattern.permute.xlu0 0
        %1675 = vperm.xlu0 %1674, %v1645
        %v1676 = vpop.permute.xlu0 %1675
        %1679 = vset.pattern.permute.xlu0 0
        %1680 = vperm.xlu0 %1679, %v1646
        %v1681 = vpop.permute.xlu0 %1680
        %1684 = vset.pattern.permute.xlu0 0
        %1685 = vperm.xlu0 %1684, %v1647
        %v1686 = vpop.permute.xlu0 %1685
        %v1688 = vmul.f32 %v1631, %v1651
        %v1689 = vmul.f32 %v1632, %v1656
        %v1690 = vmul.f32 %v1633, %v1661
        %v1691 = vmul.f32 %v1634, %v1666
        %v1692 = vmul.f32 %v1635, %v1671
        %v1693 = vmul.f32 %v1636, %v1676
        %v1694 = vmul.f32 %v1637, %v1681
        %v1695 = vmul.f32 %v1638, %v1686
        %v1696 = vpack.c.bf16 %v1689, %v1688
        %v1697 = vpack.c.bf16 %v1691, %v1690
        %v1698 = vpack.c.bf16 %v1693, %v1692
        %v1699 = vpack.c.bf16 %v1695, %v1694
        %s1700 = scalar_lea.vmem %s397, 28
        %v1701 = vld [vmem:[%s1700] sm:$0xf]
        %v1703 = vsel %vm497, %v1696, 0
        %v1706 = vsel %vm497, %v1697, 0
        %v1709 = vsel %vm497, %v1698, 0
        %v1712 = vsel %vm497, %v1699, 0
        %v1715 = vsel %vm600, %v1701, 0
        %1717 = vmatprep.subr.bf16.mxu0 0
        %1718 = vmatpush1.bf16.msra.mxu0 %v1715
        %1719 = vmatprep.subr.bf16.mxu0 0
        %1720 = vmatpush1.bf16.msra.mxu0 0
        %1721 = vmatprep.subr.bf16.mxu0 0
        %1722 = vmatpush1.bf16.msra.mxu0 0
        %1723 = vmatprep.subr.bf16.mxu0 0
        %1724 = vmatpush1.bf16.msra.mxu0 0
        %1725 = vmatprep.subr.bf16.mxu0 0
        %1726 = vmatpush1.bf16.msra.mxu0 0
        %1727 = vmatprep.subr.bf16.mxu0 0
        %1728 = vmatpush1.bf16.msra.mxu0 0
        %1729 = vmatprep.subr.bf16.mxu0 0
        %1730 = vmatpush1.bf16.msra.mxu0 0
        %1731 = vmatprep.subr.bf16.mxu0 0
        %1732 = vmatpush1.bf16.msra.mxu0 0
        %1733 = vmatprep.subr.bf16.mxu0 0
        %1734 = vmatpush1.bf16.msra.mxu0 0
        %1735 = vmatprep.subr.bf16.mxu0 0
        %1736 = vmatpush1.bf16.msra.mxu0 0
        %1737 = vmatprep.subr.bf16.mxu0 0
        %1738 = vmatpush1.bf16.msra.mxu0 0
        %1739 = vmatprep.subr.bf16.mxu0 0
        %1740 = vmatpush1.bf16.msra.mxu0 0
        %1741 = vmatprep.subr.bf16.mxu0 0
        %1742 = vmatpush1.bf16.msra.mxu0 0
        %1743 = vmatprep.subr.bf16.mxu0 0
        %1744 = vmatpush1.bf16.msra.mxu0 0
        %1745 = vmatprep.subr.bf16.mxu0 0
        %1746 = vmatpush1.bf16.msra.mxu0 0
        %1747 = vmatprep.subr.bf16.mxu0 0
        %1748 = vmatpush1.bf16.msra.mxu0 0
        %1749 = vmatprep.mubr.bf16.mxu0 0
        %1750 = vmatmul.mubr.bf16.gmra.mrb[0].mxu0 %v1703
        %v1751 = vpop.f32.mrb[0].mxu0
        %v1752 = vadd.f32 0.0, %v1751
        %v1753 = vpop.f32.mrb[0].mxu0
        %v1754 = vpop.f32.mrb[0].mxu0
        %v1755 = vadd.f32 0.0, %v1754
        %v1756 = vpop.f32.mrb[0].mxu0
        %1757 = vmatprep.mubr.bf16.mxu0 0
        %1758 = vmatmul.mubr.bf16.gmra.mrb[0].mxu0 %v1706
        %v1759 = vpop.f32.mrb[0].mxu0
        %v1760 = vadd.f32 0.0, %v1759
        %v1761 = vpop.f32.mrb[0].mxu0
        %v1762 = vpop.f32.mrb[0].mxu0
        %v1763 = vadd.f32 0.0, %v1762
        %v1764 = vpop.f32.mrb[0].mxu0
        %1765 = vmatprep.mubr.bf16.mxu0 0
        %1766 = vmatmul.mubr.bf16.gmra.mrb[0].mxu0 %v1709
        %v1767 = vpop.f32.mrb[0].mxu0
        %v1768 = vadd.f32 0.0, %v1767
        %v1769 = vpop.f32.mrb[0].mxu0
        %v1770 = vpop.f32.mrb[0].mxu0
        %v1771 = vadd.f32 0.0, %v1770
        %v1772 = vpop.f32.mrb[0].mxu0
        %1773 = vmatprep.mubr.bf16.mxu0 0
        %1774 = vmatmul.mubr.bf16.gmra.mrb[0].mxu0 %v1712
        %v1775 = vpop.f32.mrb[0].mxu0
        %v1776 = vadd.f32 0.0, %v1775
        %v1777 = vpop.f32.mrb[0].mxu0
        %v1778 = vpop.f32.mrb[0].mxu0
        %v1779 = vadd.f32 0.0, %v1778
        %v1780 = vpop.f32.mrb[0].mxu0
        %1781 = vdwg.mxu0
        %v1782 = vadd.f32 %v1623, %v1752
        %v1783 = vadd.f32 %v1624, %v1755
        %v1784 = vadd.f32 %v1625, %v1760
        %v1785 = vadd.f32 %v1626, %v1763
        %v1786 = vadd.f32 %v1627, %v1768
        %v1787 = vadd.f32 %v1628, %v1771
        %v1788 = vadd.f32 %v1629, %v1776
        %v1789 = vadd.f32 %v1630, %v1779
        %v1790 = vld [vmem:[#allocation2 + $0x12] sm:$0xff]
        %v1791 = vld [vmem:[#allocation2 + $0x1a] sm:$0xff]
        %v1792 = vld [vmem:[#allocation2 + $0x22] sm:$0xff]
        %v1793 = vld [vmem:[#allocation2 + $0x2a] sm:$0xff]
        %v1794 = vld [vmem:[#allocation2 + $0x32] sm:$0xff]
        %v1795 = vld [vmem:[#allocation2 + $0x3a] sm:$0xff]
        %v1796 = vld [vmem:[#allocation2 + $0x42] sm:$0xff]
        %v1797 = vld [vmem:[#allocation2 + $0x4a] sm:$0xff]
        %s1798 = scalar_lea.vmem %s4, 512
        %v1799 = vld [vmem:[%s1798] sm:$0xff]
        %v1800 = vld [vmem:[%s1798 + $0x8] sm:$0xff]
        %v1801 = vld [vmem:[%s1798 + $0x10] sm:$0xff]
        %v1802 = vld [vmem:[%s1798 + $0x18] sm:$0xff]
        %v1803 = vld [vmem:[%s1798 + $0x20] sm:$0xff]
        %v1804 = vld [vmem:[%s1798 + $0x28] sm:$0xff]
        %v1805 = vld [vmem:[%s1798 + $0x30] sm:$0xff]
        %v1806 = vld [vmem:[%s1798 + $0x38] sm:$0xff]
        %1808 = vset.pattern.permute.xlu0 0
        %1809 = vperm.xlu0 %1808, %v1799
        %v1810 = vpop.permute.xlu0 %1809
        %1813 = vset.pattern.permute.xlu0 0
        %1814 = vperm.xlu0 %1813, %v1800
        %v1815 = vpop.permute.xlu0 %1814
        %1818 = vset.pattern.permute.xlu0 0
        %1819 = vperm.xlu0 %1818, %v1801
        %v1820 = vpop.permute.xlu0 %1819
        %1823 = vset.pattern.permute.xlu0 0
        %1824 = vperm.xlu0 %1823, %v1802
        %v1825 = vpop.permute.xlu0 %1824
        %1828 = vset.pattern.permute.xlu0 0
        %1829 = vperm.xlu0 %1828, %v1803
        %v1830 = vpop.permute.xlu0 %1829
        %1833 = vset.pattern.permute.xlu0 0
        %1834 = vperm.xlu0 %1833, %v1804
        %v1835 = vpop.permute.xlu0 %1834
        %1838 = vset.pattern.permute.xlu0 0
        %1839 = vperm.xlu0 %1838, %v1805
        %v1840 = vpop.permute.xlu0 %1839
        %1843 = vset.pattern.permute.xlu0 0
        %1844 = vperm.xlu0 %1843, %v1806
        %v1845 = vpop.permute.xlu0 %1844
        %v1847 = vmul.f32 %v1790, %v1810
        %v1848 = vmul.f32 %v1791, %v1815
        %v1849 = vmul.f32 %v1792, %v1820
        %v1850 = vmul.f32 %v1793, %v1825
        %v1851 = vmul.f32 %v1794, %v1830
        %v1852 = vmul.f32 %v1795, %v1835
        %v1853 = vmul.f32 %v1796, %v1840
        %v1854 = vmul.f32 %v1797, %v1845
        %v1855 = vpack.c.bf16 %v1848, %v1847
        %v1856 = vpack.c.bf16 %v1850, %v1849
        %v1857 = vpack.c.bf16 %v1852, %v1851
        %v1858 = vpack.c.bf16 %v1854, %v1853
        %s1859 = scalar_lea.vmem %s397, 32
        %v1860 = vld [vmem:[%s1859] sm:$0xf]
        %v1862 = vsel %vm497, %v1855, 0
        %v1865 = vsel %vm497, %v1856, 0
        %v1868 = vsel %vm497, %v1857, 0
        %v1871 = vsel %vm497, %v1858, 0
        %v1874 = vsel %vm600, %v1860, 0
        %1876 = vmatprep.subr.bf16.mxu0 0
        %1877 = vmatpush1.bf16.msra.mxu0 %v1874
        %1878 = vmatprep.subr.bf16.mxu0 0
        %1879 = vmatpush1.bf16.msra.mxu0 0
        %1880 = vmatprep.subr.bf16.mxu0 0
        %1881 = vmatpush1.bf16.msra.mxu0 0
        %1882 = vmatprep.subr.bf16.mxu0 0
        %1883 = vmatpush1.bf16.msra.mxu0 0
        %1884 = vmatprep.subr.bf16.mxu0 0
        %1885 = vmatpush1.bf16.msra.mxu0 0
        %1886 = vmatprep.subr.bf16.mxu0 0
        %1887 = vmatpush1.bf16.msra.mxu0 0
        %1888 = vmatprep.subr.bf16.mxu0 0
        %1889 = vmatpush1.bf16.msra.mxu0 0
        %1890 = vmatprep.subr.bf16.mxu0 0
        %1891 = vmatpush1.bf16.msra.mxu0 0
        %1892 = vmatprep.subr.bf16.mxu0 0
        %1893 = vmatpush1.bf16.msra.mxu0 0
        %1894 = vmatprep.subr.bf16.mxu0 0
        %1895 = vmatpush1.bf16.msra.mxu0 0
        %1896 = vmatprep.subr.bf16.mxu0 0
        %1897 = vmatpush1.bf16.msra.mxu0 0
        %1898 = vmatprep.subr.bf16.mxu0 0
        %1899 = vmatpush1.bf16.msra.mxu0 0
        %1900 = vmatprep.subr.bf16.mxu0 0
        %1901 = vmatpush1.bf16.msra.mxu0 0
        %1902 = vmatprep.subr.bf16.mxu0 0
        %1903 = vmatpush1.bf16.msra.mxu0 0
        %1904 = vmatprep.subr.bf16.mxu0 0
        %1905 = vmatpush1.bf16.msra.mxu0 0
        %1906 = vmatprep.subr.bf16.mxu0 0
        %1907 = vmatpush1.bf16.msra.mxu0 0
        %1908 = vmatprep.mubr.bf16.mxu0 0
        %1909 = vmatmul.mubr.bf16.gmra.mrb[0].mxu0 %v1862
        %v1910 = vpop.f32.mrb[0].mxu0
        %v1911 = vadd.f32 0.0, %v1910
        %v1912 = vpop.f32.mrb[0].mxu0
        %v1913 = vpop.f32.mrb[0].mxu0
        %v1914 = vadd.f32 0.0, %v1913
        %v1915 = vpop.f32.mrb[0].mxu0
        %1916 = vmatprep.mubr.bf16.mxu0 0
        %1917 = vmatmul.mubr.bf16.gmra.mrb[0].mxu0 %v1865
        %v1918 = vpop.f32.mrb[0].mxu0
        %v1919 = vadd.f32 0.0, %v1918
        %v1920 = vpop.f32.mrb[0].mxu0
        %v1921 = vpop.f32.mrb[0].mxu0
        %v1922 = vadd.f32 0.0, %v1921
        %v1923 = vpop.f32.mrb[0].mxu0
        %1924 = vmatprep.mubr.bf16.mxu0 0
        %1925 = vmatmul.mubr.bf16.gmra.mrb[0].mxu0 %v1868
        %v1926 = vpop.f32.mrb[0].mxu0
        %v1927 = vadd.f32 0.0, %v1926
        %v1928 = vpop.f32.mrb[0].mxu0
        %v1929 = vpop.f32.mrb[0].mxu0
        %v1930 = vadd.f32 0.0, %v1929
        %v1931 = vpop.f32.mrb[0].mxu0
        %1932 = vmatprep.mubr.bf16.mxu0 0
        %1933 = vmatmul.mubr.bf16.gmra.mrb[0].mxu0 %v1871
        %v1934 = vpop.f32.mrb[0].mxu0
        %v1935 = vadd.f32 0.0, %v1934
        %v1936 = vpop.f32.mrb[0].mxu0
        %v1937 = vpop.f32.mrb[0].mxu0
        %v1938 = vadd.f32 0.0, %v1937
        %v1939 = vpop.f32.mrb[0].mxu0
        %1940 = vdwg.mxu0
        %v1941 = vadd.f32 %v1782, %v1911
        %v1942 = vadd.f32 %v1783, %v1914
        %v1943 = vadd.f32 %v1784, %v1919
        %v1944 = vadd.f32 %v1785, %v1922
        %v1945 = vadd.f32 %v1786, %v1927
        %v1946 = vadd.f32 %v1787, %v1930
        %v1947 = vadd.f32 %v1788, %v1935
        %v1948 = vadd.f32 %v1789, %v1938
        %1949 = vst.msk [vmem:[#allocation3] sm:$0xff] %vm497, %v1941
        %1950 = vst.msk [vmem:[#allocation3 + $0x8] sm:$0xff] %vm497, %v1942
        %1951 = vst.msk [vmem:[#allocation3 + $0x10] sm:$0xff] %vm497, %v1943
        %1952 = vst.msk [vmem:[#allocation3 + $0x18] sm:$0xff] %vm497, %v1944
        %1953 = vst.msk [vmem:[#allocation3 + $0x20] sm:$0xff] %vm497, %v1945
        %1954 = vst.msk [vmem:[#allocation3 + $0x28] sm:$0xff] %vm497, %v1946
        %1955 = vst.msk [vmem:[#allocation3 + $0x30] sm:$0xff] %vm497, %v1947
        %1956 = vst.msk [vmem:[#allocation3 + $0x38] sm:$0xff] %vm497, %v1948
      $region48: #{bottleneck_forward.5} parent=39 // pred_fallthru
        _
      %p1957 = scmp.eq.s32.totalorder %s26, 2
      // Predicated region
      $region49: #{bottleneck_forward.5} parent=39 // pred_check
        %p1958 = pneg %p1957
      $region50: #{bottleneck_forward.5} parent=39 // pred_check_branch
        %1960 = sbr.rel (%p1958) target = $region52
      $region51: #{bottleneck_forward.5} parent=39 // pred_region
        %v1961 = vld [vmem:[#allocation3] sm:$0xff]
        %v1962 = vld [vmem:[#allocation3 + $0x8] sm:$0xff]
        %v1963 = vld [vmem:[#allocation3 + $0x10] sm:$0xff]
        %v1964 = vld [vmem:[#allocation3 + $0x18] sm:$0xff]
        %v1965 = vld [vmem:[#allocation3 + $0x20] sm:$0xff]
        %v1966 = vld [vmem:[#allocation3 + $0x28] sm:$0xff]
        %v1967 = vld [vmem:[#allocation3 + $0x30] sm:$0xff]
        %v1968 = vld [vmem:[#allocation3 + $0x38] sm:$0xff]
        %v1969 = vpack.c.bf16 %v1962, %v1961
        %v1970 = vpack.c.bf16 %v1964, %v1963
        %v1971 = vpack.c.bf16 %v1966, %v1965
        %v1972 = vpack.c.bf16 %v1968, %v1967
        %v1977 = vunpack.c.l.b16 %v1969
        %v1978 = vunpack.c.h.b16 %v1969
        %v1979 = vunpack.c.l.b16 %v1970
        %v1980 = vunpack.c.h.b16 %v1970
        %v1981 = vunpack.c.l.b16 %v1971
        %v1982 = vunpack.c.h.b16 %v1971
        %v1983 = vunpack.c.l.b16 %v1972
        %v1984 = vunpack.c.h.b16 %v1972
        %v1985 = vpack.c.b16 %v1977, %v1977
        %v1986 = vpack.c.b16 %v1978, %v1978
        %v1987 = vpack.c.b16 %v1979, %v1979
        %v1988 = vpack.c.b16 %v1980, %v1980
        %v1989 = vpack.c.b16 %v1981, %v1981
        %v1990 = vpack.c.b16 %v1982, %v1982
        %v1991 = vpack.c.b16 %v1983, %v1983
        %v1992 = vpack.c.b16 %v1984, %v1984
        %vm2001 = vcmask 60416
        %2002 = vst.msk [vmem:[%s404] sm:$0xf] %vm2001, %v1985
        %2003 = vst.msk [vmem:[%s404 + $0x4] sm:$0xf] %vm2001, %v1986
        %2004 = vst.msk [vmem:[%s404 + $0x8] sm:$0xf] %vm2001, %v1987
        %2005 = vst.msk [vmem:[%s404 + $0xc] sm:$0xf] %vm2001, %v1988
        %2006 = vst.msk [vmem:[%s404 + $0x10] sm:$0xf] %vm2001, %v1989
        %2007 = vst.msk [vmem:[%s404 + $0x14] sm:$0xf] %vm2001, %v1990
        %2008 = vst.msk [vmem:[%s404 + $0x18] sm:$0xf] %vm2001, %v1991
        %2009 = vst.msk [vmem:[%s404 + $0x1c] sm:$0xf] %vm2001, %v1992
        %vm2010 = vcmask 64512
        %v2011 = vsel %vm2010, %v1961, 0.0
        %v2012 = vsel %vm2010, %v1962, 0.0
        %v2013 = vadd.f32 %v2011, %v2012
        %v2014 = vsel %vm2010, %v1963, 0.0
        %v2015 = vadd.f32 %v2013, %v2014
        %v2016 = vsel %vm2010, %v1964, 0.0
        %v2017 = vadd.f32 %v2015, %v2016
        %v2018 = vsel %vm2010, %v1965, 0.0
        %v2019 = vadd.f32 %v2017, %v2018
        %v2020 = vsel %vm2010, %v1966, 0.0
        %v2021 = vadd.f32 %v2019, %v2020
        %v2022 = vsel %vm2010, %v1967, 0.0
        %v2023 = vadd.f32 %v2021, %v2022
        %v2024 = vsel %vm2010, %v1968, 0.0
        %v2025 = vadd.f32 %v2023, %v2024
        %v2026 = vrot.slane %v2025, 4
        %v2027 = vadd.f32 %v2025, %v2026
        %v2028 = vrot.slane %v2027, 2
        %v2029 = vadd.f32 %v2027, %v2028
        %v2030 = vrot.slane %v2029, 1
        %v2031 = vadd.f32 %v2029, %v2030
        %vm2032 = vcmask 57344
        %2033 = vst.msk [vmem:[%s411] sm:$0x1] %vm2032, %v2031
        %v2034 = vmul.f32 %v1961, %v1961
        %v2035 = vmul.f32 %v1962, %v1962
        %v2036 = vmul.f32 %v1963, %v1963
        %v2037 = vmul.f32 %v1964, %v1964
        %v2038 = vmul.f32 %v1965, %v1965
        %v2039 = vmul.f32 %v1966, %v1966
        %v2040 = vmul.f32 %v1967, %v1967
        %v2041 = vmul.f32 %v1968, %v1968
        %v2042 = vsel %vm2010, %v2034, 0.0
        %v2043 = vsel %vm2010, %v2035, 0.0
        %v2044 = vadd.f32 %v2042, %v2043
        %v2045 = vsel %vm2010, %v2036, 0.0
        %v2046 = vadd.f32 %v2044, %v2045
        %v2047 = vsel %vm2010, %v2037, 0.0
        %v2048 = vadd.f32 %v2046, %v2047
        %v2049 = vsel %vm2010, %v2038, 0.0
        %v2050 = vadd.f32 %v2048, %v2049
        %v2051 = vsel %vm2010, %v2039, 0.0
        %v2052 = vadd.f32 %v2050, %v2051
        %v2053 = vsel %vm2010, %v2040, 0.0
        %v2054 = vadd.f32 %v2052, %v2053
        %v2055 = vsel %vm2010, %v2041, 0.0
        %v2056 = vadd.f32 %v2054, %v2055
        %v2057 = vrot.slane %v2056, 4
        %v2058 = vadd.f32 %v2056, %v2057
        %v2059 = vrot.slane %v2058, 2
        %v2060 = vadd.f32 %v2058, %v2059
        %v2061 = vrot.slane %v2060, 1
        %v2062 = vadd.f32 %v2060, %v2061
        %2063 = vst.msk [vmem:[%s418] sm:$0x1] %vm2032, %v2062
      $region52: #{bottleneck_forward.5} parent=39 // pred_fallthru
        _
      %s2064 = smul.u32 %s24, 8
      %s2065 = sadd.s32 %s2064, %s25
      %p2066 = scmp.lt.s32.totalorder %s2065, 15
      %s2067 = scalar_select %p2066, %s2065, 15
      %s2068 = smul.addr %s2067, 8
      %s2069 = smul.addr %s2068, 4
      %s2070 = scalar_lea.vmem %s5, %s2069
      %s2071 = smul.u32 %s24, 8
      %s2072 = sadd.s32 %s2071, %s25
      %p2073 = scmp.lt.s32.totalorder %s2072, 15
      %s2074 = scalar_select %p2073, %s2072, 15
      %s2075 = scalar_lea.vmem %s6, %s2074
      %s2076 = smul.u32 %s24, 8
      %s2077 = sadd.s32 %s2076, %s25
      %p2078 = scmp.lt.s32.totalorder %s2077, 15
      %s2079 = scalar_select %p2078, %s2077, 15
      %s2080 = scalar_lea.vmem %s7, %s2079
      // Predicated region
      $region53: #{bottleneck_forward.5} parent=39 // pred_check
        %p2081 = pneg %p191
      $region54: #{bottleneck_forward.5} parent=39 // pred_check_branch
        %2083 = sbr.rel (%p2081) target = $region56
      $region55: #{bottleneck_forward.5} parent=39 // pred_region
        %s2084 = smul.u32 %s24, 8
        %s2085 = sadd.s32 %s2084, %s25
      $region56: #{bottleneck_forward.5} parent=39 // pred_fallthru
        _
      // Predicated region
      $region57: #{bottleneck_forward.5} parent=39 // pred_check
        %p2086 = pneg %p221
      $region58: #{bottleneck_forward.5} parent=39 // pred_check_branch
        %2088 = sbr.rel (%p2086) target = $region60
      $region59: #{bottleneck_forward.5} parent=39 // pred_region
        %s2089 = smul.u32 %s24, 8
        %s2090 = sadd.s32 %s2089, %s25
      $region60: #{bottleneck_forward.5} parent=39 // pred_fallthru
        _
      // Predicated region
      $region61: #{bottleneck_forward.5} parent=39 // pred_check
        %p2091 = pneg %p251
      $region62: #{bottleneck_forward.5} parent=39 // pred_check_branch
        %2093 = sbr.rel (%p2091) target = $region64
      $region63: #{bottleneck_forward.5} parent=39 // pred_region
        %s2094 = smul.u32 %s24, 8
        %s2095 = sadd.s32 %s2094, %s25
      $region64: #{bottleneck_forward.5} parent=39 // pred_fallthru
        _
    $region40: #{bottleneck_forward.5} parent=5 // pred_fallthru
      _
    %p2096 = scmp.le.s32.totalorder 2, %s14
    // Predicated region
    $region65: #{bottleneck_forward.5} parent=5 // pred_check
      %p2097 = pneg %p2096
    $region66: #{bottleneck_forward.5} parent=5 // pred_check_branch
      %2099 = sbr.rel (%p2097) target = $region68
    $region67: #{bottleneck_forward.5} parent=5 // pred_region
      %s2100 = ssub.s32 %s14, 2
      // Predicated region
      $region69: #{bottleneck_forward.5} parent=67 // pred_check
        %p2101 = pneg %p197
      $region70: #{bottleneck_forward.5} parent=67 // pred_check_branch
        %2103 = sbr.rel (%p2101) target = $region72
      $region71: #{bottleneck_forward.5} parent=67 // pred_region
        %s2104 = smul.u32 %s27, 8
        %s2105 = sadd.s32 %s2104, %s28
        %p2106 = scmp.lt.s32.totalorder %s2105, 15
        %s2107 = scalar_select %p2106, %s2105, 15
        %s2108 = smul.addr %s2107, 8
        %s2109 = smul.addr %s2108, 4
        %s2110 = scalar_lea.vmem %s5, %s2109
      $region72: #{bottleneck_forward.5} parent=67 // pred_fallthru
        _
      // Predicated region
      $region73: #{bottleneck_forward.5} parent=67 // pred_check
        %p2111 = pneg %p227
      $region74: #{bottleneck_forward.5} parent=67 // pred_check_branch
        %2113 = sbr.rel (%p2111) target = $region76
      $region75: #{bottleneck_forward.5} parent=67 // pred_region
        %s2114 = smul.u32 %s27, 8
        %s2115 = sadd.s32 %s2114, %s28
        %p2116 = scmp.lt.s32.totalorder %s2115, 15
        %s2117 = scalar_select %p2116, %s2115, 15
        %s2118 = scalar_lea.vmem %s6, %s2117
      $region76: #{bottleneck_forward.5} parent=67 // pred_fallthru
        _
      // Predicated region
      $region77: #{bottleneck_forward.5} parent=67 // pred_check
        %p2119 = pneg %p257
      $region78: #{bottleneck_forward.5} parent=67 // pred_check_branch
        %2121 = sbr.rel (%p2119) target = $region80
      $region79: #{bottleneck_forward.5} parent=67 // pred_region
        %s2122 = smul.u32 %s27, 8
        %s2123 = sadd.s32 %s2122, %s28
        %p2124 = scmp.lt.s32.totalorder %s2123, 15
        %s2125 = scalar_select %p2124, %s2123, 15
        %s2126 = scalar_lea.vmem %s7, %s2125
      $region80: #{bottleneck_forward.5} parent=67 // pred_fallthru
        _
    $region68: #{bottleneck_forward.5} parent=5 // pred_fallthru
      _
  $region6: #{bottleneck_forward.5} parent=0 // loop_footer
    %s18 = sadd.s32 1, %s14
  $region7: #{bottleneck_forward.5} parent=0 // loop_footer_branch
    %13 = sbr.rel target = $region3
  $region8: #{bottleneck_forward.5} parent=0 // loop_exit
    _

// kernel: bottleneck_forward.7
$region0: #{bottleneck_forward.7}
  #allocation0 [shape = 'u32[]', space=smem, size = 0x4, offset = 0x4, fixed_abs, tag = 'smem constant byte address 0x4 - core index']
  #allocation1 [shape = 'u32[144,128]{1,0:T(1,128)}', space=vmem, size = 0x12000, scoped, tag = 'internal scratch']
  %s0 = inlined_call_operand.vmem [shape: bf16[256,128], index: 0, kind: input, shape index: {}]
  %s1 = inlined_call_operand.vmem [shape: bf16[256,128], index: 1, kind: input, shape index: {}]
  %s2 = inlined_call_operand.vmem [shape: f32[1,128], index: 2, kind: input, shape index: {}]
  %s3 = inlined_call_operand.vmem [shape: f32[1,128], index: 3, kind: input, shape index: {}]
  %s4 = inlined_call_operand.vmem [shape: f32[256,128], index: 4, kind: output, shape index: {}]
  %s5 = sld [smem:[#allocation0]]
  $region26: #{bottleneck_forward.7} parent=0
    _
  %s7 = ssub.s32 1, %s5
  %s8 = scalar_select 0, %s7, %s5
  // Predicated region
  $region2: #{bottleneck_forward.7} parent=0 // pred_check
    _
  $region3: #{bottleneck_forward.7} parent=0 // pred_check_branch
    %10 = sbr.rel (0) target = $region5
  $region4: #{bottleneck_forward.7} parent=0 // pred_region
    _
  $region5: #{bottleneck_forward.7} parent=0 // pred_fallthru
    _
  // Predicated region
  $region6: #{bottleneck_forward.7} parent=0 // pred_check
    _
  $region7: #{bottleneck_forward.7} parent=0 // pred_check_branch
    %12 = sbr.rel (0) target = $region9
  $region8: #{bottleneck_forward.7} parent=0 // pred_region
    _
  $region9: #{bottleneck_forward.7} parent=0 // pred_fallthru
    _
  // Predicated region
  $region10: #{bottleneck_forward.7} parent=0 // pred_check
    _
  $region11: #{bottleneck_forward.7} parent=0 // pred_check_branch
    %14 = sbr.rel (0) target = $region13
  $region12: #{bottleneck_forward.7} parent=0 // pred_region
    _
  $region13: #{bottleneck_forward.7} parent=0 // pred_fallthru
    _
  // Predicated region
  $region14: #{bottleneck_forward.7} parent=0 // pred_check
    _
  $region15: #{bottleneck_forward.7} parent=0 // pred_check_branch
    %16 = sbr.rel (0) target = $region17
  $region16: #{bottleneck_forward.7} parent=0 // pred_region
    _
  $region17: #{bottleneck_forward.7} parent=0 // pred_fallthru
    _
  %v17 = vld [vmem:[%s0] sm:$0xf]
  %v18 = vld [vmem:[%s0 + $0x4] sm:$0xf]
  %v19 = vld [vmem:[%s0 + $0x8] sm:$0xf]
  %v20 = vld [vmem:[%s0 + $0xc] sm:$0xf]
  %v21 = vld [vmem:[%s0 + $0x10] sm:$0xf]
  %v22 = vld [vmem:[%s0 + $0x14] sm:$0xf]
  %v23 = vld [vmem:[%s0 + $0x18] sm:$0xf]
  %v24 = vld [vmem:[%s0 + $0x1c] sm:$0xf]
  %v25 = vld [vmem:[%s0 + $0x20] sm:$0xf]
  %v26 = vld [vmem:[%s0 + $0x24] sm:$0xf]
  %v27 = vld [vmem:[%s0 + $0x28] sm:$0xf]
  %v28 = vld [vmem:[%s0 + $0x2c] sm:$0xf]
  %v29 = vld [vmem:[%s0 + $0x30] sm:$0xf]
  %v30 = vld [vmem:[%s0 + $0x34] sm:$0xf]
  %v31 = vld [vmem:[%s0 + $0x38] sm:$0xf]
  %v32 = vld [vmem:[%s0 + $0x3c] sm:$0xf]
  %v33 = vld [vmem:[%s0 + $0x40] sm:$0xf]
  %v34 = vld [vmem:[%s0 + $0x44] sm:$0xf]
  %v35 = vld [vmem:[%s0 + $0x48] sm:$0xf]
  %v36 = vld [vmem:[%s0 + $0x4c] sm:$0xf]
  %v37 = vld [vmem:[%s0 + $0x50] sm:$0xf]
  %v38 = vld [vmem:[%s0 + $0x54] sm:$0xf]
  %v39 = vld [vmem:[%s0 + $0x58] sm:$0xf]
  %v40 = vld [vmem:[%s0 + $0x5c] sm:$0xf]
  %v41 = vld [vmem:[%s0 + $0x60] sm:$0xf]
  %v42 = vld [vmem:[%s0 + $0x64] sm:$0xf]
  %v43 = vld [vmem:[%s0 + $0x68] sm:$0xf]
  %v44 = vld [vmem:[%s0 + $0x6c] sm:$0xf]
  %v45 = vld [vmem:[%s0 + $0x70] sm:$0xf]
  %v46 = vld [vmem:[%s0 + $0x74] sm:$0xf]
  %v47 = vld [vmem:[%s0 + $0x78] sm:$0xf]
  %v48 = vld [vmem:[%s0 + $0x7c] sm:$0xf]
  %v49 = vunpack.c.l.bf16 %v17
  %v50 = vunpack.c.l.bf16 %v18
  %v51 = vunpack.c.l.bf16 %v19
  %v52 = vunpack.c.l.bf16 %v20
  %v53 = vunpack.c.l.bf16 %v21
  %v54 = vunpack.c.l.bf16 %v22
  %v55 = vunpack.c.l.bf16 %v23
  %v56 = vunpack.c.l.bf16 %v24
  %v57 = vunpack.c.l.bf16 %v25
  %v58 = vunpack.c.l.bf16 %v26
  %v59 = vunpack.c.l.bf16 %v27
  %v60 = vunpack.c.l.bf16 %v28
  %v61 = vunpack.c.l.bf16 %v29
  %v62 = vunpack.c.l.bf16 %v30
  %v63 = vunpack.c.l.bf16 %v31
  %v64 = vunpack.c.l.bf16 %v32
  %v65 = vunpack.c.l.bf16 %v33
  %v66 = vunpack.c.l.bf16 %v34
  %v67 = vunpack.c.l.bf16 %v35
  %v68 = vunpack.c.l.bf16 %v36
  %v69 = vunpack.c.l.bf16 %v37
  %v70 = vunpack.c.l.bf16 %v38
  %v71 = vunpack.c.l.bf16 %v39
  %v72 = vunpack.c.l.bf16 %v40
  %v73 = vunpack.c.l.bf16 %v41
  %v74 = vunpack.c.l.bf16 %v42
  %v75 = vunpack.c.l.bf16 %v43
  %v76 = vunpack.c.l.bf16 %v44
  %v77 = vunpack.c.l.bf16 %v45
  %v78 = vunpack.c.l.bf16 %v46
  %v79 = vunpack.c.l.bf16 %v47
  %v80 = vunpack.c.l.bf16 %v48
  %v81 = vld [vmem:[%s1] sm:$0xf]
  %v82 = vld [vmem:[%s1 + $0x4] sm:$0xf]
  %v83 = vld [vmem:[%s1 + $0x8] sm:$0xf]
  %v84 = vld [vmem:[%s1 + $0xc] sm:$0xf]
  %v85 = vld [vmem:[%s1 + $0x10] sm:$0xf]
  %v86 = vld [vmem:[%s1 + $0x14] sm:$0xf]
  %v87 = vld [vmem:[%s1 + $0x18] sm:$0xf]
  %v88 = vld [vmem:[%s1 + $0x1c] sm:$0xf]
  %v89 = vld [vmem:[%s1 + $0x20] sm:$0xf]
  %v90 = vld [vmem:[%s1 + $0x24] sm:$0xf]
  %v91 = vld [vmem:[%s1 + $0x28] sm:$0xf]
  %v92 = vld [vmem:[%s1 + $0x2c] sm:$0xf]
  %v93 = vld [vmem:[%s1 + $0x30] sm:$0xf]
  %v94 = vld [vmem:[%s1 + $0x34] sm:$0xf]
  %v95 = vld [vmem:[%s1 + $0x38] sm:$0xf]
  %v96 = vld [vmem:[%s1 + $0x3c] sm:$0xf]
  %v97 = vld [vmem:[%s1 + $0x40] sm:$0xf]
  %v98 = vld [vmem:[%s1 + $0x44] sm:$0xf]
  %v99 = vld [vmem:[%s1 + $0x48] sm:$0xf]
  %v100 = vld [vmem:[%s1 + $0x4c] sm:$0xf]
  %v101 = vld [vmem:[%s1 + $0x50] sm:$0xf]
  %v102 = vld [vmem:[%s1 + $0x54] sm:$0xf]
  %v103 = vld [vmem:[%s1 + $0x58] sm:$0xf]
  %v104 = vld [vmem:[%s1 + $0x5c] sm:$0xf]
  %v105 = vld [vmem:[%s1 + $0x60] sm:$0xf]
  %v106 = vld [vmem:[%s1 + $0x64] sm:$0xf]
  %v107 = vld [vmem:[%s1 + $0x68] sm:$0xf]
  %v108 = vld [vmem:[%s1 + $0x6c] sm:$0xf]
  %v109 = vld [vmem:[%s1 + $0x70] sm:$0xf]
  %v110 = vld [vmem:[%s1 + $0x74] sm:$0xf]
  %v111 = vld [vmem:[%s1 + $0x78] sm:$0xf]
  %v112 = vld [vmem:[%s1 + $0x7c] sm:$0xf]
  %v113 = vunpack.c.l.bf16 %v81
  %v114 = vunpack.c.l.bf16 %v82
  %v115 = vunpack.c.l.bf16 %v83
  %v116 = vunpack.c.l.bf16 %v84
  %v117 = vunpack.c.l.bf16 %v85
  %v118 = vunpack.c.l.bf16 %v86
  %v119 = vunpack.c.l.bf16 %v87
  %v120 = vunpack.c.l.bf16 %v88
  %v121 = vunpack.c.l.bf16 %v89
  %v122 = vunpack.c.l.bf16 %v90
  %v123 = vunpack.c.l.bf16 %v91
  %v124 = vunpack.c.l.bf16 %v92
  %v125 = vunpack.c.l.bf16 %v93
  %v126 = vunpack.c.l.bf16 %v94
  %v127 = vunpack.c.l.bf16 %v95
  %v128 = vunpack.c.l.bf16 %v96
  %v129 = vunpack.c.l.bf16 %v97
  %v130 = vunpack.c.l.bf16 %v98
  %v131 = vunpack.c.l.bf16 %v99
  %v132 = vunpack.c.l.bf16 %v100
  %v133 = vunpack.c.l.bf16 %v101
  %v134 = vunpack.c.l.bf16 %v102
  %v135 = vunpack.c.l.bf16 %v103
  %v136 = vunpack.c.l.bf16 %v104
  %v137 = vunpack.c.l.bf16 %v105
  %v138 = vunpack.c.l.bf16 %v106
  %v139 = vunpack.c.l.bf16 %v107
  %v140 = vunpack.c.l.bf16 %v108
  %v141 = vunpack.c.l.bf16 %v109
  %v142 = vunpack.c.l.bf16 %v110
  %v143 = vunpack.c.l.bf16 %v111
  %v144 = vunpack.c.l.bf16 %v112
  %v145 = vld [vmem:[%s2] sm:$0x1]
  %v147 = vlaneseq
  %v148 = vshrl.u32 %v147, 7
  %v149 = vsub.s32 0, %v148
  %v150 = vrot.slane %v145, %v149
  %v152 = vmul.f32 %v49, %v150
  %v153 = vmul.f32 %v50, %v150
  %v154 = vmul.f32 %v51, %v150
  %v155 = vmul.f32 %v52, %v150
  %v156 = vmul.f32 %v53, %v150
  %v157 = vmul.f32 %v54, %v150
  %v158 = vmul.f32 %v55, %v150
  %v159 = vmul.f32 %v56, %v150
  %v160 = vmul.f32 %v57, %v150
  %v161 = vmul.f32 %v58, %v150
  %v162 = vmul.f32 %v59, %v150
  %v163 = vmul.f32 %v60, %v150
  %v164 = vmul.f32 %v61, %v150
  %v165 = vmul.f32 %v62, %v150
  %v166 = vmul.f32 %v63, %v150
  %v167 = vmul.f32 %v64, %v150
  %v168 = vmul.f32 %v65, %v150
  %v169 = vmul.f32 %v66, %v150
  %v170 = vmul.f32 %v67, %v150
  %v171 = vmul.f32 %v68, %v150
  %v172 = vmul.f32 %v69, %v150
  %v173 = vmul.f32 %v70, %v150
  %v174 = vmul.f32 %v71, %v150
  %v175 = vmul.f32 %v72, %v150
  %v176 = vmul.f32 %v73, %v150
  %v177 = vmul.f32 %v74, %v150
  %v178 = vmul.f32 %v75, %v150
  %v179 = vmul.f32 %v76, %v150
  %v180 = vmul.f32 %v77, %v150
  %v181 = vmul.f32 %v78, %v150
  %v182 = vmul.f32 %v79, %v150
  %v183 = vmul.f32 %v80, %v150
  %v184 = vld [vmem:[%s3] sm:$0x1]
  %v186 = vlaneseq
  %v187 = vshrl.u32 %v186, 7
  %v188 = vsub.s32 0, %v187
  %v189 = vrot.slane %v184, %v188
  %v191 = vadd.f32 %v152, %v189
  %v192 = vadd.f32 %v153, %v189
  %v193 = vadd.f32 %v154, %v189
  %v194 = vadd.f32 %v155, %v189
  %v195 = vadd.f32 %v156, %v189
  %v196 = vadd.f32 %v157, %v189
  %v197 = vadd.f32 %v158, %v189
  %v198 = vadd.f32 %v159, %v189
  %v199 = vadd.f32 %v160, %v189
  %v200 = vadd.f32 %v161, %v189
  %v201 = vadd.f32 %v162, %v189
  %v202 = vadd.f32 %v163, %v189
  %v203 = vadd.f32 %v164, %v189
  %v204 = vadd.f32 %v165, %v189
  %v205 = vadd.f32 %v166, %v189
  %v206 = vadd.f32 %v167, %v189
  %v207 = vadd.f32 %v168, %v189
  %v208 = vadd.f32 %v169, %v189
  %v209 = vadd.f32 %v170, %v189
  %v210 = vadd.f32 %v171, %v189
  %v211 = vadd.f32 %v172, %v189
  %v212 = vadd.f32 %v173, %v189
  %v213 = vadd.f32 %v174, %v189
  %v214 = vadd.f32 %v175, %v189
  %v215 = vadd.f32 %v176, %v189
  %v216 = vadd.f32 %v177, %v189
  %v217 = vadd.f32 %v178, %v189
  %v218 = vadd.f32 %v179, %v189
  %v219 = vadd.f32 %v180, %v189
  %v220 = vadd.f32 %v181, %v189
  %v221 = vadd.f32 %v182, %v189
  %v222 = vadd.f32 %v183, %v189
  %v223 = vadd.f32 %v191, %v113
  %v224 = vadd.f32 %v192, %v114
  %v225 = vadd.f32 %v193, %v115
  %v226 = vadd.f32 %v194, %v116
  %v227 = vadd.f32 %v195, %v117
  %v228 = vadd.f32 %v196, %v118
  %v229 = vadd.f32 %v197, %v119
  %v230 = vadd.f32 %v198, %v120
  %v231 = vadd.f32 %v199, %v121
  %v232 = vadd.f32 %v200, %v122
  %v233 = vadd.f32 %v201, %v123
  %v234 = vadd.f32 %v202, %v124
  %v235 = vadd.f32 %v203, %v125
  %v236 = vadd.f32 %v204, %v126
  %v237 = vadd.f32 %v205, %v127
  %v238 = vadd.f32 %v206, %v128
  %v239 = vadd.f32 %v207, %v129
  %v240 = vadd.f32 %v208, %v130
  %v241 = vadd.f32 %v209, %v131
  %v242 = vadd.f32 %v210, %v132
  %v243 = vadd.f32 %v211, %v133
  %v244 = vadd.f32 %v212, %v134
  %v245 = vadd.f32 %v213, %v135
  %v246 = vadd.f32 %v214, %v136
  %v247 = vadd.f32 %v215, %v137
  %v248 = vadd.f32 %v216, %v138
  %v249 = vadd.f32 %v217, %v139
  %v250 = vadd.f32 %v218, %v140
  %v251 = vadd.f32 %v219, %v141
  %v252 = vadd.f32 %v220, %v142
  %v253 = vadd.f32 %v221, %v143
  %v254 = vadd.f32 %v222, %v144
  %v255 = vmax.f32 %v223, 0.0
  %v256 = vmax.f32 %v224, 0.0
  %v257 = vmax.f32 %v225, 0.0
  %v258 = vmax.f32 %v226, 0.0
  %v259 = vmax.f32 %v227, 0.0
  %v260 = vmax.f32 %v228, 0.0
  %v261 = vmax.f32 %v229, 0.0
  %v262 = vmax.f32 %v230, 0.0
  %v263 = vmax.f32 %v231, 0.0
  %v264 = vmax.f32 %v232, 0.0
  %v265 = vmax.f32 %v233, 0.0
  %v266 = vmax.f32 %v234, 0.0
  %v267 = vmax.f32 %v235, 0.0
  %v268 = vmax.f32 %v236, 0.0
  %v269 = vmax.f32 %v237, 0.0
  %v270 = vmax.f32 %v238, 0.0
  %v271 = vmax.f32 %v239, 0.0
  %v272 = vmax.f32 %v240, 0.0
  %v273 = vmax.f32 %v241, 0.0
  %v274 = vmax.f32 %v242, 0.0
  %v275 = vmax.f32 %v243, 0.0
  %v276 = vmax.f32 %v244, 0.0
  %v277 = vmax.f32 %v245, 0.0
  %v278 = vmax.f32 %v246, 0.0
  %v279 = vmax.f32 %v247, 0.0
  %v280 = vmax.f32 %v248, 0.0
  %v281 = vmax.f32 %v249, 0.0
  %v282 = vmax.f32 %v250, 0.0
  %v283 = vmax.f32 %v251, 0.0
  %v284 = vmax.f32 %v252, 0.0
  %v285 = vmax.f32 %v253, 0.0
  %v286 = vmax.f32 %v254, 0.0
  %287 = vst [vmem:[%s4] sm:$0xff] %v255
  %288 = vst [vmem:[%s4 + $0x8] sm:$0xff] %v256
  %289 = vst [vmem:[%s4 + $0x10] sm:$0xff] %v257
  %290 = vst [vmem:[%s4 + $0x18] sm:$0xff] %v258
  %291 = vst [vmem:[%s4 + $0x20] sm:$0xff] %v259
  %292 = vst [vmem:[%s4 + $0x28] sm:$0xff] %v260
  %293 = vst [vmem:[%s4 + $0x30] sm:$0xff] %v261
  %294 = vst [vmem:[%s4 + $0x38] sm:$0xff] %v262
  %295 = vst [vmem:[%s4 + $0x40] sm:$0xff] %v263
  %296 = vst [vmem:[%s4 + $0x48] sm:$0xff] %v264
  %297 = vst [vmem:[%s4 + $0x50] sm:$0xff] %v265
  %298 = vst [vmem:[%s4 + $0x58] sm:$0xff] %v266
  %299 = vst [vmem:[%s4 + $0x60] sm:$0xff] %v267
  %300 = vst [vmem:[%s4 + $0x68] sm:$0xff] %v268
  %301 = vst [vmem:[%s4 + $0x70] sm:$0xff] %v269
  %302 = vst [vmem:[%s4 + $0x78] sm:$0xff] %v270
  %303 = vst [vmem:[%s4 + $0x80] sm:$0xff] %v271
  %304 = vst [vmem:[%s4 + $0x88] sm:$0xff] %v272
  %305 = vst [vmem:[%s4 + $0x90] sm:$0xff] %v273
  %306 = vst [vmem:[%s4 + $0x98] sm:$0xff] %v274
  %307 = vst [vmem:[%s4 + $0xa0] sm:$0xff] %v275
  %308 = vst [vmem:[%s4 + $0xa8] sm:$0xff] %v276
  %309 = vst [vmem:[%s4 + $0xb0] sm:$0xff] %v277
  %310 = vst [vmem:[%s4 + $0xb8] sm:$0xff] %v278
  %311 = vst [vmem:[%s4 + $0xc0] sm:$0xff] %v279
  %312 = vst [vmem:[%s4 + $0xc8] sm:$0xff] %v280
  %313 = vst [vmem:[%s4 + $0xd0] sm:$0xff] %v281
  %314 = vst [vmem:[%s4 + $0xd8] sm:$0xff] %v282
  %315 = vst [vmem:[%s4 + $0xe0] sm:$0xff] %v283
  %316 = vst [vmem:[%s4 + $0xe8] sm:$0xff] %v284
  %317 = vst [vmem:[%s4 + $0xf0] sm:$0xff] %v285
  %318 = vst [vmem:[%s4 + $0xf8] sm:$0xff] %v286
  // Predicated region
  $region18: #{bottleneck_forward.7} parent=0 // pred_check
    _
  $region19: #{bottleneck_forward.7} parent=0 // pred_check_branch
    %320 = sbr.rel (0) target = $region21
  $region20: #{bottleneck_forward.7} parent=0 // pred_region
    _
  $region21: #{bottleneck_forward.7} parent=0 // pred_fallthru
    _
  // Predicated region
  $region22: #{bottleneck_forward.7} parent=0 // pred_check
    _
  $region23: #{bottleneck_forward.7} parent=0 // pred_check_branch
    %322 = sbr.rel (0) target = $region25
  $region24: #{bottleneck_forward.7} parent=0 // pred_region
    _
  $region25: #{bottleneck_forward.7} parent=0 // pred_fallthru
    _

</llo_original>
